<compile_context>
chip_gen: v7x
topology: tpu7x:2x2x1
jax: 0.10.0
libtpu: 0.0.40
codegen_flags: <defaults>
</compile_context>

<pallas_src>
import functools

import jax
import jax.numpy as jnp
from jax.experimental import pallas as pl
from jax.experimental.pallas import tpu as pltpu


def _interp_matrix(size_in, size_out):
    """PyTorch bilinear (align_corners=False) 1-D interpolation matrix (out, in)."""
    d = jnp.arange(size_out, dtype=jnp.float32)
    src = (d + 0.5) * (size_in / size_out) - 0.5
    src = jnp.maximum(src, 0.0)
    i0 = jnp.minimum(jnp.floor(src).astype(jnp.int32), size_in - 1)
    frac = src - i0.astype(jnp.float32)
    i1 = jnp.minimum(i0 + 1, size_in - 1)
    rows = jnp.arange(size_out)
    a = jnp.zeros((size_out, size_in), jnp.float32)
    a = a.at[rows, i0].add(1.0 - frac)
    a = a.at[rows, i1].add(frac)
    return a


def _conv_band_matrices(conv_w, w2, w_out, padding):
    """Block-Toeplitz matrices M[ih], shape (W2*C_in, C_out*W_out), such that
         y[h, o*W_out + w] = sum_ih  up[h + ih, :] @ M[ih]
    reproduces a stride-1 Conv2d (cross-correlation) on the flattened-NHWC,
    *unpadded-in-W* row layout up[h2, w2*C_in + c]; the conv's zero W-padding is
    absorbed into the matrix (out-of-range taps contribute nothing).  Output
    lanes are channel-major (o*W_out + w) so the BN/NCHW pass can use
    contiguous per-channel lane slabs."""
    c_out, c_in, kh, kw = conv_w.shape
    wp = jnp.arange(w2)
    wo = jnp.arange(w_out)
    iw = wp[:, None] - wo[None, :] + padding          # (W2, W_out) kernel tap index
    valid = (iw >= 0) & (iw <= kw - 1)
    iwc = jnp.clip(iw, 0, kw - 1)
    g = conv_w[:, :, :, iwc]                          # (C_out, C_in, KH, W2, W_out)
    g = jnp.where(valid[None, None, None], g, 0.0)
    m = g.transpose(2, 3, 1, 0, 4)                    # (KH, W2, C_in, C_out, W_out)
    return m.reshape(kh, w2 * c_in, c_out * w_out)


@functools.partial(jax.jit, static_argnames=("kernel_size", "stride", "padding",
                                             "scale_factor", "b_tile"))
def upsample_block_forward(x, conv_w, conv_b, bn_gamma, bn_beta, *,
                           kernel_size=3, stride=1, padding=1,
                           scale_factor=(2, 2), b_tile=None):
    if stride != 1:
        # TODO(synk): stride > 1 not implemented; UpSampleBlock uses stride=1.
        raise NotImplementedError("stride != 1 not implemented")

    n, c_in, h, w = x.shape
    c_out = conv_w.shape[0]
    kh = kernel_size
    sf_h, sf_w = scale_factor
    h2, w2 = h * sf_h, w * sf_w
    h_out = h2 + 2 * padding - kernel_size + 1
    w_out = w2 + 2 * padding - kernel_size + 1
    h2p = h2 + 2 * padding
    lane_in = w2 * c_in                       # 128 at the MNIST-decoder sizes
    lane_out = c_out * w_out                  # channel-major output lanes (256)

    # Batch tile: amortize per-grid-step overhead; pick a divisor of n (<= 8).
    if b_tile is None:
        b_tile = 1
        for cand in range(min(n, 8), 0, -1):
            if n % cand == 0:
                b_tile = cand
                break
    assert n % b_tile == 0, "b_tile must divide the batch size"

    # ---- input layout + weight preprocessing (tiny, trace-time plumbing) ----
    x_nhwc = x.astype(jnp.float32).transpose(0, 2, 3, 1).reshape(n, h, w * c_in)
    # Fold the conv's H zero-padding into A_h (zero halo rows) -> up2d comes out
    # already H-padded and the scratch is fully overwritten by one aligned store.
    a_h = jnp.pad(_interp_matrix(h, h2), ((padding, padding), (0, 0)))      # (H2p, H)
    a_w = _interp_matrix(w, w2)                                             # (W2, W)
    aw_kron = jnp.kron(a_w.T, jnp.eye(c_in, dtype=jnp.float32))             # (W*Cin, W2*Cin)
    m_bands = _conv_band_matrices(conv_w.astype(jnp.float32), w2, w_out, padding)
    # per-channel reduction matrix for BN partial stats (channel-major lanes)
    s_sum = jnp.kron(jnp.eye(c_out, dtype=jnp.float32),
                     jnp.ones((w_out, 1), jnp.float32))                     # (Cout*Wout, Cout)
    # conv_b intentionally unused: a per-channel bias cancels exactly under the
    # training-mode BatchNorm immediately following the conv.  (If this block is
    # ever run with eval-mode running stats, the bias must be added back.)

    def fused_kernel(x_ref, ah_ref, awk_ref, m_ref, s_ref, y_ref, st_ref, pad_ref):
        for b in range(b_tile):                                     # static unroll
            # bilinear upsample: contract the small W*Cin dim first, then the
            # zero-row-padded A_h produces the H-padded sample in one shot.
            tmp = jnp.dot(x_ref[b], awk_ref[...],
                          preferred_element_type=jnp.float32)       # (H, W2*Cin)
            pad_ref[...] = jnp.dot(ah_ref[...], tmp,
                                   preferred_element_type=jnp.float32)  # (H2p, 128)
            # 3x3 conv = KH row-shifted lane-dense matmuls vs block-Toeplitz weights
            acc = jnp.zeros((h_out, lane_out), jnp.float32)
            for ih in range(kh):                                    # static unroll
                acc = acc + jnp.dot(pad_ref[ih:ih + h_out, :], m_ref[ih],
                                    preferred_element_type=jnp.float32)
            y_ref[b] = acc                                          # (Hout, Cout*Wout)
            # BN partial stats: single stacked matmul gives per-channel sum & sumsq
            stacked = jnp.concatenate([acc, acc * acc], axis=0)     # (2*Hout, lanes)
            ch = jnp.dot(stacked, s_ref[...],
                         preferred_element_type=jnp.float32)        # (2*Hout, Cout)
            st_ref[b] = jnp.concatenate(
                [jnp.sum(ch[:h_out], axis=0, keepdims=True),
                 jnp.sum(ch[h_out:], axis=0, keepdims=True)], axis=0)   # (2, Cout)

    y, stats = pl.pallas_call(
        fused_kernel,
        out_shape=(jax.ShapeDtypeStruct((n, h_out, lane_out), jnp.float32),
                   jax.ShapeDtypeStruct((n, 2, c_out), jnp.float32)),
        grid_spec=pltpu.PrefetchScalarGridSpec(
            num_scalar_prefetch=0,
            grid=(n // b_tile,),
            in_specs=[
                pl.BlockSpec((b_tile, h, w * c_in), lambda i: (i, 0, 0)),
                pl.BlockSpec((h2p, h), lambda i: (0, 0)),
                pl.BlockSpec((w * c_in, lane_in), lambda i: (0, 0)),
                pl.BlockSpec((kh, lane_in, lane_out), lambda i: (0, 0, 0)),
                pl.BlockSpec((lane_out, c_out), lambda i: (0, 0)),
            ],
            out_specs=(
                pl.BlockSpec((b_tile, h_out, lane_out), lambda i: (i, 0, 0)),
                pl.BlockSpec((b_tile, 2, c_out), lambda i: (i, 0, 0)),
            ),
            scratch_shapes=[pltpu.VMEM((h2p, lane_in), jnp.float32)],
        ),
        compiler_params=pltpu.CompilerParams(dimension_semantics=("parallel",)),
    )(x_nhwc, a_h, aw_kron, m_bands, s_sum)

    # ---- BN scalar prep: O(C_out) glue on tiny partial-stat arrays ----
    # Note: E[x^2]-E[x]^2 in f32 is fine at these magnitudes; use Welford if scaled up.
    cnt = float(n * h_out * w_out)
    ch_sum = jnp.sum(stats[:, 0, :], axis=0)
    ch_sq = jnp.sum(stats[:, 1, :], axis=0)
    mean = ch_sum / cnt
    var = jnp.maximum(ch_sq / cnt - mean * mean, 0.0)     # biased var (PyTorch BN)
    inv = jax.lax.rsqrt(var + 1e-5)
    scale = bn_gamma.astype(jnp.float32) * inv
    shift = bn_beta.astype(jnp.float32) - mean * scale
    # channel-major lanes -> repeat each channel's scalar across its W_out lanes
    scsh = jnp.stack([jnp.repeat(scale, w_out), jnp.repeat(shift, w_out)], axis=0)

    # Second pass: apply BN affine AND emit the final NCHW layout directly
    # (contiguous per-channel 32-lane slabs) -> no XLA transpose pass over HBM.
    def bn_nchw_kernel(y_ref, scsh_ref, o_ref):
        for b in range(b_tile):                                     # static unroll
            for o in range(c_out):
                sl = slice(o * w_out, (o + 1) * w_out)
                o_ref[b, o] = (y_ref[b, :, sl] * scsh_ref[0:1, sl]
                               + scsh_ref[1:2, sl])

    out = pl.pallas_call(
        bn_nchw_kernel,
        out_shape=jax.ShapeDtypeStruct((n, c_out, h_out, w_out), jnp.float32),
        grid_spec=pltpu.PrefetchScalarGridSpec(
            num_scalar_prefetch=0,
            grid=(n // b_tile,),
            in_specs=[
                pl.BlockSpec((b_tile, h_out, lane_out), lambda i: (i, 0, 0)),
                pl.BlockSpec((2, lane_out), lambda i: (0, 0)),
            ],
            out_specs=pl.BlockSpec((b_tile, c_out, h_out, w_out),
                                   lambda i: (i, 0, 0, 0)),
        ),
        compiler_params=pltpu.CompilerParams(dimension_semantics=("parallel",)),
    )(y, scsh)

    return out


def _reference_forward(x, conv_w, conv_b, gamma, beta, *, padding, scale_factor):
    """Plain-JAX reference of the same forward (incl. the bias, which cancels)."""
    sf_h, sf_w = scale_factor
    _, _, h, w = x.shape
    a_h = _interp_matrix(h, h * sf_h)
    a_w = _interp_matrix(w, w * sf_w)
    up = jnp.einsum('nchw,Hh,Ww->ncHW', x.astype(jnp.float32), a_h, a_w)
    y = jax.lax.conv_general_dilated(
        up, conv_w.astype(jnp.float32), window_strides=(1, 1),
        padding=[(padding, padding), (padding, padding)],
        dimension_numbers=('NCHW', 'OIHW', 'NCHW'))
    y = y + conv_b[None, :, None, None]
    mean = jnp.mean(y, axis=(0, 2, 3), keepdims=True)
    var = jnp.mean((y - mean) ** 2, axis=(0, 2, 3), keepdims=True)
    y = (y - mean) * jax.lax.rsqrt(var + 1e-5)
    return y * gamma[None, :, None, None] + beta[None, :, None, None]


if __name__ == "__main__":
    # UpSampleBlock(in_c=4, out_c=8, kernel_size=3, stride=1, padding=1,
    #               scale_factor=(2,2), mode='bilinear', batch_norm=True, p=0.0)
    N, C_IN, H, W = 2, 4, 16, 16
    OUT_C, K, STRIDE, PAD = 8, 3, 1, 1

    key = jax.random.PRNGKey(0)
    k1, k2, k3, k4, k5 = jax.random.split(key, 5)
    x = jax.random.normal(k5, (N, C_IN, H, W), jnp.float32)
    conv_w = 0.1 * jax.random.normal(k1, (OUT_C, C_IN, K, K), jnp.float32)
    conv_b = 0.1 * jax.random.normal(k2, (OUT_C,), jnp.float32)
    bn_gamma = 1.0 + 0.1 * jax.random.normal(k3, (OUT_C,), jnp.float32)
    bn_beta = 0.1 * jax.random.normal(k4, (OUT_C,), jnp.float32)

    out = upsample_block_forward(x, conv_w, conv_b, bn_gamma, bn_beta,
                                 kernel_size=K, stride=STRIDE, padding=PAD,
                                 scale_factor=(2, 2))
    out = jax.block_until_ready(out)
    assert out.shape == (N, OUT_C, H * 2, W * 2), out.shape

    ref = _reference_forward(x, conv_w, conv_b, bn_gamma, bn_beta,
                             padding=PAD, scale_factor=(2, 2))
    err = float(jnp.max(jnp.abs(out - ref)))
    assert err < 1e-3, f"max abs error vs reference: {err}"
    print("KERNEL_OK")
</pallas_src>

<mosaic_0001>
module attributes {stable_mosaic.version = 11 : i64} {
  func.func private @main(%arg0: i32) attributes {dimension_semantics = [#tpu.dimension_semantics<core_parallel>], iteration_bounds = array<i64: 2>, tpu.core_type = #tpu.core_type<sc_scalar_subcore>, window_params = []} {
    return
  }
}

module attributes {stable_mosaic.version = 11 : i64} {
  func.func private @main(%arg0: i32) attributes {dimension_semantics = [#tpu.dimension_semantics<core_parallel>], iteration_bounds = array<i64: 2>, tpu.core_type = #tpu.core_type<sc_scalar_subcore>, window_params = []} {
    return
  }
}

module attributes {stable_mosaic.version = 11 : i64} {
  func.func @fused_kernel(%arg0: i32, %arg1: memref<2x16x64xf32, #tpu.memory_space<vmem>>, %arg2: memref<34x16xf32, #tpu.memory_space<vmem>>, %arg3: memref<64x128xf32, #tpu.memory_space<vmem>>, %arg4: memref<3x128x256xf32, #tpu.memory_space<vmem>>, %arg5: memref<256x8xf32, #tpu.memory_space<vmem>>, %arg6: memref<2x32x256xf32, #tpu.memory_space<vmem>>, %arg7: memref<2x2x8xf32, #tpu.memory_space<vmem>>, %arg8: memref<34x128xf32, #tpu.memory_space<vmem>>) attributes {dimension_semantics = [#tpu.dimension_semantics<parallel>], iteration_bounds = array<i64: 1>, scalar_prefetch = 0 : i64, scratch_operands = 1 : i64, tpu.core_type = #tpu.core_type<tc>, window_params = [{transform_indices = @transform_0, window_bounds = array<i64: 2, 16, 64>}, {pipeline_mode = #tpu.pipeline_mode<synchronous>, transform_indices = @transform_1, window_bounds = array<i64: 34, 16>}, {pipeline_mode = #tpu.pipeline_mode<synchronous>, transform_indices = @transform_2, window_bounds = array<i64: 64, 128>}, {pipeline_mode = #tpu.pipeline_mode<synchronous>, transform_indices = @transform_3, window_bounds = array<i64: 3, 128, 256>}, {pipeline_mode = #tpu.pipeline_mode<synchronous>, transform_indices = @transform_4, window_bounds = array<i64: 256, 8>}, {transform_indices = @transform_5, window_bounds = array<i64: 2, 32, 256>}, {transform_indices = @transform_6, window_bounds = array<i64: 2, 2, 8>}]} {
    %c0 = arith.constant 0 : index
    %c0_0 = arith.constant 0 : index
    %c0_1 = arith.constant 0 : index
    %0 = vector.load %arg1[%c0, %c0_0, %c0_1] : memref<2x16x64xf32, #tpu.memory_space<vmem>>, vector<1x16x64xf32>
    %1 = vector.shape_cast %0 : vector<1x16x64xf32> to vector<16x64xf32>
    %c0_2 = arith.constant 0 : index
    %c0_3 = arith.constant 0 : index
    %2 = vector.load %arg3[%c0_2, %c0_3] : memref<64x128xf32, #tpu.memory_space<vmem>>, vector<64x128xf32>
    %cst = arith.constant dense<0.000000e+00> : vector<16x128xf32>
    %3 = tpu.matmul %1, %2, %cst {dimension_numbers = #tpu.dot_dimension_numbers<[1], [0], [0], [1], [0, 0, 1, 1], [], []>} : vector<16x64xf32>, vector<64x128xf32>, vector<16x128xf32> -> vector<16x128xf32>
    %c0_4 = arith.constant 0 : index
    %c0_5 = arith.constant 0 : index
    %4 = vector.load %arg2[%c0_4, %c0_5] : memref<34x16xf32, #tpu.memory_space<vmem>>, vector<34x16xf32>
    %cst_6 = arith.constant dense<0.000000e+00> : vector<34x128xf32>
    %5 = tpu.matmul %4, %3, %cst_6 {dimension_numbers = #tpu.dot_dimension_numbers<[1], [0], [0], [1], [0, 0, 1, 1], [], []>} : vector<34x16xf32>, vector<16x128xf32>, vector<34x128xf32> -> vector<34x128xf32>
    %c0_7 = arith.constant 0 : index
    %c0_8 = arith.constant 0 : index
    %6 = vector.load %arg8[%c0_7, %c0_8] : memref<34x128xf32, #tpu.memory_space<vmem>>, vector<34x128xf32>
    tpu.vector_store %arg8[%c0_7, %c0_8], %5 {strides = array<i32>} : memref<34x128xf32, #tpu.memory_space<vmem>>, vector<34x128xf32>,
    %cst_9 = arith.constant 0.000000e+00 : f32
    %7 = vector.broadcast %cst_9 : f32 to vector<32x256xf32>
    %c0_10 = arith.constant 0 : index
    %c0_11 = arith.constant 0 : index
    %8 = vector.load %arg8[%c0_10, %c0_11] : memref<34x128xf32, #tpu.memory_space<vmem>>, vector<32x128xf32>
    %c0_12 = arith.constant 0 : index
    %c0_13 = arith.constant 0 : index
    %c0_14 = arith.constant 0 : index
    %9 = vector.load %arg4[%c0_12, %c0_13, %c0_14] : memref<3x128x256xf32, #tpu.memory_space<vmem>>, vector<1x128x256xf32>
    %10 = vector.shape_cast %9 : vector<1x128x256xf32> to vector<128x256xf32>
    %cst_15 = arith.constant dense<0.000000e+00> : vector<32x256xf32>
    %11 = tpu.matmul %8, %10, %cst_15 {dimension_numbers = #tpu.dot_dimension_numbers<[1], [0], [0], [1], [0, 0, 1, 1], [], []>} : vector<32x128xf32>, vector<128x256xf32>, vector<32x256xf32> -> vector<32x256xf32>
    %12 = arith.addf %7, %11 : vector<32x256xf32>
    %c1 = arith.constant 1 : index
    %c0_16 = arith.constant 0 : index
    %13 = vector.load %arg8[%c1, %c0_16] : memref<34x128xf32, #tpu.memory_space<vmem>>, vector<32x128xf32>
    %c1_17 = arith.constant 1 : index
    %c0_18 = arith.constant 0 : index
    %c0_19 = arith.constant 0 : index
    %14 = vector.load %arg4[%c1_17, %c0_18, %c0_19] : memref<3x128x256xf32, #tpu.memory_space<vmem>>, vector<1x128x256xf32>
    %15 = vector.shape_cast %14 : vector<1x128x256xf32> to vector<128x256xf32>
    %cst_20 = arith.constant dense<0.000000e+00> : vector<32x256xf32>
    %16 = tpu.matmul %13, %15, %cst_20 {dimension_numbers = #tpu.dot_dimension_numbers<[1], [0], [0], [1], [0, 0, 1, 1], [], []>} : vector<32x128xf32>, vector<128x256xf32>, vector<32x256xf32> -> vector<32x256xf32>
    %17 = arith.addf %12, %16 : vector<32x256xf32>
    %c2 = arith.constant 2 : index
    %c0_21 = arith.constant 0 : index
    %18 = vector.load %arg8[%c2, %c0_21] : memref<34x128xf32, #tpu.memory_space<vmem>>, vector<32x128xf32>
    %c2_22 = arith.constant 2 : index
    %c0_23 = arith.constant 0 : index
    %c0_24 = arith.constant 0 : index
    %19 = vector.load %arg4[%c2_22, %c0_23, %c0_24] : memref<3x128x256xf32, #tpu.memory_space<vmem>>, vector<1x128x256xf32>
    %20 = vector.shape_cast %19 : vector<1x128x256xf32> to vector<128x256xf32>
    %cst_25 = arith.constant dense<0.000000e+00> : vector<32x256xf32>
    %21 = tpu.matmul %18, %20, %cst_25 {dimension_numbers = #tpu.dot_dimension_numbers<[1], [0], [0], [1], [0, 0, 1, 1], [], []>} : vector<32x128xf32>, vector<128x256xf32>, vector<32x256xf32> -> vector<32x256xf32>
    %22 = arith.addf %17, %21 : vector<32x256xf32>
    %c0_26 = arith.constant 0 : index
    %c0_27 = arith.constant 0 : index
    %c0_28 = arith.constant 0 : index
    %23 = vector.load %arg6[%c0_26, %c0_27, %c0_28] : memref<2x32x256xf32, #tpu.memory_space<vmem>>, vector<1x32x256xf32>
    %24 = vector.shape_cast %23 : vector<1x32x256xf32> to vector<32x256xf32>
    %25 = vector.shape_cast %22 : vector<32x256xf32> to vector<1x32x256xf32>
    tpu.vector_store %arg6[%c0_26, %c0_27, %c0_28], %25 {strides = array<i32>} : memref<2x32x256xf32, #tpu.memory_space<vmem>>, vector<1x32x256xf32>,
    %26 = arith.mulf %22, %22 : vector<32x256xf32>
    %27 = tpu.concatenate %22, %26 in 0 : vector<32x256xf32>, vector<32x256xf32> -> vector<64x256xf32>
    %c0_29 = arith.constant 0 : index
    %c0_30 = arith.constant 0 : index
    %28 = vector.load %arg5[%c0_29, %c0_30] : memref<256x8xf32, #tpu.memory_space<vmem>>, vector<256x8xf32>
    %cst_31 = arith.constant dense<0.000000e+00> : vector<64x8xf32>
    %29 = tpu.matmul %27, %28, %cst_31 {dimension_numbers = #tpu.dot_dimension_numbers<[1], [0], [0], [1], [0, 0, 1, 1], [], []>} : vector<64x256xf32>, vector<256x8xf32>, vector<64x8xf32> -> vector<64x8xf32>
    %30 = vector.extract_strided_slice %29 {offsets = [0, 0], sizes = [32, 8], strides = [1, 1]} : vector<64x8xf32> to vector<32x8xf32>
    %cst_32 = arith.constant dense<0.000000e+00> : vector<8xf32>
    %31 = vector.multi_reduction <add>, %30, %cst_32 [0] : vector<32x8xf32> to vector<8xf32>
    %32 = vector.shape_cast %31 : vector<8xf32> to vector<1x8xf32>
    %33 = vector.extract_strided_slice %29 {offsets = [32, 0], sizes = [32, 8], strides = [1, 1]} : vector<64x8xf32> to vector<32x8xf32>
    %cst_33 = arith.constant dense<0.000000e+00> : vector<8xf32>
    %34 = vector.multi_reduction <add>, %33, %cst_33 [0] : vector<32x8xf32> to vector<8xf32>
    %35 = vector.shape_cast %34 : vector<8xf32> to vector<1x8xf32>
    %36 = tpu.concatenate %32, %35 in 0 : vector<1x8xf32>, vector<1x8xf32> -> vector<2x8xf32>
    %c0_34 = arith.constant 0 : index
    %c0_35 = arith.constant 0 : index
    %c0_36 = arith.constant 0 : index
    %37 = vector.load %arg7[%c0_34, %c0_35, %c0_36] : memref<2x2x8xf32, #tpu.memory_space<vmem>>, vector<1x2x8xf32>
    %38 = vector.shape_cast %37 : vector<1x2x8xf32> to vector<2x8xf32>
    %39 = vector.shape_cast %36 : vector<2x8xf32> to vector<1x2x8xf32>
    tpu.vector_store %arg7[%c0_34, %c0_35, %c0_36], %39 {strides = array<i32>} : memref<2x2x8xf32, #tpu.memory_space<vmem>>, vector<1x2x8xf32>,
    %c1_37 = arith.constant 1 : index
    %c0_38 = arith.constant 0 : index
    %c0_39 = arith.constant 0 : index
    %40 = vector.load %arg1[%c1_37, %c0_38, %c0_39] : memref<2x16x64xf32, #tpu.memory_space<vmem>>, vector<1x16x64xf32>
    %41 = vector.shape_cast %40 : vector<1x16x64xf32> to vector<16x64xf32>
    %c0_40 = arith.constant 0 : index
    %c0_41 = arith.constant 0 : index
    %42 = vector.load %arg3[%c0_40, %c0_41] : memref<64x128xf32, #tpu.memory_space<vmem>>, vector<64x128xf32>
    %cst_42 = arith.constant dense<0.000000e+00> : vector<16x128xf32>
    %43 = tpu.matmul %41, %42, %cst_42 {dimension_numbers = #tpu.dot_dimension_numbers<[1], [0], [0], [1], [0, 0, 1, 1], [], []>} : vector<16x64xf32>, vector<64x128xf32>, vector<16x128xf32> -> vector<16x128xf32>
    %c0_43 = arith.constant 0 : index
    %c0_44 = arith.constant 0 : index
    %44 = vector.load %arg2[%c0_43, %c0_44] : memref<34x16xf32, #tpu.memory_space<vmem>>, vector<34x16xf32>
    %cst_45 = arith.constant dense<0.000000e+00> : vector<34x128xf32>
    %45 = tpu.matmul %44, %43, %cst_45 {dimension_numbers = #tpu.dot_dimension_numbers<[1], [0], [0], [1], [0, 0, 1, 1], [], []>} : vector<34x16xf32>, vector<16x128xf32>, vector<34x128xf32> -> vector<34x128xf32>
    %c0_46 = arith.constant 0 : index
    %c0_47 = arith.constant 0 : index
    %46 = vector.load %arg8[%c0_46, %c0_47] : memref<34x128xf32, #tpu.memory_space<vmem>>, vector<34x128xf32>
    tpu.vector_store %arg8[%c0_46, %c0_47], %45 {strides = array<i32>} : memref<34x128xf32, #tpu.memory_space<vmem>>, vector<34x128xf32>,
    %cst_48 = arith.constant 0.000000e+00 : f32
    %47 = vector.broadcast %cst_48 : f32 to vector<32x256xf32>
    %c0_49 = arith.constant 0 : index
    %c0_50 = arith.constant 0 : index
    %48 = vector.load %arg8[%c0_49, %c0_50] : memref<34x128xf32, #tpu.memory_space<vmem>>, vector<32x128xf32>
    %c0_51 = arith.constant 0 : index
    %c0_52 = arith.constant 0 : index
    %c0_53 = arith.constant 0 : index
    %49 = vector.load %arg4[%c0_51, %c0_52, %c0_53] : memref<3x128x256xf32, #tpu.memory_space<vmem>>, vector<1x128x256xf32>
    %50 = vector.shape_cast %49 : vector<1x128x256xf32> to vector<128x256xf32>
    %cst_54 = arith.constant dense<0.000000e+00> : vector<32x256xf32>
    %51 = tpu.matmul %48, %50, %cst_54 {dimension_numbers = #tpu.dot_dimension_numbers<[1], [0], [0], [1], [0, 0, 1, 1], [], []>} : vector<32x128xf32>, vector<128x256xf32>, vector<32x256xf32> -> vector<32x256xf32>
    %52 = arith.addf %47, %51 : vector<32x256xf32>
    %c1_55 = arith.constant 1 : index
    %c0_56 = arith.constant 0 : index
    %53 = vector.load %arg8[%c1_55, %c0_56] : memref<34x128xf32, #tpu.memory_space<vmem>>, vector<32x128xf32>
    %c1_57 = arith.constant 1 : index
    %c0_58 = arith.constant 0 : index
    %c0_59 = arith.constant 0 : index
    %54 = vector.load %arg4[%c1_57, %c0_58, %c0_59] : memref<3x128x256xf32, #tpu.memory_space<vmem>>, vector<1x128x256xf32>
    %55 = vector.shape_cast %54 : vector<1x128x256xf32> to vector<128x256xf32>
    %cst_60 = arith.constant dense<0.000000e+00> : vector<32x256xf32>
    %56 = tpu.matmul %53, %55, %cst_60 {dimension_numbers = #tpu.dot_dimension_numbers<[1], [0], [0], [1], [0, 0, 1, 1], [], []>} : vector<32x128xf32>, vector<128x256xf32>, vector<32x256xf32> -> vector<32x256xf32>
    %57 = arith.addf %52, %56 : vector<32x256xf32>
    %c2_61 = arith.constant 2 : index
    %c0_62 = arith.constant 0 : index
    %58 = vector.load %arg8[%c2_61, %c0_62] : memref<34x128xf32, #tpu.memory_space<vmem>>, vector<32x128xf32>
    %c2_63 = arith.constant 2 : index
    %c0_64 = arith.constant 0 : index
    %c0_65 = arith.constant 0 : index
    %59 = vector.load %arg4[%c2_63, %c0_64, %c0_65] : memref<3x128x256xf32, #tpu.memory_space<vmem>>, vector<1x128x256xf32>
    %60 = vector.shape_cast %59 : vector<1x128x256xf32> to vector<128x256xf32>
    %cst_66 = arith.constant dense<0.000000e+00> : vector<32x256xf32>
    %61 = tpu.matmul %58, %60, %cst_66 {dimension_numbers = #tpu.dot_dimension_numbers<[1], [0], [0], [1], [0, 0, 1, 1], [], []>} : vector<32x128xf32>, vector<128x256xf32>, vector<32x256xf32> -> vector<32x256xf32>
    %62 = arith.addf %57, %61 : vector<32x256xf32>
    %c1_67 = arith.constant 1 : index
    %c0_68 = arith.constant 0 : index
    %c0_69 = arith.constant 0 : index
    %63 = vector.load %arg6[%c1_67, %c0_68, %c0_69] : memref<2x32x256xf32, #tpu.memory_space<vmem>>, vector<1x32x256xf32>
    %64 = vector.shape_cast %63 : vector<1x32x256xf32> to vector<32x256xf32>
    %65 = vector.shape_cast %62 : vector<32x256xf32> to vector<1x32x256xf32>
    tpu.vector_store %arg6[%c1_67, %c0_68, %c0_69], %65 {strides = array<i32>} : memref<2x32x256xf32, #tpu.memory_space<vmem>>, vector<1x32x256xf32>,
    %66 = arith.mulf %62, %62 : vector<32x256xf32>
    %67 = tpu.concatenate %62, %66 in 0 : vector<32x256xf32>, vector<32x256xf32> -> vector<64x256xf32>
    %c0_70 = arith.constant 0 : index
    %c0_71 = arith.constant 0 : index
    %68 = vector.load %arg5[%c0_70, %c0_71] : memref<256x8xf32, #tpu.memory_space<vmem>>, vector<256x8xf32>
    %cst_72 = arith.constant dense<0.000000e+00> : vector<64x8xf32>
    %69 = tpu.matmul %67, %68, %cst_72 {dimension_numbers = #tpu.dot_dimension_numbers<[1], [0], [0], [1], [0, 0, 1, 1], [], []>} : vector<64x256xf32>, vector<256x8xf32>, vector<64x8xf32> -> vector<64x8xf32>
    %70 = vector.extract_strided_slice %69 {offsets = [0, 0], sizes = [32, 8], strides = [1, 1]} : vector<64x8xf32> to vector<32x8xf32>
    %cst_73 = arith.constant dense<0.000000e+00> : vector<8xf32>
    %71 = vector.multi_reduction <add>, %70, %cst_73 [0] : vector<32x8xf32> to vector<8xf32>
    %72 = vector.shape_cast %71 : vector<8xf32> to vector<1x8xf32>
    %73 = vector.extract_strided_slice %69 {offsets = [32, 0], sizes = [32, 8], strides = [1, 1]} : vector<64x8xf32> to vector<32x8xf32>
    %cst_74 = arith.constant dense<0.000000e+00> : vector<8xf32>
    %74 = vector.multi_reduction <add>, %73, %cst_74 [0] : vector<32x8xf32> to vector<8xf32>
    %75 = vector.shape_cast %74 : vector<8xf32> to vector<1x8xf32>
    %76 = tpu.concatenate %72, %75 in 0 : vector<1x8xf32>, vector<1x8xf32> -> vector<2x8xf32>
    %c1_75 = arith.constant 1 : index
    %c0_76 = arith.constant 0 : index
    %c0_77 = arith.constant 0 : index
    %77 = vector.load %arg7[%c1_75, %c0_76, %c0_77] : memref<2x2x8xf32, #tpu.memory_space<vmem>>, vector<1x2x8xf32>
    %78 = vector.shape_cast %77 : vector<1x2x8xf32> to vector<2x8xf32>
    %79 = vector.shape_cast %76 : vector<2x8xf32> to vector<1x2x8xf32>
    tpu.vector_store %arg7[%c1_75, %c0_76, %c0_77], %79 {strides = array<i32>} : memref<2x2x8xf32, #tpu.memory_space<vmem>>, vector<1x2x8xf32>,
    return
  }
  func.func @transform_0(%arg0: i32) -> (i32, i32, i32) {
    %c0_i32 = arith.constant 0 : i32
    %c0_i32_0 = arith.constant 0 : i32
    %c0_i32_1 = arith.constant 0 : i32
    return %arg0, %c0_i32, %c0_i32_0 : i32, i32, i32
  }
  func.func @transform_1(%arg0: i32) -> (i32, i32) {
    %c0_i32 = arith.constant 0 : i32
    %c0_i32_0 = arith.constant 0 : i32
    %c0_i32_1 = arith.constant 0 : i32
    return %c0_i32, %c0_i32_0 : i32, i32
  }
  func.func @transform_2(%arg0: i32) -> (i32, i32) {
    %c0_i32 = arith.constant 0 : i32
    %c0_i32_0 = arith.constant 0 : i32
    %c0_i32_1 = arith.constant 0 : i32
    return %c0_i32, %c0_i32_0 : i32, i32
  }
  func.func @transform_3(%arg0: i32) -> (i32, i32, i32) {
    %c0_i32 = arith.constant 0 : i32
    %c0_i32_0 = arith.constant 0 : i32
    %c0_i32_1 = arith.constant 0 : i32
    %c0_i32_2 = arith.constant 0 : i32
    return %c0_i32, %c0_i32_0, %c0_i32_1 : i32, i32, i32
  }
  func.func @transform_4(%arg0: i32) -> (i32, i32) {
    %c0_i32 = arith.constant 0 : i32
    %c0_i32_0 = arith.constant 0 : i32
    %c0_i32_1 = arith.constant 0 : i32
    return %c0_i32, %c0_i32_0 : i32, i32
  }
  func.func @transform_5(%arg0: i32) -> (i32, i32, i32) {
    %c0_i32 = arith.constant 0 : i32
    %c0_i32_0 = arith.constant 0 : i32
    %c0_i32_1 = arith.constant 0 : i32
    return %arg0, %c0_i32, %c0_i32_0 : i32, i32, i32
  }
  func.func @transform_6(%arg0: i32) -> (i32, i32, i32) {
    %c0_i32 = arith.constant 0 : i32
    %c0_i32_0 = arith.constant 0 : i32
    %c0_i32_1 = arith.constant 0 : i32
    return %arg0, %c0_i32, %c0_i32_0 : i32, i32, i32
  }
}

module attributes {stable_mosaic.version = 11 : i64} {
  func.func @bn_nchw_kernel(%arg0: i32, %arg1: memref<2x32x256xf32, #tpu.memory_space<vmem>>, %arg2: memref<2x256xf32, #tpu.memory_space<vmem>>, %arg3: memref<2x8x32x32xf32, #tpu.memory_space<vmem>>) attributes {dimension_semantics = [#tpu.dimension_semantics<parallel>], iteration_bounds = array<i64: 1>, scalar_prefetch = 0 : i64, scratch_operands = 0 : i64, tpu.core_type = #tpu.core_type<tc>, window_params = [{transform_indices = @transform_0, window_bounds = array<i64: 2, 32, 256>}, {pipeline_mode = #tpu.pipeline_mode<synchronous>, transform_indices = @transform_1, window_bounds = array<i64: 2, 256>}, {transform_indices = @transform_2, window_bounds = array<i64: 2, 8, 32, 32>}]} {
    %c0 = arith.constant 0 : index
    %c0_0 = arith.constant 0 : index
    %c0_1 = arith.constant 0 : index
    %0 = vector.load %arg1[%c0, %c0_0, %c0_1] : memref<2x32x256xf32, #tpu.memory_space<vmem>>, vector<1x32x32xf32>
    %1 = vector.shape_cast %0 : vector<1x32x32xf32> to vector<32x32xf32>
    %c0_2 = arith.constant 0 : index
    %c0_3 = arith.constant 0 : index
    %2 = vector.load %arg2[%c0_2, %c0_3] : memref<2x256xf32, #tpu.memory_space<vmem>>, vector<1x32xf32>
    %3 = vector.broadcast %2 : vector<1x32xf32> to vector<32x32xf32>
    %4 = arith.mulf %1, %3 : vector<32x32xf32>
    %c1 = arith.constant 1 : index
    %c0_4 = arith.constant 0 : index
    %5 = vector.load %arg2[%c1, %c0_4] : memref<2x256xf32, #tpu.memory_space<vmem>>, vector<1x32xf32>
    %6 = vector.broadcast %5 : vector<1x32xf32> to vector<32x32xf32>
    %7 = arith.addf %4, %6 : vector<32x32xf32>
    %c0_5 = arith.constant 0 : index
    %c0_6 = arith.constant 0 : index
    %c0_7 = arith.constant 0 : index
    %c0_8 = arith.constant 0 : index
    %8 = vector.load %arg3[%c0_5, %c0_6, %c0_7, %c0_8] : memref<2x8x32x32xf32, #tpu.memory_space<vmem>>, vector<1x1x32x32xf32>
    %9 = vector.shape_cast %8 : vector<1x1x32x32xf32> to vector<32x32xf32>
    %10 = vector.shape_cast %7 : vector<32x32xf32> to vector<1x1x32x32xf32>
    tpu.vector_store %arg3[%c0_5, %c0_6, %c0_7, %c0_8], %10 {strides = array<i32>} : memref<2x8x32x32xf32, #tpu.memory_space<vmem>>, vector<1x1x32x32xf32>,
    %c0_9 = arith.constant 0 : index
    %c0_10 = arith.constant 0 : index
    %c32 = arith.constant 32 : index
    %11 = vector.load %arg1[%c0_9, %c0_10, %c32] : memref<2x32x256xf32, #tpu.memory_space<vmem>>, vector<1x32x32xf32>
    %12 = vector.shape_cast %11 : vector<1x32x32xf32> to vector<32x32xf32>
    %c0_11 = arith.constant 0 : index
    %c32_12 = arith.constant 32 : index
    %13 = vector.load %arg2[%c0_11, %c32_12] : memref<2x256xf32, #tpu.memory_space<vmem>>, vector<1x32xf32>
    %14 = vector.broadcast %13 : vector<1x32xf32> to vector<32x32xf32>
    %15 = arith.mulf %12, %14 : vector<32x32xf32>
    %c1_13 = arith.constant 1 : index
    %c32_14 = arith.constant 32 : index
    %16 = vector.load %arg2[%c1_13, %c32_14] : memref<2x256xf32, #tpu.memory_space<vmem>>, vector<1x32xf32>
    %17 = vector.broadcast %16 : vector<1x32xf32> to vector<32x32xf32>
    %18 = arith.addf %15, %17 : vector<32x32xf32>
    %c0_15 = arith.constant 0 : index
    %c1_16 = arith.constant 1 : index
    %c0_17 = arith.constant 0 : index
    %c0_18 = arith.constant 0 : index
    %19 = vector.load %arg3[%c0_15, %c1_16, %c0_17, %c0_18] : memref<2x8x32x32xf32, #tpu.memory_space<vmem>>, vector<1x1x32x32xf32>
    %20 = vector.shape_cast %19 : vector<1x1x32x32xf32> to vector<32x32xf32>
    %21 = vector.shape_cast %18 : vector<32x32xf32> to vector<1x1x32x32xf32>
    tpu.vector_store %arg3[%c0_15, %c1_16, %c0_17, %c0_18], %21 {strides = array<i32>} : memref<2x8x32x32xf32, #tpu.memory_space<vmem>>, vector<1x1x32x32xf32>,
    %c0_19 = arith.constant 0 : index
    %c0_20 = arith.constant 0 : index
    %c64 = arith.constant 64 : index
    %22 = vector.load %arg1[%c0_19, %c0_20, %c64] : memref<2x32x256xf32, #tpu.memory_space<vmem>>, vector<1x32x32xf32>
    %23 = vector.shape_cast %22 : vector<1x32x32xf32> to vector<32x32xf32>
    %c0_21 = arith.constant 0 : index
    %c64_22 = arith.constant 64 : index
    %24 = vector.load %arg2[%c0_21, %c64_22] : memref<2x256xf32, #tpu.memory_space<vmem>>, vector<1x32xf32>
    %25 = vector.broadcast %24 : vector<1x32xf32> to vector<32x32xf32>
    %26 = arith.mulf %23, %25 : vector<32x32xf32>
    %c1_23 = arith.constant 1 : index
    %c64_24 = arith.constant 64 : index
    %27 = vector.load %arg2[%c1_23, %c64_24] : memref<2x256xf32, #tpu.memory_space<vmem>>, vector<1x32xf32>
    %28 = vector.broadcast %27 : vector<1x32xf32> to vector<32x32xf32>
    %29 = arith.addf %26, %28 : vector<32x32xf32>
    %c0_25 = arith.constant 0 : index
    %c2 = arith.constant 2 : index
    %c0_26 = arith.constant 0 : index
    %c0_27 = arith.constant 0 : index
    %30 = vector.load %arg3[%c0_25, %c2, %c0_26, %c0_27] : memref<2x8x32x32xf32, #tpu.memory_space<vmem>>, vector<1x1x32x32xf32>
    %31 = vector.shape_cast %30 : vector<1x1x32x32xf32> to vector<32x32xf32>
    %32 = vector.shape_cast %29 : vector<32x32xf32> to vector<1x1x32x32xf32>
    tpu.vector_store %arg3[%c0_25, %c2, %c0_26, %c0_27], %32 {strides = array<i32>} : memref<2x8x32x32xf32, #tpu.memory_space<vmem>>, vector<1x1x32x32xf32>,
    %c0_28 = arith.constant 0 : index
    %c0_29 = arith.constant 0 : index
    %c96 = arith.constant 96 : index
    %33 = vector.load %arg1[%c0_28, %c0_29, %c96] : memref<2x32x256xf32, #tpu.memory_space<vmem>>, vector<1x32x32xf32>
    %34 = vector.shape_cast %33 : vector<1x32x32xf32> to vector<32x32xf32>
    %c0_30 = arith.constant 0 : index
    %c96_31 = arith.constant 96 : index
    %35 = vector.load %arg2[%c0_30, %c96_31] : memref<2x256xf32, #tpu.memory_space<vmem>>, vector<1x32xf32>
    %36 = vector.broadcast %35 : vector<1x32xf32> to vector<32x32xf32>
    %37 = arith.mulf %34, %36 : vector<32x32xf32>
    %c1_32 = arith.constant 1 : index
    %c96_33 = arith.constant 96 : index
    %38 = vector.load %arg2[%c1_32, %c96_33] : memref<2x256xf32, #tpu.memory_space<vmem>>, vector<1x32xf32>
    %39 = vector.broadcast %38 : vector<1x32xf32> to vector<32x32xf32>
    %40 = arith.addf %37, %39 : vector<32x32xf32>
    %c0_34 = arith.constant 0 : index
    %c3 = arith.constant 3 : index
    %c0_35 = arith.constant 0 : index
    %c0_36 = arith.constant 0 : index
    %41 = vector.load %arg3[%c0_34, %c3, %c0_35, %c0_36] : memref<2x8x32x32xf32, #tpu.memory_space<vmem>>, vector<1x1x32x32xf32>
    %42 = vector.shape_cast %41 : vector<1x1x32x32xf32> to vector<32x32xf32>
    %43 = vector.shape_cast %40 : vector<32x32xf32> to vector<1x1x32x32xf32>
    tpu.vector_store %arg3[%c0_34, %c3, %c0_35, %c0_36], %43 {strides = array<i32>} : memref<2x8x32x32xf32, #tpu.memory_space<vmem>>, vector<1x1x32x32xf32>,
    %c0_37 = arith.constant 0 : index
    %c0_38 = arith.constant 0 : index
    %c128 = arith.constant 128 : index
    %44 = vector.load %arg1[%c0_37, %c0_38, %c128] : memref<2x32x256xf32, #tpu.memory_space<vmem>>, vector<1x32x32xf32>
    %45 = vector.shape_cast %44 : vector<1x32x32xf32> to vector<32x32xf32>
    %c0_39 = arith.constant 0 : index
    %c128_40 = arith.constant 128 : index
    %46 = vector.load %arg2[%c0_39, %c128_40] : memref<2x256xf32, #tpu.memory_space<vmem>>, vector<1x32xf32>
    %47 = vector.broadcast %46 : vector<1x32xf32> to vector<32x32xf32>
    %48 = arith.mulf %45, %47 : vector<32x32xf32>
    %c1_41 = arith.constant 1 : index
    %c128_42 = arith.constant 128 : index
    %49 = vector.load %arg2[%c1_41, %c128_42] : memref<2x256xf32, #tpu.memory_space<vmem>>, vector<1x32xf32>
    %50 = vector.broadcast %49 : vector<1x32xf32> to vector<32x32xf32>
    %51 = arith.addf %48, %50 : vector<32x32xf32>
    %c0_43 = arith.constant 0 : index
    %c4 = arith.constant 4 : index
    %c0_44 = arith.constant 0 : index
    %c0_45 = arith.constant 0 : index
    %52 = vector.load %arg3[%c0_43, %c4, %c0_44, %c0_45] : memref<2x8x32x32xf32, #tpu.memory_space<vmem>>, vector<1x1x32x32xf32>
    %53 = vector.shape_cast %52 : vector<1x1x32x32xf32> to vector<32x32xf32>
    %54 = vector.shape_cast %51 : vector<32x32xf32> to vector<1x1x32x32xf32>
    tpu.vector_store %arg3[%c0_43, %c4, %c0_44, %c0_45], %54 {strides = array<i32>} : memref<2x8x32x32xf32, #tpu.memory_space<vmem>>, vector<1x1x32x32xf32>,
    %c0_46 = arith.constant 0 : index
    %c0_47 = arith.constant 0 : index
    %c160 = arith.constant 160 : index
    %55 = vector.load %arg1[%c0_46, %c0_47, %c160] : memref<2x32x256xf32, #tpu.memory_space<vmem>>, vector<1x32x32xf32>
    %56 = vector.shape_cast %55 : vector<1x32x32xf32> to vector<32x32xf32>
    %c0_48 = arith.constant 0 : index
    %c160_49 = arith.constant 160 : index
    %57 = vector.load %arg2[%c0_48, %c160_49] : memref<2x256xf32, #tpu.memory_space<vmem>>, vector<1x32xf32>
    %58 = vector.broadcast %57 : vector<1x32xf32> to vector<32x32xf32>
    %59 = arith.mulf %56, %58 : vector<32x32xf32>
    %c1_50 = arith.constant 1 : index
    %c160_51 = arith.constant 160 : index
    %60 = vector.load %arg2[%c1_50, %c160_51] : memref<2x256xf32, #tpu.memory_space<vmem>>, vector<1x32xf32>
    %61 = vector.broadcast %60 : vector<1x32xf32> to vector<32x32xf32>
    %62 = arith.addf %59, %61 : vector<32x32xf32>
    %c0_52 = arith.constant 0 : index
    %c5 = arith.constant 5 : index
    %c0_53 = arith.constant 0 : index
    %c0_54 = arith.constant 0 : index
    %63 = vector.load %arg3[%c0_52, %c5, %c0_53, %c0_54] : memref<2x8x32x32xf32, #tpu.memory_space<vmem>>, vector<1x1x32x32xf32>
    %64 = vector.shape_cast %63 : vector<1x1x32x32xf32> to vector<32x32xf32>
    %65 = vector.shape_cast %62 : vector<32x32xf32> to vector<1x1x32x32xf32>
    tpu.vector_store %arg3[%c0_52, %c5, %c0_53, %c0_54], %65 {strides = array<i32>} : memref<2x8x32x32xf32, #tpu.memory_space<vmem>>, vector<1x1x32x32xf32>,
    %c0_55 = arith.constant 0 : index
    %c0_56 = arith.constant 0 : index
    %c192 = arith.constant 192 : index
    %66 = vector.load %arg1[%c0_55, %c0_56, %c192] : memref<2x32x256xf32, #tpu.memory_space<vmem>>, vector<1x32x32xf32>
    %67 = vector.shape_cast %66 : vector<1x32x32xf32> to vector<32x32xf32>
    %c0_57 = arith.constant 0 : index
    %c192_58 = arith.constant 192 : index
    %68 = vector.load %arg2[%c0_57, %c192_58] : memref<2x256xf32, #tpu.memory_space<vmem>>, vector<1x32xf32>
    %69 = vector.broadcast %68 : vector<1x32xf32> to vector<32x32xf32>
    %70 = arith.mulf %67, %69 : vector<32x32xf32>
    %c1_59 = arith.constant 1 : index
    %c192_60 = arith.constant 192 : index
    %71 = vector.load %arg2[%c1_59, %c192_60] : memref<2x256xf32, #tpu.memory_space<vmem>>, vector<1x32xf32>
    %72 = vector.broadcast %71 : vector<1x32xf32> to vector<32x32xf32>
    %73 = arith.addf %70, %72 : vector<32x32xf32>
    %c0_61 = arith.constant 0 : index
    %c6 = arith.constant 6 : index
    %c0_62 = arith.constant 0 : index
    %c0_63 = arith.constant 0 : index
    %74 = vector.load %arg3[%c0_61, %c6, %c0_62, %c0_63] : memref<2x8x32x32xf32, #tpu.memory_space<vmem>>, vector<1x1x32x32xf32>
    %75 = vector.shape_cast %74 : vector<1x1x32x32xf32> to vector<32x32xf32>
    %76 = vector.shape_cast %73 : vector<32x32xf32> to vector<1x1x32x32xf32>
    tpu.vector_store %arg3[%c0_61, %c6, %c0_62, %c0_63], %76 {strides = array<i32>} : memref<2x8x32x32xf32, #tpu.memory_space<vmem>>, vector<1x1x32x32xf32>,
    %c0_64 = arith.constant 0 : index
    %c0_65 = arith.constant 0 : index
    %c224 = arith.constant 224 : index
    %77 = vector.load %arg1[%c0_64, %c0_65, %c224] : memref<2x32x256xf32, #tpu.memory_space<vmem>>, vector<1x32x32xf32>
    %78 = vector.shape_cast %77 : vector<1x32x32xf32> to vector<32x32xf32>
    %c0_66 = arith.constant 0 : index
    %c224_67 = arith.constant 224 : index
    %79 = vector.load %arg2[%c0_66, %c224_67] : memref<2x256xf32, #tpu.memory_space<vmem>>, vector<1x32xf32>
    %80 = vector.broadcast %79 : vector<1x32xf32> to vector<32x32xf32>
    %81 = arith.mulf %78, %80 : vector<32x32xf32>
    %c1_68 = arith.constant 1 : index
    %c224_69 = arith.constant 224 : index
    %82 = vector.load %arg2[%c1_68, %c224_69] : memref<2x256xf32, #tpu.memory_space<vmem>>, vector<1x32xf32>
    %83 = vector.broadcast %82 : vector<1x32xf32> to vector<32x32xf32>
    %84 = arith.addf %81, %83 : vector<32x32xf32>
    %c0_70 = arith.constant 0 : index
    %c7 = arith.constant 7 : index
    %c0_71 = arith.constant 0 : index
    %c0_72 = arith.constant 0 : index
    %85 = vector.load %arg3[%c0_70, %c7, %c0_71, %c0_72] : memref<2x8x32x32xf32, #tpu.memory_space<vmem>>, vector<1x1x32x32xf32>
    %86 = vector.shape_cast %85 : vector<1x1x32x32xf32> to vector<32x32xf32>
    %87 = vector.shape_cast %84 : vector<32x32xf32> to vector<1x1x32x32xf32>
    tpu.vector_store %arg3[%c0_70, %c7, %c0_71, %c0_72], %87 {strides = array<i32>} : memref<2x8x32x32xf32, #tpu.memory_space<vmem>>, vector<1x1x32x32xf32>,
    %c1_73 = arith.constant 1 : index
    %c0_74 = arith.constant 0 : index
    %c0_75 = arith.constant 0 : index
    %88 = vector.load %arg1[%c1_73, %c0_74, %c0_75] : memref<2x32x256xf32, #tpu.memory_space<vmem>>, vector<1x32x32xf32>
    %89 = vector.shape_cast %88 : vector<1x32x32xf32> to vector<32x32xf32>
    %c0_76 = arith.constant 0 : index
    %c0_77 = arith.constant 0 : index
    %90 = vector.load %arg2[%c0_76, %c0_77] : memref<2x256xf32, #tpu.memory_space<vmem>>, vector<1x32xf32>
    %91 = vector.broadcast %90 : vector<1x32xf32> to vector<32x32xf32>
    %92 = arith.mulf %89, %91 : vector<32x32xf32>
    %c1_78 = arith.constant 1 : index
    %c0_79 = arith.constant 0 : index
    %93 = vector.load %arg2[%c1_78, %c0_79] : memref<2x256xf32, #tpu.memory_space<vmem>>, vector<1x32xf32>
    %94 = vector.broadcast %93 : vector<1x32xf32> to vector<32x32xf32>
    %95 = arith.addf %92, %94 : vector<32x32xf32>
    %c1_80 = arith.constant 1 : index
    %c0_81 = arith.constant 0 : index
    %c0_82 = arith.constant 0 : index
    %c0_83 = arith.constant 0 : index
    %96 = vector.load %arg3[%c1_80, %c0_81, %c0_82, %c0_83] : memref<2x8x32x32xf32, #tpu.memory_space<vmem>>, vector<1x1x32x32xf32>
    %97 = vector.shape_cast %96 : vector<1x1x32x32xf32> to vector<32x32xf32>
    %98 = vector.shape_cast %95 : vector<32x32xf32> to vector<1x1x32x32xf32>
    tpu.vector_store %arg3[%c1_80, %c0_81, %c0_82, %c0_83], %98 {strides = array<i32>} : memref<2x8x32x32xf32, #tpu.memory_space<vmem>>, vector<1x1x32x32xf32>,
    %c1_84 = arith.constant 1 : index
    %c0_85 = arith.constant 0 : index
    %c32_86 = arith.constant 32 : index
    %99 = vector.load %arg1[%c1_84, %c0_85, %c32_86] : memref<2x32x256xf32, #tpu.memory_space<vmem>>, vector<1x32x32xf32>
    %100 = vector.shape_cast %99 : vector<1x32x32xf32> to vector<32x32xf32>
    %c0_87 = arith.constant 0 : index
    %c32_88 = arith.constant 32 : index
    %101 = vector.load %arg2[%c0_87, %c32_88] : memref<2x256xf32, #tpu.memory_space<vmem>>, vector<1x32xf32>
    %102 = vector.broadcast %101 : vector<1x32xf32> to vector<32x32xf32>
    %103 = arith.mulf %100, %102 : vector<32x32xf32>
    %c1_89 = arith.constant 1 : index
    %c32_90 = arith.constant 32 : index
    %104 = vector.load %arg2[%c1_89, %c32_90] : memref<2x256xf32, #tpu.memory_space<vmem>>, vector<1x32xf32>
    %105 = vector.broadcast %104 : vector<1x32xf32> to vector<32x32xf32>
    %106 = arith.addf %103, %105 : vector<32x32xf32>
    %c1_91 = arith.constant 1 : index
    %c1_92 = arith.constant 1 : index
    %c0_93 = arith.constant 0 : index
    %c0_94 = arith.constant 0 : index
    %107 = vector.load %arg3[%c1_91, %c1_92, %c0_93, %c0_94] : memref<2x8x32x32xf32, #tpu.memory_space<vmem>>, vector<1x1x32x32xf32>
    %108 = vector.shape_cast %107 : vector<1x1x32x32xf32> to vector<32x32xf32>
    %109 = vector.shape_cast %106 : vector<32x32xf32> to vector<1x1x32x32xf32>
    tpu.vector_store %arg3[%c1_91, %c1_92, %c0_93, %c0_94], %109 {strides = array<i32>} : memref<2x8x32x32xf32, #tpu.memory_space<vmem>>, vector<1x1x32x32xf32>,
    %c1_95 = arith.constant 1 : index
    %c0_96 = arith.constant 0 : index
    %c64_97 = arith.constant 64 : index
    %110 = vector.load %arg1[%c1_95, %c0_96, %c64_97] : memref<2x32x256xf32, #tpu.memory_space<vmem>>, vector<1x32x32xf32>
    %111 = vector.shape_cast %110 : vector<1x32x32xf32> to vector<32x32xf32>
    %c0_98 = arith.constant 0 : index
    %c64_99 = arith.constant 64 : index
    %112 = vector.load %arg2[%c0_98, %c64_99] : memref<2x256xf32, #tpu.memory_space<vmem>>, vector<1x32xf32>
    %113 = vector.broadcast %112 : vector<1x32xf32> to vector<32x32xf32>
    %114 = arith.mulf %111, %113 : vector<32x32xf32>
    %c1_100 = arith.constant 1 : index
    %c64_101 = arith.constant 64 : index
    %115 = vector.load %arg2[%c1_100, %c64_101] : memref<2x256xf32, #tpu.memory_space<vmem>>, vector<1x32xf32>
    %116 = vector.broadcast %115 : vector<1x32xf32> to vector<32x32xf32>
    %117 = arith.addf %114, %116 : vector<32x32xf32>
    %c1_102 = arith.constant 1 : index
    %c2_103 = arith.constant 2 : index
    %c0_104 = arith.constant 0 : index
    %c0_105 = arith.constant 0 : index
    %118 = vector.load %arg3[%c1_102, %c2_103, %c0_104, %c0_105] : memref<2x8x32x32xf32, #tpu.memory_space<vmem>>, vector<1x1x32x32xf32>
    %119 = vector.shape_cast %118 : vector<1x1x32x32xf32> to vector<32x32xf32>
    %120 = vector.shape_cast %117 : vector<32x32xf32> to vector<1x1x32x32xf32>
    tpu.vector_store %arg3[%c1_102, %c2_103, %c0_104, %c0_105], %120 {strides = array<i32>} : memref<2x8x32x32xf32, #tpu.memory_space<vmem>>, vector<1x1x32x32xf32>,
    %c1_106 = arith.constant 1 : index
    %c0_107 = arith.constant 0 : index
    %c96_108 = arith.constant 96 : index
    %121 = vector.load %arg1[%c1_106, %c0_107, %c96_108] : memref<2x32x256xf32, #tpu.memory_space<vmem>>, vector<1x32x32xf32>
    %122 = vector.shape_cast %121 : vector<1x32x32xf32> to vector<32x32xf32>
    %c0_109 = arith.constant 0 : index
    %c96_110 = arith.constant 96 : index
    %123 = vector.load %arg2[%c0_109, %c96_110] : memref<2x256xf32, #tpu.memory_space<vmem>>, vector<1x32xf32>
    %124 = vector.broadcast %123 : vector<1x32xf32> to vector<32x32xf32>
    %125 = arith.mulf %122, %124 : vector<32x32xf32>
    %c1_111 = arith.constant 1 : index
    %c96_112 = arith.constant 96 : index
    %126 = vector.load %arg2[%c1_111, %c96_112] : memref<2x256xf32, #tpu.memory_space<vmem>>, vector<1x32xf32>
    %127 = vector.broadcast %126 : vector<1x32xf32> to vector<32x32xf32>
    %128 = arith.addf %125, %127 : vector<32x32xf32>
    %c1_113 = arith.constant 1 : index
    %c3_114 = arith.constant 3 : index
    %c0_115 = arith.constant 0 : index
    %c0_116 = arith.constant 0 : index
    %129 = vector.load %arg3[%c1_113, %c3_114, %c0_115, %c0_116] : memref<2x8x32x32xf32, #tpu.memory_space<vmem>>, vector<1x1x32x32xf32>
    %130 = vector.shape_cast %129 : vector<1x1x32x32xf32> to vector<32x32xf32>
    %131 = vector.shape_cast %128 : vector<32x32xf32> to vector<1x1x32x32xf32>
    tpu.vector_store %arg3[%c1_113, %c3_114, %c0_115, %c0_116], %131 {strides = array<i32>} : memref<2x8x32x32xf32, #tpu.memory_space<vmem>>, vector<1x1x32x32xf32>,
    %c1_117 = arith.constant 1 : index
    %c0_118 = arith.constant 0 : index
    %c128_119 = arith.constant 128 : index
    %132 = vector.load %arg1[%c1_117, %c0_118, %c128_119] : memref<2x32x256xf32, #tpu.memory_space<vmem>>, vector<1x32x32xf32>
    %133 = vector.shape_cast %132 : vector<1x32x32xf32> to vector<32x32xf32>
    %c0_120 = arith.constant 0 : index
    %c128_121 = arith.constant 128 : index
    %134 = vector.load %arg2[%c0_120, %c128_121] : memref<2x256xf32, #tpu.memory_space<vmem>>, vector<1x32xf32>
    %135 = vector.broadcast %134 : vector<1x32xf32> to vector<32x32xf32>
    %136 = arith.mulf %133, %135 : vector<32x32xf32>
    %c1_122 = arith.constant 1 : index
    %c128_123 = arith.constant 128 : index
    %137 = vector.load %arg2[%c1_122, %c128_123] : memref<2x256xf32, #tpu.memory_space<vmem>>, vector<1x32xf32>
    %138 = vector.broadcast %137 : vector<1x32xf32> to vector<32x32xf32>
    %139 = arith.addf %136, %138 : vector<32x32xf32>
    %c1_124 = arith.constant 1 : index
    %c4_125 = arith.constant 4 : index
    %c0_126 = arith.constant 0 : index
    %c0_127 = arith.constant 0 : index
    %140 = vector.load %arg3[%c1_124, %c4_125, %c0_126, %c0_127] : memref<2x8x32x32xf32, #tpu.memory_space<vmem>>, vector<1x1x32x32xf32>
    %141 = vector.shape_cast %140 : vector<1x1x32x32xf32> to vector<32x32xf32>
    %142 = vector.shape_cast %139 : vector<32x32xf32> to vector<1x1x32x32xf32>
    tpu.vector_store %arg3[%c1_124, %c4_125, %c0_126, %c0_127], %142 {strides = array<i32>} : memref<2x8x32x32xf32, #tpu.memory_space<vmem>>, vector<1x1x32x32xf32>,
    %c1_128 = arith.constant 1 : index
    %c0_129 = arith.constant 0 : index
    %c160_130 = arith.constant 160 : index
    %143 = vector.load %arg1[%c1_128, %c0_129, %c160_130] : memref<2x32x256xf32, #tpu.memory_space<vmem>>, vector<1x32x32xf32>
    %144 = vector.shape_cast %143 : vector<1x32x32xf32> to vector<32x32xf32>
    %c0_131 = arith.constant 0 : index
    %c160_132 = arith.constant 160 : index
    %145 = vector.load %arg2[%c0_131, %c160_132] : memref<2x256xf32, #tpu.memory_space<vmem>>, vector<1x32xf32>
    %146 = vector.broadcast %145 : vector<1x32xf32> to vector<32x32xf32>
    %147 = arith.mulf %144, %146 : vector<32x32xf32>
    %c1_133 = arith.constant 1 : index
    %c160_134 = arith.constant 160 : index
    %148 = vector.load %arg2[%c1_133, %c160_134] : memref<2x256xf32, #tpu.memory_space<vmem>>, vector<1x32xf32>
    %149 = vector.broadcast %148 : vector<1x32xf32> to vector<32x32xf32>
    %150 = arith.addf %147, %149 : vector<32x32xf32>
    %c1_135 = arith.constant 1 : index
    %c5_136 = arith.constant 5 : index
    %c0_137 = arith.constant 0 : index
    %c0_138 = arith.constant 0 : index
    %151 = vector.load %arg3[%c1_135, %c5_136, %c0_137, %c0_138] : memref<2x8x32x32xf32, #tpu.memory_space<vmem>>, vector<1x1x32x32xf32>
    %152 = vector.shape_cast %151 : vector<1x1x32x32xf32> to vector<32x32xf32>
    %153 = vector.shape_cast %150 : vector<32x32xf32> to vector<1x1x32x32xf32>
    tpu.vector_store %arg3[%c1_135, %c5_136, %c0_137, %c0_138], %153 {strides = array<i32>} : memref<2x8x32x32xf32, #tpu.memory_space<vmem>>, vector<1x1x32x32xf32>,
    %c1_139 = arith.constant 1 : index
    %c0_140 = arith.constant 0 : index
    %c192_141 = arith.constant 192 : index
    %154 = vector.load %arg1[%c1_139, %c0_140, %c192_141] : memref<2x32x256xf32, #tpu.memory_space<vmem>>, vector<1x32x32xf32>
    %155 = vector.shape_cast %154 : vector<1x32x32xf32> to vector<32x32xf32>
    %c0_142 = arith.constant 0 : index
    %c192_143 = arith.constant 192 : index
    %156 = vector.load %arg2[%c0_142, %c192_143] : memref<2x256xf32, #tpu.memory_space<vmem>>, vector<1x32xf32>
    %157 = vector.broadcast %156 : vector<1x32xf32> to vector<32x32xf32>
    %158 = arith.mulf %155, %157 : vector<32x32xf32>
    %c1_144 = arith.constant 1 : index
    %c192_145 = arith.constant 192 : index
    %159 = vector.load %arg2[%c1_144, %c192_145] : memref<2x256xf32, #tpu.memory_space<vmem>>, vector<1x32xf32>
    %160 = vector.broadcast %159 : vector<1x32xf32> to vector<32x32xf32>
    %161 = arith.addf %158, %160 : vector<32x32xf32>
    %c1_146 = arith.constant 1 : index
    %c6_147 = arith.constant 6 : index
    %c0_148 = arith.constant 0 : index
    %c0_149 = arith.constant 0 : index
    %162 = vector.load %arg3[%c1_146, %c6_147, %c0_148, %c0_149] : memref<2x8x32x32xf32, #tpu.memory_space<vmem>>, vector<1x1x32x32xf32>
    %163 = vector.shape_cast %162 : vector<1x1x32x32xf32> to vector<32x32xf32>
    %164 = vector.shape_cast %161 : vector<32x32xf32> to vector<1x1x32x32xf32>
    tpu.vector_store %arg3[%c1_146, %c6_147, %c0_148, %c0_149], %164 {strides = array<i32>} : memref<2x8x32x32xf32, #tpu.memory_space<vmem>>, vector<1x1x32x32xf32>,
    %c1_150 = arith.constant 1 : index
    %c0_151 = arith.constant 0 : index
    %c224_152 = arith.constant 224 : index
    %165 = vector.load %arg1[%c1_150, %c0_151, %c224_152] : memref<2x32x256xf32, #tpu.memory_space<vmem>>, vector<1x32x32xf32>
    %166 = vector.shape_cast %165 : vector<1x32x32xf32> to vector<32x32xf32>
    %c0_153 = arith.constant 0 : index
    %c224_154 = arith.constant 224 : index
    %167 = vector.load %arg2[%c0_153, %c224_154] : memref<2x256xf32, #tpu.memory_space<vmem>>, vector<1x32xf32>
    %168 = vector.broadcast %167 : vector<1x32xf32> to vector<32x32xf32>
    %169 = arith.mulf %166, %168 : vector<32x32xf32>
    %c1_155 = arith.constant 1 : index
    %c224_156 = arith.constant 224 : index
    %170 = vector.load %arg2[%c1_155, %c224_156] : memref<2x256xf32, #tpu.memory_space<vmem>>, vector<1x32xf32>
    %171 = vector.broadcast %170 : vector<1x32xf32> to vector<32x32xf32>
    %172 = arith.addf %169, %171 : vector<32x32xf32>
    %c1_157 = arith.constant 1 : index
    %c7_158 = arith.constant 7 : index
    %c0_159 = arith.constant 0 : index
    %c0_160 = arith.constant 0 : index
    %173 = vector.load %arg3[%c1_157, %c7_158, %c0_159, %c0_160] : memref<2x8x32x32xf32, #tpu.memory_space<vmem>>, vector<1x1x32x32xf32>
    %174 = vector.shape_cast %173 : vector<1x1x32x32xf32> to vector<32x32xf32>
    %175 = vector.shape_cast %172 : vector<32x32xf32> to vector<1x1x32x32xf32>
    tpu.vector_store %arg3[%c1_157, %c7_158, %c0_159, %c0_160], %175 {strides = array<i32>} : memref<2x8x32x32xf32, #tpu.memory_space<vmem>>, vector<1x1x32x32xf32>,
    return
  }
  func.func @transform_0(%arg0: i32) -> (i32, i32, i32) {
    %c0_i32 = arith.constant 0 : i32
    %c0_i32_0 = arith.constant 0 : i32
    %c0_i32_1 = arith.constant 0 : i32
    return %arg0, %c0_i32, %c0_i32_0 : i32, i32, i32
  }
  func.func @transform_1(%arg0: i32) -> (i32, i32) {
    %c0_i32 = arith.constant 0 : i32
    %c0_i32_0 = arith.constant 0 : i32
    %c0_i32_1 = arith.constant 0 : i32
    return %c0_i32, %c0_i32_0 : i32, i32
  }
  func.func @transform_2(%arg0: i32) -> (i32, i32, i32, i32) {
    %c0_i32 = arith.constant 0 : i32
    %c0_i32_0 = arith.constant 0 : i32
    %c0_i32_1 = arith.constant 0 : i32
    %c0_i32_2 = arith.constant 0 : i32
    return %arg0, %c0_i32, %c0_i32_0, %c0_i32_1 : i32, i32, i32, i32
  }
}

</mosaic_0001>

<llo_original>
// kernel: upsample_block_forward.3
$region0: #{upsample_block_forward.3}
  #allocation0 [shape = 'u32[]', space=smem, size = 0x4, offset = 0x4, fixed_abs, tag = 'smem constant byte address 0x4 - core index']
  #allocation1 [shape = 'u32[144,128]{1,0:T(1,128)}', space=vmem, size = 0x12000, scoped, tag = 'internal scratch']
  %s0 = inlined_call_operand.vmem [shape: f32[2,32,256], index: 0, kind: input, shape index: {}]
  %s1 = inlined_call_operand.vmem [shape: f32[2,256], index: 1, kind: input, shape index: {}]
  %s2 = inlined_call_operand.hbm [shape: f32[2,8,32,32], index: 2, kind: output, shape index: {}]
  %s3 = sld [smem:[#allocation0]]
  $region18: #{upsample_block_forward.3} parent=0
    _
  %s5 = ssub.s32 1, %s3
  %s6 = scalar_select 0, %s5, %s3
  $region1: #{upsample_block_forward.3} parent=0
    #allocation2 [shape = 'u8[262144]{0}', space=vmem, size = 0x40000, scoped, tag = 'output window, operand 0, single buffered']
    #allocation3 [shape = 's32[1]{0}', space=sflag, size = 0x4, scoped, tag = 'scoped memory for upsample_block_forward.3']
    %7 = vsyncpa [#allocation3], 0
    // Predicated region
    $region2: #{upsample_block_forward.3} parent=1 // pred_check
      _
    $region3: #{upsample_block_forward.3} parent=1 // pred_check_branch
      %9 = sbr.rel (0) target = $region5
    $region4: #{upsample_block_forward.3} parent=1 // pred_region
      _
    $region5: #{upsample_block_forward.3} parent=1 // pred_fallthru
      _
    // Predicated region
    $region6: #{upsample_block_forward.3} parent=1 // pred_check
      _
    $region7: #{upsample_block_forward.3} parent=1 // pred_check_branch
      %11 = sbr.rel (0) target = $region9
    $region8: #{upsample_block_forward.3} parent=1 // pred_region
      _
    $region9: #{upsample_block_forward.3} parent=1 // pred_fallthru
      _
    %v12 = vld [vmem:[%s0] sm:$0xff]
    %v13 = vld [vmem:[%s0 + $0x10] sm:$0xff]
    %v14 = vld [vmem:[%s0 + $0x20] sm:$0xff]
    %v15 = vld [vmem:[%s0 + $0x30] sm:$0xff]
    %v16 = vld [vmem:[%s1] sm:$0x1]
    %v17 = vlaneseq
    %v18 = vshrl.u32 %v17, 7
    %v19 = vsub.s32 0, %v18
    %v20 = vrot.slane %v16, %v19
    %v21 = vmul.f32 %v12, %v20
    %v22 = vmul.f32 %v13, %v20
    %v23 = vmul.f32 %v14, %v20
    %v24 = vmul.f32 %v15, %v20
    %v25 = vld [vmem:[%s1 + $0x1] sm:$0x1]
    %v26 = vlaneseq
    %v27 = vshrl.u32 %v26, 7
    %v28 = vsub.s32 0, %v27
    %v29 = vrot.slane %v25, %v28
    %v30 = vadd.f32 %v21, %v29
    %v31 = vadd.f32 %v22, %v29
    %v32 = vadd.f32 %v23, %v29
    %v33 = vadd.f32 %v24, %v29
    %vm34 = vcmask 261120
    %35 = vst.msk [vmem:[#allocation2] sm:$0xff] %vm34, %v30
    %36 = vst.msk [vmem:[#allocation2 + $0x8] sm:$0xff] %vm34, %v31
    %37 = vst.msk [vmem:[#allocation2 + $0x10] sm:$0xff] %vm34, %v32
    %38 = vst.msk [vmem:[#allocation2 + $0x18] sm:$0xff] %vm34, %v33
    %v39 = vld [vmem:[%s0] sm:$0xff]
    %v40 = vld [vmem:[%s0 + $0x10] sm:$0xff]
    %v41 = vld [vmem:[%s0 + $0x20] sm:$0xff]
    %v42 = vld [vmem:[%s0 + $0x30] sm:$0xff]
    %v43 = vld [vmem:[%s1] sm:$0x1]
    %v44 = vlaneseq
    %v45 = vshrl.u32 %v44, 7
    %v46 = vsub.s32 0, %v45
    %v47 = vrot.slane %v43, %v46
    %v48 = vmul.f32 %v39, %v47
    %v49 = vmul.f32 %v40, %v47
    %v50 = vmul.f32 %v41, %v47
    %v51 = vmul.f32 %v42, %v47
    %v52 = vld [vmem:[%s1 + $0x1] sm:$0x1]
    %v53 = vlaneseq
    %v54 = vshrl.u32 %v53, 7
    %v55 = vsub.s32 0, %v54
    %v56 = vrot.slane %v52, %v55
    %v57 = vadd.f32 %v48, %v56
    %v58 = vadd.f32 %v49, %v56
    %v59 = vadd.f32 %v50, %v56
    %v60 = vadd.f32 %v51, %v56
    %65 = vrot.lane.b32.xlu0 %v57, 96
    %v66 = vpop.permute.xlu0 %65
    %67 = vrot.lane.b32.xlu0 %v58, 96
    %v68 = vpop.permute.xlu0 %67
    %69 = vrot.lane.b32.xlu0 %v59, 96
    %v70 = vpop.permute.xlu0 %69
    %71 = vrot.lane.b32.xlu0 %v60, 96
    %v72 = vpop.permute.xlu0 %71
    %s77 = scalar_lea.vmem [#allocation2], 32
    %78 = vst.msk [vmem:[%s77] sm:$0xff] %vm34, %v66
    %79 = vst.msk [vmem:[%s77 + $0x8] sm:$0xff] %vm34, %v68
    %80 = vst.msk [vmem:[%s77 + $0x10] sm:$0xff] %vm34, %v70
    %81 = vst.msk [vmem:[%s77 + $0x18] sm:$0xff] %vm34, %v72
    %v82 = vld [vmem:[%s0] sm:$0xff]
    %v83 = vld [vmem:[%s0 + $0x10] sm:$0xff]
    %v84 = vld [vmem:[%s0 + $0x20] sm:$0xff]
    %v85 = vld [vmem:[%s0 + $0x30] sm:$0xff]
    %v86 = vld [vmem:[%s1] sm:$0x1]
    %v87 = vlaneseq
    %v88 = vshrl.u32 %v87, 7
    %v89 = vsub.s32 0, %v88
    %v90 = vrot.slane %v86, %v89
    %v91 = vmul.f32 %v82, %v90
    %v92 = vmul.f32 %v83, %v90
    %v93 = vmul.f32 %v84, %v90
    %v94 = vmul.f32 %v85, %v90
    %v95 = vld [vmem:[%s1 + $0x1] sm:$0x1]
    %v96 = vlaneseq
    %v97 = vshrl.u32 %v96, 7
    %v98 = vsub.s32 0, %v97
    %v99 = vrot.slane %v95, %v98
    %v100 = vadd.f32 %v91, %v99
    %v101 = vadd.f32 %v92, %v99
    %v102 = vadd.f32 %v93, %v99
    %v103 = vadd.f32 %v94, %v99
    %108 = vrot.lane.b32.xlu0 %v100, 64
    %v109 = vpop.permute.xlu0 %108
    %110 = vrot.lane.b32.xlu0 %v101, 64
    %v111 = vpop.permute.xlu0 %110
    %112 = vrot.lane.b32.xlu0 %v102, 64
    %v113 = vpop.permute.xlu0 %112
    %114 = vrot.lane.b32.xlu0 %v103, 64
    %v115 = vpop.permute.xlu0 %114
    %s120 = scalar_lea.vmem [#allocation2], 64
    %121 = vst.msk [vmem:[%s120] sm:$0xff] %vm34, %v109
    %122 = vst.msk [vmem:[%s120 + $0x8] sm:$0xff] %vm34, %v111
    %123 = vst.msk [vmem:[%s120 + $0x10] sm:$0xff] %vm34, %v113
    %124 = vst.msk [vmem:[%s120 + $0x18] sm:$0xff] %vm34, %v115
    %v125 = vld [vmem:[%s0] sm:$0xff]
    %v126 = vld [vmem:[%s0 + $0x10] sm:$0xff]
    %v127 = vld [vmem:[%s0 + $0x20] sm:$0xff]
    %v128 = vld [vmem:[%s0 + $0x30] sm:$0xff]
    %v129 = vld [vmem:[%s1] sm:$0x1]
    %v130 = vlaneseq
    %v131 = vshrl.u32 %v130, 7
    %v132 = vsub.s32 0, %v131
    %v133 = vrot.slane %v129, %v132
    %v134 = vmul.f32 %v125, %v133
    %v135 = vmul.f32 %v126, %v133
    %v136 = vmul.f32 %v127, %v133
    %v137 = vmul.f32 %v128, %v133
    %v138 = vld [vmem:[%s1 + $0x1] sm:$0x1]
    %v139 = vlaneseq
    %v140 = vshrl.u32 %v139, 7
    %v141 = vsub.s32 0, %v140
    %v142 = vrot.slane %v138, %v141
    %v143 = vadd.f32 %v134, %v142
    %v144 = vadd.f32 %v135, %v142
    %v145 = vadd.f32 %v136, %v142
    %v146 = vadd.f32 %v137, %v142
    %151 = vrot.lane.b32.xlu0 %v143, 32
    %v152 = vpop.permute.xlu0 %151
    %153 = vrot.lane.b32.xlu0 %v144, 32
    %v154 = vpop.permute.xlu0 %153
    %155 = vrot.lane.b32.xlu0 %v145, 32
    %v156 = vpop.permute.xlu0 %155
    %157 = vrot.lane.b32.xlu0 %v146, 32
    %v158 = vpop.permute.xlu0 %157
    %s163 = scalar_lea.vmem [#allocation2], 96
    %164 = vst.msk [vmem:[%s163] sm:$0xff] %vm34, %v152
    %165 = vst.msk [vmem:[%s163 + $0x8] sm:$0xff] %vm34, %v154
    %166 = vst.msk [vmem:[%s163 + $0x10] sm:$0xff] %vm34, %v156
    %167 = vst.msk [vmem:[%s163 + $0x18] sm:$0xff] %vm34, %v158
    %v168 = vld [vmem:[%s0 + $0x8] sm:$0xff]
    %v169 = vld [vmem:[%s0 + $0x18] sm:$0xff]
    %v170 = vld [vmem:[%s0 + $0x28] sm:$0xff]
    %v171 = vld [vmem:[%s0 + $0x38] sm:$0xff]
    %v172 = vld [vmem:[%s1 + $0x2] sm:$0x1]
    %v173 = vlaneseq
    %v174 = vshrl.u32 %v173, 7
    %v175 = vsub.s32 0, %v174
    %v176 = vrot.slane %v172, %v175
    %v177 = vmul.f32 %v168, %v176
    %v178 = vmul.f32 %v169, %v176
    %v179 = vmul.f32 %v170, %v176
    %v180 = vmul.f32 %v171, %v176
    %v181 = vld [vmem:[%s1 + $0x3] sm:$0x1]
    %v182 = vlaneseq
    %v183 = vshrl.u32 %v182, 7
    %v184 = vsub.s32 0, %v183
    %v185 = vrot.slane %v181, %v184
    %v186 = vadd.f32 %v177, %v185
    %v187 = vadd.f32 %v178, %v185
    %v188 = vadd.f32 %v179, %v185
    %v189 = vadd.f32 %v180, %v185
    %s190 = scalar_lea.vmem [#allocation2], 128
    %191 = vst.msk [vmem:[%s190] sm:$0xff] %vm34, %v186
    %192 = vst.msk [vmem:[%s190 + $0x8] sm:$0xff] %vm34, %v187
    %193 = vst.msk [vmem:[%s190 + $0x10] sm:$0xff] %vm34, %v188
    %194 = vst.msk [vmem:[%s190 + $0x18] sm:$0xff] %vm34, %v189
    %v195 = vld [vmem:[%s0 + $0x8] sm:$0xff]
    %v196 = vld [vmem:[%s0 + $0x18] sm:$0xff]
    %v197 = vld [vmem:[%s0 + $0x28] sm:$0xff]
    %v198 = vld [vmem:[%s0 + $0x38] sm:$0xff]
    %v199 = vld [vmem:[%s1 + $0x2] sm:$0x1]
    %v200 = vlaneseq
    %v201 = vshrl.u32 %v200, 7
    %v202 = vsub.s32 0, %v201
    %v203 = vrot.slane %v199, %v202
    %v204 = vmul.f32 %v195, %v203
    %v205 = vmul.f32 %v196, %v203
    %v206 = vmul.f32 %v197, %v203
    %v207 = vmul.f32 %v198, %v203
    %v208 = vld [vmem:[%s1 + $0x3] sm:$0x1]
    %v209 = vlaneseq
    %v210 = vshrl.u32 %v209, 7
    %v211 = vsub.s32 0, %v210
    %v212 = vrot.slane %v208, %v211
    %v213 = vadd.f32 %v204, %v212
    %v214 = vadd.f32 %v205, %v212
    %v215 = vadd.f32 %v206, %v212
    %v216 = vadd.f32 %v207, %v212
    %221 = vrot.lane.b32.xlu0 %v213, 96
    %v222 = vpop.permute.xlu0 %221
    %223 = vrot.lane.b32.xlu0 %v214, 96
    %v224 = vpop.permute.xlu0 %223
    %225 = vrot.lane.b32.xlu0 %v215, 96
    %v226 = vpop.permute.xlu0 %225
    %227 = vrot.lane.b32.xlu0 %v216, 96
    %v228 = vpop.permute.xlu0 %227
    %s233 = scalar_lea.vmem [#allocation2], 160
    %234 = vst.msk [vmem:[%s233] sm:$0xff] %vm34, %v222
    %235 = vst.msk [vmem:[%s233 + $0x8] sm:$0xff] %vm34, %v224
    %236 = vst.msk [vmem:[%s233 + $0x10] sm:$0xff] %vm34, %v226
    %237 = vst.msk [vmem:[%s233 + $0x18] sm:$0xff] %vm34, %v228
    %v238 = vld [vmem:[%s0 + $0x8] sm:$0xff]
    %v239 = vld [vmem:[%s0 + $0x18] sm:$0xff]
    %v240 = vld [vmem:[%s0 + $0x28] sm:$0xff]
    %v241 = vld [vmem:[%s0 + $0x38] sm:$0xff]
    %v242 = vld [vmem:[%s1 + $0x2] sm:$0x1]
    %v243 = vlaneseq
    %v244 = vshrl.u32 %v243, 7
    %v245 = vsub.s32 0, %v244
    %v246 = vrot.slane %v242, %v245
    %v247 = vmul.f32 %v238, %v246
    %v248 = vmul.f32 %v239, %v246
    %v249 = vmul.f32 %v240, %v246
    %v250 = vmul.f32 %v241, %v246
    %v251 = vld [vmem:[%s1 + $0x3] sm:$0x1]
    %v252 = vlaneseq
    %v253 = vshrl.u32 %v252, 7
    %v254 = vsub.s32 0, %v253
    %v255 = vrot.slane %v251, %v254
    %v256 = vadd.f32 %v247, %v255
    %v257 = vadd.f32 %v248, %v255
    %v258 = vadd.f32 %v249, %v255
    %v259 = vadd.f32 %v250, %v255
    %264 = vrot.lane.b32.xlu0 %v256, 64
    %v265 = vpop.permute.xlu0 %264
    %266 = vrot.lane.b32.xlu0 %v257, 64
    %v267 = vpop.permute.xlu0 %266
    %268 = vrot.lane.b32.xlu0 %v258, 64
    %v269 = vpop.permute.xlu0 %268
    %270 = vrot.lane.b32.xlu0 %v259, 64
    %v271 = vpop.permute.xlu0 %270
    %s276 = scalar_lea.vmem [#allocation2], 192
    %277 = vst.msk [vmem:[%s276] sm:$0xff] %vm34, %v265
    %278 = vst.msk [vmem:[%s276 + $0x8] sm:$0xff] %vm34, %v267
    %279 = vst.msk [vmem:[%s276 + $0x10] sm:$0xff] %vm34, %v269
    %280 = vst.msk [vmem:[%s276 + $0x18] sm:$0xff] %vm34, %v271
    %v281 = vld [vmem:[%s0 + $0x8] sm:$0xff]
    %v282 = vld [vmem:[%s0 + $0x18] sm:$0xff]
    %v283 = vld [vmem:[%s0 + $0x28] sm:$0xff]
    %v284 = vld [vmem:[%s0 + $0x38] sm:$0xff]
    %v285 = vld [vmem:[%s1 + $0x2] sm:$0x1]
    %v286 = vlaneseq
    %v287 = vshrl.u32 %v286, 7
    %v288 = vsub.s32 0, %v287
    %v289 = vrot.slane %v285, %v288
    %v290 = vmul.f32 %v281, %v289
    %v291 = vmul.f32 %v282, %v289
    %v292 = vmul.f32 %v283, %v289
    %v293 = vmul.f32 %v284, %v289
    %v294 = vld [vmem:[%s1 + $0x3] sm:$0x1]
    %v295 = vlaneseq
    %v296 = vshrl.u32 %v295, 7
    %v297 = vsub.s32 0, %v296
    %v298 = vrot.slane %v294, %v297
    %v299 = vadd.f32 %v290, %v298
    %v300 = vadd.f32 %v291, %v298
    %v301 = vadd.f32 %v292, %v298
    %v302 = vadd.f32 %v293, %v298
    %307 = vrot.lane.b32.xlu0 %v299, 32
    %v308 = vpop.permute.xlu0 %307
    %309 = vrot.lane.b32.xlu0 %v300, 32
    %v310 = vpop.permute.xlu0 %309
    %311 = vrot.lane.b32.xlu0 %v301, 32
    %v312 = vpop.permute.xlu0 %311
    %313 = vrot.lane.b32.xlu0 %v302, 32
    %v314 = vpop.permute.xlu0 %313
    %s319 = scalar_lea.vmem [#allocation2], 224
    %320 = vst.msk [vmem:[%s319] sm:$0xff] %vm34, %v308
    %321 = vst.msk [vmem:[%s319 + $0x8] sm:$0xff] %vm34, %v310
    %322 = vst.msk [vmem:[%s319 + $0x10] sm:$0xff] %vm34, %v312
    %323 = vst.msk [vmem:[%s319 + $0x18] sm:$0xff] %vm34, %v314
    %s324 = scalar_lea.vmem %s0, 64
    %v325 = vld [vmem:[%s324] sm:$0xff]
    %v326 = vld [vmem:[%s324 + $0x10] sm:$0xff]
    %v327 = vld [vmem:[%s324 + $0x20] sm:$0xff]
    %v328 = vld [vmem:[%s324 + $0x30] sm:$0xff]
    %v329 = vld [vmem:[%s1] sm:$0x1]
    %v330 = vlaneseq
    %v331 = vshrl.u32 %v330, 7
    %v332 = vsub.s32 0, %v331
    %v333 = vrot.slane %v329, %v332
    %v334 = vmul.f32 %v325, %v333
    %v335 = vmul.f32 %v326, %v333
    %v336 = vmul.f32 %v327, %v333
    %v337 = vmul.f32 %v328, %v333
    %v338 = vld [vmem:[%s1 + $0x1] sm:$0x1]
    %v339 = vlaneseq
    %v340 = vshrl.u32 %v339, 7
    %v341 = vsub.s32 0, %v340
    %v342 = vrot.slane %v338, %v341
    %v343 = vadd.f32 %v334, %v342
    %v344 = vadd.f32 %v335, %v342
    %v345 = vadd.f32 %v336, %v342
    %v346 = vadd.f32 %v337, %v342
    %s347 = scalar_lea.vmem [#allocation2], 256
    %348 = vst.msk [vmem:[%s347] sm:$0xff] %vm34, %v343
    %349 = vst.msk [vmem:[%s347 + $0x8] sm:$0xff] %vm34, %v344
    %350 = vst.msk [vmem:[%s347 + $0x10] sm:$0xff] %vm34, %v345
    %351 = vst.msk [vmem:[%s347 + $0x18] sm:$0xff] %vm34, %v346
    %v352 = vld [vmem:[%s324] sm:$0xff]
    %v353 = vld [vmem:[%s324 + $0x10] sm:$0xff]
    %v354 = vld [vmem:[%s324 + $0x20] sm:$0xff]
    %v355 = vld [vmem:[%s324 + $0x30] sm:$0xff]
    %v356 = vld [vmem:[%s1] sm:$0x1]
    %v357 = vlaneseq
    %v358 = vshrl.u32 %v357, 7
    %v359 = vsub.s32 0, %v358
    %v360 = vrot.slane %v356, %v359
    %v361 = vmul.f32 %v352, %v360
    %v362 = vmul.f32 %v353, %v360
    %v363 = vmul.f32 %v354, %v360
    %v364 = vmul.f32 %v355, %v360
    %v365 = vld [vmem:[%s1 + $0x1] sm:$0x1]
    %v366 = vlaneseq
    %v367 = vshrl.u32 %v366, 7
    %v368 = vsub.s32 0, %v367
    %v369 = vrot.slane %v365, %v368
    %v370 = vadd.f32 %v361, %v369
    %v371 = vadd.f32 %v362, %v369
    %v372 = vadd.f32 %v363, %v369
    %v373 = vadd.f32 %v364, %v369
    %378 = vrot.lane.b32.xlu0 %v370, 96
    %v379 = vpop.permute.xlu0 %378
    %380 = vrot.lane.b32.xlu0 %v371, 96
    %v381 = vpop.permute.xlu0 %380
    %382 = vrot.lane.b32.xlu0 %v372, 96
    %v383 = vpop.permute.xlu0 %382
    %384 = vrot.lane.b32.xlu0 %v373, 96
    %v385 = vpop.permute.xlu0 %384
    %s390 = scalar_lea.vmem [#allocation2], 288
    %391 = vst.msk [vmem:[%s390] sm:$0xff] %vm34, %v379
    %392 = vst.msk [vmem:[%s390 + $0x8] sm:$0xff] %vm34, %v381
    %393 = vst.msk [vmem:[%s390 + $0x10] sm:$0xff] %vm34, %v383
    %394 = vst.msk [vmem:[%s390 + $0x18] sm:$0xff] %vm34, %v385
    %v395 = vld [vmem:[%s324] sm:$0xff]
    %v396 = vld [vmem:[%s324 + $0x10] sm:$0xff]
    %v397 = vld [vmem:[%s324 + $0x20] sm:$0xff]
    %v398 = vld [vmem:[%s324 + $0x30] sm:$0xff]
    %v399 = vld [vmem:[%s1] sm:$0x1]
    %v400 = vlaneseq
    %v401 = vshrl.u32 %v400, 7
    %v402 = vsub.s32 0, %v401
    %v403 = vrot.slane %v399, %v402
    %v404 = vmul.f32 %v395, %v403
    %v405 = vmul.f32 %v396, %v403
    %v406 = vmul.f32 %v397, %v403
    %v407 = vmul.f32 %v398, %v403
    %v408 = vld [vmem:[%s1 + $0x1] sm:$0x1]
    %v409 = vlaneseq
    %v410 = vshrl.u32 %v409, 7
    %v411 = vsub.s32 0, %v410
    %v412 = vrot.slane %v408, %v411
    %v413 = vadd.f32 %v404, %v412
    %v414 = vadd.f32 %v405, %v412
    %v415 = vadd.f32 %v406, %v412
    %v416 = vadd.f32 %v407, %v412
    %421 = vrot.lane.b32.xlu0 %v413, 64
    %v422 = vpop.permute.xlu0 %421
    %423 = vrot.lane.b32.xlu0 %v414, 64
    %v424 = vpop.permute.xlu0 %423
    %425 = vrot.lane.b32.xlu0 %v415, 64
    %v426 = vpop.permute.xlu0 %425
    %427 = vrot.lane.b32.xlu0 %v416, 64
    %v428 = vpop.permute.xlu0 %427
    %s433 = scalar_lea.vmem [#allocation2], 320
    %434 = vst.msk [vmem:[%s433] sm:$0xff] %vm34, %v422
    %435 = vst.msk [vmem:[%s433 + $0x8] sm:$0xff] %vm34, %v424
    %436 = vst.msk [vmem:[%s433 + $0x10] sm:$0xff] %vm34, %v426
    %437 = vst.msk [vmem:[%s433 + $0x18] sm:$0xff] %vm34, %v428
    %v438 = vld [vmem:[%s324] sm:$0xff]
    %v439 = vld [vmem:[%s324 + $0x10] sm:$0xff]
    %v440 = vld [vmem:[%s324 + $0x20] sm:$0xff]
    %v441 = vld [vmem:[%s324 + $0x30] sm:$0xff]
    %v442 = vld [vmem:[%s1] sm:$0x1]
    %v443 = vlaneseq
    %v444 = vshrl.u32 %v443, 7
    %v445 = vsub.s32 0, %v444
    %v446 = vrot.slane %v442, %v445
    %v447 = vmul.f32 %v438, %v446
    %v448 = vmul.f32 %v439, %v446
    %v449 = vmul.f32 %v440, %v446
    %v450 = vmul.f32 %v441, %v446
    %v451 = vld [vmem:[%s1 + $0x1] sm:$0x1]
    %v452 = vlaneseq
    %v453 = vshrl.u32 %v452, 7
    %v454 = vsub.s32 0, %v453
    %v455 = vrot.slane %v451, %v454
    %v456 = vadd.f32 %v447, %v455
    %v457 = vadd.f32 %v448, %v455
    %v458 = vadd.f32 %v449, %v455
    %v459 = vadd.f32 %v450, %v455
    %464 = vrot.lane.b32.xlu0 %v456, 32
    %v465 = vpop.permute.xlu0 %464
    %466 = vrot.lane.b32.xlu0 %v457, 32
    %v467 = vpop.permute.xlu0 %466
    %468 = vrot.lane.b32.xlu0 %v458, 32
    %v469 = vpop.permute.xlu0 %468
    %470 = vrot.lane.b32.xlu0 %v459, 32
    %v471 = vpop.permute.xlu0 %470
    %s476 = scalar_lea.vmem [#allocation2], 352
    %477 = vst.msk [vmem:[%s476] sm:$0xff] %vm34, %v465
    %478 = vst.msk [vmem:[%s476 + $0x8] sm:$0xff] %vm34, %v467
    %479 = vst.msk [vmem:[%s476 + $0x10] sm:$0xff] %vm34, %v469
    %480 = vst.msk [vmem:[%s476 + $0x18] sm:$0xff] %vm34, %v471
    %v481 = vld [vmem:[%s324 + $0x8] sm:$0xff]
    %v482 = vld [vmem:[%s324 + $0x18] sm:$0xff]
    %v483 = vld [vmem:[%s324 + $0x28] sm:$0xff]
    %v484 = vld [vmem:[%s324 + $0x38] sm:$0xff]
    %v485 = vld [vmem:[%s1 + $0x2] sm:$0x1]
    %v486 = vlaneseq
    %v487 = vshrl.u32 %v486, 7
    %v488 = vsub.s32 0, %v487
    %v489 = vrot.slane %v485, %v488
    %v490 = vmul.f32 %v481, %v489
    %v491 = vmul.f32 %v482, %v489
    %v492 = vmul.f32 %v483, %v489
    %v493 = vmul.f32 %v484, %v489
    %v494 = vld [vmem:[%s1 + $0x3] sm:$0x1]
    %v495 = vlaneseq
    %v496 = vshrl.u32 %v495, 7
    %v497 = vsub.s32 0, %v496
    %v498 = vrot.slane %v494, %v497
    %v499 = vadd.f32 %v490, %v498
    %v500 = vadd.f32 %v491, %v498
    %v501 = vadd.f32 %v492, %v498
    %v502 = vadd.f32 %v493, %v498
    %s503 = scalar_lea.vmem [#allocation2], 384
    %504 = vst.msk [vmem:[%s503] sm:$0xff] %vm34, %v499
    %505 = vst.msk [vmem:[%s503 + $0x8] sm:$0xff] %vm34, %v500
    %506 = vst.msk [vmem:[%s503 + $0x10] sm:$0xff] %vm34, %v501
    %507 = vst.msk [vmem:[%s503 + $0x18] sm:$0xff] %vm34, %v502
    %v508 = vld [vmem:[%s324 + $0x8] sm:$0xff]
    %v509 = vld [vmem:[%s324 + $0x18] sm:$0xff]
    %v510 = vld [vmem:[%s324 + $0x28] sm:$0xff]
    %v511 = vld [vmem:[%s324 + $0x38] sm:$0xff]
    %v512 = vld [vmem:[%s1 + $0x2] sm:$0x1]
    %v513 = vlaneseq
    %v514 = vshrl.u32 %v513, 7
    %v515 = vsub.s32 0, %v514
    %v516 = vrot.slane %v512, %v515
    %v517 = vmul.f32 %v508, %v516
    %v518 = vmul.f32 %v509, %v516
    %v519 = vmul.f32 %v510, %v516
    %v520 = vmul.f32 %v511, %v516
    %v521 = vld [vmem:[%s1 + $0x3] sm:$0x1]
    %v522 = vlaneseq
    %v523 = vshrl.u32 %v522, 7
    %v524 = vsub.s32 0, %v523
    %v525 = vrot.slane %v521, %v524
    %v526 = vadd.f32 %v517, %v525
    %v527 = vadd.f32 %v518, %v525
    %v528 = vadd.f32 %v519, %v525
    %v529 = vadd.f32 %v520, %v525
    %534 = vrot.lane.b32.xlu0 %v526, 96
    %v535 = vpop.permute.xlu0 %534
    %536 = vrot.lane.b32.xlu0 %v527, 96
    %v537 = vpop.permute.xlu0 %536
    %538 = vrot.lane.b32.xlu0 %v528, 96
    %v539 = vpop.permute.xlu0 %538
    %540 = vrot.lane.b32.xlu0 %v529, 96
    %v541 = vpop.permute.xlu0 %540
    %s546 = scalar_lea.vmem [#allocation2], 416
    %547 = vst.msk [vmem:[%s546] sm:$0xff] %vm34, %v535
    %548 = vst.msk [vmem:[%s546 + $0x8] sm:$0xff] %vm34, %v537
    %549 = vst.msk [vmem:[%s546 + $0x10] sm:$0xff] %vm34, %v539
    %550 = vst.msk [vmem:[%s546 + $0x18] sm:$0xff] %vm34, %v541
    %v551 = vld [vmem:[%s324 + $0x8] sm:$0xff]
    %v552 = vld [vmem:[%s324 + $0x18] sm:$0xff]
    %v553 = vld [vmem:[%s324 + $0x28] sm:$0xff]
    %v554 = vld [vmem:[%s324 + $0x38] sm:$0xff]
    %v555 = vld [vmem:[%s1 + $0x2] sm:$0x1]
    %v556 = vlaneseq
    %v557 = vshrl.u32 %v556, 7
    %v558 = vsub.s32 0, %v557
    %v559 = vrot.slane %v555, %v558
    %v560 = vmul.f32 %v551, %v559
    %v561 = vmul.f32 %v552, %v559
    %v562 = vmul.f32 %v553, %v559
    %v563 = vmul.f32 %v554, %v559
    %v564 = vld [vmem:[%s1 + $0x3] sm:$0x1]
    %v565 = vlaneseq
    %v566 = vshrl.u32 %v565, 7
    %v567 = vsub.s32 0, %v566
    %v568 = vrot.slane %v564, %v567
    %v569 = vadd.f32 %v560, %v568
    %v570 = vadd.f32 %v561, %v568
    %v571 = vadd.f32 %v562, %v568
    %v572 = vadd.f32 %v563, %v568
    %577 = vrot.lane.b32.xlu0 %v569, 64
    %v578 = vpop.permute.xlu0 %577
    %579 = vrot.lane.b32.xlu0 %v570, 64
    %v580 = vpop.permute.xlu0 %579
    %581 = vrot.lane.b32.xlu0 %v571, 64
    %v582 = vpop.permute.xlu0 %581
    %583 = vrot.lane.b32.xlu0 %v572, 64
    %v584 = vpop.permute.xlu0 %583
    %s589 = scalar_lea.vmem [#allocation2], 448
    %590 = vst.msk [vmem:[%s589] sm:$0xff] %vm34, %v578
    %591 = vst.msk [vmem:[%s589 + $0x8] sm:$0xff] %vm34, %v580
    %592 = vst.msk [vmem:[%s589 + $0x10] sm:$0xff] %vm34, %v582
    %593 = vst.msk [vmem:[%s589 + $0x18] sm:$0xff] %vm34, %v584
    %v594 = vld [vmem:[%s324 + $0x8] sm:$0xff]
    %v595 = vld [vmem:[%s324 + $0x18] sm:$0xff]
    %v596 = vld [vmem:[%s324 + $0x28] sm:$0xff]
    %v597 = vld [vmem:[%s324 + $0x38] sm:$0xff]
    %v598 = vld [vmem:[%s1 + $0x2] sm:$0x1]
    %v599 = vlaneseq
    %v600 = vshrl.u32 %v599, 7
    %v601 = vsub.s32 0, %v600
    %v602 = vrot.slane %v598, %v601
    %v603 = vmul.f32 %v594, %v602
    %v604 = vmul.f32 %v595, %v602
    %v605 = vmul.f32 %v596, %v602
    %v606 = vmul.f32 %v597, %v602
    %v607 = vld [vmem:[%s1 + $0x3] sm:$0x1]
    %v608 = vlaneseq
    %v609 = vshrl.u32 %v608, 7
    %v610 = vsub.s32 0, %v609
    %v611 = vrot.slane %v607, %v610
    %v612 = vadd.f32 %v603, %v611
    %v613 = vadd.f32 %v604, %v611
    %v614 = vadd.f32 %v605, %v611
    %v615 = vadd.f32 %v606, %v611
    %620 = vrot.lane.b32.xlu0 %v612, 32
    %v621 = vpop.permute.xlu0 %620
    %622 = vrot.lane.b32.xlu0 %v613, 32
    %v623 = vpop.permute.xlu0 %622
    %624 = vrot.lane.b32.xlu0 %v614, 32
    %v625 = vpop.permute.xlu0 %624
    %626 = vrot.lane.b32.xlu0 %v615, 32
    %v627 = vpop.permute.xlu0 %626
    %s632 = scalar_lea.vmem [#allocation2], 480
    %633 = vst.msk [vmem:[%s632] sm:$0xff] %vm34, %v621
    %634 = vst.msk [vmem:[%s632 + $0x8] sm:$0xff] %vm34, %v623
    %635 = vst.msk [vmem:[%s632 + $0x10] sm:$0xff] %vm34, %v625
    %636 = vst.msk [vmem:[%s632 + $0x18] sm:$0xff] %vm34, %v627
    // Predicated region
    $region10: #{upsample_block_forward.3} parent=1 // pred_check
      _
    $region11: #{upsample_block_forward.3} parent=1 // pred_check_branch
      %638 = sbr.rel (0) target = $region13
    $region12: #{upsample_block_forward.3} parent=1 // pred_region
      %s640 = ssub.s32 8192, 8192
      %641 = vsyncadd [#allocation3], %s640
      %s642 = sshll.u32 [#allocation2], 4
      %s643 = int_to_ptr.vmem [resolvable:$true] %s642
      %648 = dma.vmem_to_hbm [thread:$0]  %s643, 8192, %s2, [#allocation3], 128, 128, 8
    $region13: #{upsample_block_forward.3} parent=1 // pred_fallthru
      _
    // Predicated region
    $region14: #{upsample_block_forward.3} parent=1 // pred_check
      _
    $region15: #{upsample_block_forward.3} parent=1 // pred_check_branch
      %650 = sbr.rel (0) target = $region17
    $region16: #{upsample_block_forward.3} parent=1 // pred_region
      %651 = dma.done [#allocation3], 8192
    $region17: #{upsample_block_forward.3} parent=1 // pred_fallthru
      _
    %652 = vsyncpa [#allocation3], 1

// kernel: upsample_block_forward.2
$region0: #{upsample_block_forward.2}
  #allocation0 [shape = 'u32[]', space=smem, size = 0x4, offset = 0x4, fixed_abs, tag = 'smem constant byte address 0x4 - core index']
  #allocation1 [shape = 'u32[144,128]{1,0:T(1,128)}', space=vmem, size = 0x12000, scoped, tag = 'internal scratch']
  #allocation2 [shape = 'f32[34,128]{1,0:T(8,128)}', space=vmem, size = 0x5000, scoped, tag = 'scratch operand']
  %s0 = inlined_call_operand.vmem [shape: f32[2,16,64], index: 0, kind: input, shape index: {}]
  %s1 = inlined_call_operand.vmem [shape: f32[34,16], index: 1, kind: input, shape index: {}]
  %s2 = inlined_call_operand.vmem [shape: f32[64,128], index: 2, kind: input, shape index: {}]
  %s3 = inlined_call_operand.vmem [shape: f32[3,128,256], index: 3, kind: input, shape index: {}]
  %s4 = inlined_call_operand.vmem [shape: f32[256,8], index: 4, kind: input, shape index: {}]
  %s5 = inlined_call_operand.vmem [shape: f32[2,32,256], index: 5, kind: output, shape index: {0}]
  %s6 = inlined_call_operand.vmem [shape: f32[2,2,8], index: 6, kind: output, shape index: {1}]
  %7 = xla_tuple %s5, %s6
  %s8 = sld [smem:[#allocation0]]
  $region38: #{upsample_block_forward.2} parent=0
    _
  %s10 = ssub.s32 1, %s8
  %s11 = scalar_select 0, %s10, %s8
  // Predicated region
  $region2: #{upsample_block_forward.2} parent=0 // pred_check
    _
  $region3: #{upsample_block_forward.2} parent=0 // pred_check_branch
    %13 = sbr.rel (0) target = $region5
  $region4: #{upsample_block_forward.2} parent=0 // pred_region
    _
  $region5: #{upsample_block_forward.2} parent=0 // pred_fallthru
    _
  // Predicated region
  $region6: #{upsample_block_forward.2} parent=0 // pred_check
    _
  $region7: #{upsample_block_forward.2} parent=0 // pred_check_branch
    %15 = sbr.rel (0) target = $region9
  $region8: #{upsample_block_forward.2} parent=0 // pred_region
    _
  $region9: #{upsample_block_forward.2} parent=0 // pred_fallthru
    _
  // Predicated region
  $region10: #{upsample_block_forward.2} parent=0 // pred_check
    _
  $region11: #{upsample_block_forward.2} parent=0 // pred_check_branch
    %17 = sbr.rel (0) target = $region13
  $region12: #{upsample_block_forward.2} parent=0 // pred_region
    _
  $region13: #{upsample_block_forward.2} parent=0 // pred_fallthru
    _
  // Predicated region
  $region14: #{upsample_block_forward.2} parent=0 // pred_check
    _
  $region15: #{upsample_block_forward.2} parent=0 // pred_check_branch
    %19 = sbr.rel (0) target = $region17
  $region16: #{upsample_block_forward.2} parent=0 // pred_region
    _
  $region17: #{upsample_block_forward.2} parent=0 // pred_fallthru
    _
  // Predicated region
  $region18: #{upsample_block_forward.2} parent=0 // pred_check
    _
  $region19: #{upsample_block_forward.2} parent=0 // pred_check_branch
    %21 = sbr.rel (0) target = $region21
  $region20: #{upsample_block_forward.2} parent=0 // pred_region
    _
  $region21: #{upsample_block_forward.2} parent=0 // pred_fallthru
    _
  %v22 = vld [vmem:[%s0] sm:$0xff]
  %v23 = vld [vmem:[%s0 + $0x8] sm:$0xff]
  %v24 = vld [vmem:[%s2] sm:$0xff]
  %v25 = vld [vmem:[%s2 + $0x8] sm:$0xff]
  %v26 = vld [vmem:[%s2 + $0x10] sm:$0xff]
  %v27 = vld [vmem:[%s2 + $0x18] sm:$0xff]
  %v28 = vld [vmem:[%s2 + $0x20] sm:$0xff]
  %v29 = vld [vmem:[%s2 + $0x28] sm:$0xff]
  %v30 = vld [vmem:[%s2 + $0x30] sm:$0xff]
  %v31 = vld [vmem:[%s2 + $0x38] sm:$0xff]
  %vm32 = vcmask 523264
  %v34 = vsel %vm32, %v22, 0
  %v37 = vsel %vm32, %v23, 0
  %39 = vmatprep.subr.mxu0 0.0
  %40 = vmatpush1.msra.mxu0 %v24
  %41 = vmatprep.subr.mxu0 0.0
  %42 = vmatpush1.msra.mxu0 %v25
  %43 = vmatprep.subr.mxu0 0.0
  %44 = vmatpush1.msra.mxu0 %v26
  %45 = vmatprep.subr.mxu0 0.0
  %46 = vmatpush1.msra.mxu0 %v27
  %47 = vmatprep.subr.mxu0 0.0
  %48 = vmatpush1.msra.mxu0 %v28
  %49 = vmatprep.subr.mxu0 0.0
  %50 = vmatpush1.msra.mxu0 %v29
  %51 = vmatprep.subr.mxu0 0.0
  %52 = vmatpush1.msra.mxu0 %v30
  %53 = vmatprep.subr.mxu0 0.0
  %54 = vmatpush1.msra.mxu0 %v31
  %55 = vmatprep.subr.mxu0 0.0
  %56 = vmatpush1.msra.mxu0 0.0
  %57 = vmatprep.subr.mxu0 0.0
  %58 = vmatpush1.msra.mxu0 0.0
  %59 = vmatprep.subr.mxu0 0.0
  %60 = vmatpush1.msra.mxu0 0.0
  %61 = vmatprep.subr.mxu0 0.0
  %62 = vmatpush1.msra.mxu0 0.0
  %63 = vmatprep.subr.mxu0 0.0
  %64 = vmatpush1.msra.mxu0 0.0
  %65 = vmatprep.subr.mxu0 0.0
  %66 = vmatpush1.msra.mxu0 0.0
  %67 = vmatprep.subr.mxu0 0.0
  %68 = vmatpush1.msra.mxu0 0.0
  %69 = vmatprep.subr.mxu0 0.0
  %70 = vmatpush1.msra.mxu0 0.0
  %71 = vmatprep.subr.mxu0 0.0
  %72 = vmatpush1.msra.mxu0 0.0
  %73 = vmatprep.subr.mxu0 0.0
  %74 = vmatpush1.msra.mxu0 0.0
  %75 = vmatprep.subr.mxu0 0.0
  %76 = vmatpush1.msra.mxu0 0.0
  %77 = vmatprep.subr.mxu0 0.0
  %78 = vmatpush1.msra.mxu0 0.0
  %79 = vmatprep.subr.mxu0 0.0
  %80 = vmatpush1.msra.mxu0 0.0
  %81 = vmatprep.subr.mxu0 0.0
  %82 = vmatpush1.msra.mxu0 0.0
  %83 = vmatprep.subr.mxu0 0.0
  %84 = vmatpush1.msra.mxu0 0.0
  %85 = vmatprep.subr.mxu0 0.0
  %86 = vmatpush1.msra.mxu0 0.0
  %87 = vmatprep.subr.mxu0 0.0
  %88 = vmatpush1.msra.mxu0 0.0
  %89 = vmatprep.subr.mxu0 0.0
  %90 = vmatpush1.msra.mxu0 0.0
  %91 = vmatprep.subr.mxu0 0.0
  %92 = vmatpush1.msra.mxu0 0.0
  %93 = vmatprep.subr.mxu0 0.0
  %94 = vmatpush1.msra.mxu0 0.0
  %95 = vmatprep.subr.mxu0 0.0
  %96 = vmatpush1.msra.mxu0 0.0
  %97 = vmatprep.subr.mxu0 0.0
  %98 = vmatpush1.msra.mxu0 0.0
  %99 = vmatprep.subr.mxu0 0.0
  %100 = vmatpush1.msra.mxu0 0.0
  %101 = vmatprep.subr.mxu0 0.0
  %102 = vmatpush1.msra.mxu0 0.0
  %103 = vmatprep.mubr.f32.mxu0 0.0
  %104 = vmatmul.mubr.f32.gmra.mrb[0].mxu0 %v34
  %v105 = vpop.f32.mrb[0].mxu0
  %v106 = vadd.f32 0.0, %v105
  %v107 = vpop.f32.mrb[0].mxu0
  %108 = vmatprep.mubr.f32.mxu0 0.0
  %109 = vmatmul.mubr.f32.gmra.mrb[0].mxu0 %v37
  %v110 = vpop.f32.mrb[0].mxu0
  %v111 = vadd.f32 0.0, %v110
  %v112 = vpop.f32.mrb[0].mxu0
  %113 = vdwg.mxu0
  %v114 = vld [vmem:[%s1] sm:$0xff]
  %v115 = vld [vmem:[%s1 + $0x8] sm:$0xff]
  %v116 = vld [vmem:[%s1 + $0x10] sm:$0xff]
  %v117 = vld [vmem:[%s1 + $0x18] sm:$0xff]
  %v118 = vld [vmem:[%s1 + $0x20] sm:$0x3]
  %vm119 = vcmask 130048
  %v121 = vsel %vm119, %v114, 0
  %v124 = vsel %vm119, %v115, 0
  %v127 = vsel %vm119, %v116, 0
  %v130 = vsel %vm119, %v117, 0
  %v133 = vsel %vm119, %v118, 0
  %135 = vmatprep.subr.mxu0 0.0
  %136 = vmatpush1.msra.mxu0 %v106
  %137 = vmatprep.subr.mxu0 0.0
  %138 = vmatpush1.msra.mxu0 %v111
  %139 = vmatprep.subr.mxu0 0.0
  %140 = vmatpush1.msra.mxu0 0.0
  %141 = vmatprep.subr.mxu0 0.0
  %142 = vmatpush1.msra.mxu0 0.0
  %143 = vmatprep.subr.mxu0 0.0
  %144 = vmatpush1.msra.mxu0 0.0
  %145 = vmatprep.subr.mxu0 0.0
  %146 = vmatpush1.msra.mxu0 0.0
  %147 = vmatprep.subr.mxu0 0.0
  %148 = vmatpush1.msra.mxu0 0.0
  %149 = vmatprep.subr.mxu0 0.0
  %150 = vmatpush1.msra.mxu0 0.0
  %151 = vmatprep.subr.mxu0 0.0
  %152 = vmatpush1.msra.mxu0 0.0
  %153 = vmatprep.subr.mxu0 0.0
  %154 = vmatpush1.msra.mxu0 0.0
  %155 = vmatprep.subr.mxu0 0.0
  %156 = vmatpush1.msra.mxu0 0.0
  %157 = vmatprep.subr.mxu0 0.0
  %158 = vmatpush1.msra.mxu0 0.0
  %159 = vmatprep.subr.mxu0 0.0
  %160 = vmatpush1.msra.mxu0 0.0
  %161 = vmatprep.subr.mxu0 0.0
  %162 = vmatpush1.msra.mxu0 0.0
  %163 = vmatprep.subr.mxu0 0.0
  %164 = vmatpush1.msra.mxu0 0.0
  %165 = vmatprep.subr.mxu0 0.0
  %166 = vmatpush1.msra.mxu0 0.0
  %167 = vmatprep.subr.mxu0 0.0
  %168 = vmatpush1.msra.mxu0 0.0
  %169 = vmatprep.subr.mxu0 0.0
  %170 = vmatpush1.msra.mxu0 0.0
  %171 = vmatprep.subr.mxu0 0.0
  %172 = vmatpush1.msra.mxu0 0.0
  %173 = vmatprep.subr.mxu0 0.0
  %174 = vmatpush1.msra.mxu0 0.0
  %175 = vmatprep.subr.mxu0 0.0
  %176 = vmatpush1.msra.mxu0 0.0
  %177 = vmatprep.subr.mxu0 0.0
  %178 = vmatpush1.msra.mxu0 0.0
  %179 = vmatprep.subr.mxu0 0.0
  %180 = vmatpush1.msra.mxu0 0.0
  %181 = vmatprep.subr.mxu0 0.0
  %182 = vmatpush1.msra.mxu0 0.0
  %183 = vmatprep.subr.mxu0 0.0
  %184 = vmatpush1.msra.mxu0 0.0
  %185 = vmatprep.subr.mxu0 0.0
  %186 = vmatpush1.msra.mxu0 0.0
  %187 = vmatprep.subr.mxu0 0.0
  %188 = vmatpush1.msra.mxu0 0.0
  %189 = vmatprep.subr.mxu0 0.0
  %190 = vmatpush1.msra.mxu0 0.0
  %191 = vmatprep.subr.mxu0 0.0
  %192 = vmatpush1.msra.mxu0 0.0
  %193 = vmatprep.subr.mxu0 0.0
  %194 = vmatpush1.msra.mxu0 0.0
  %195 = vmatprep.subr.mxu0 0.0
  %196 = vmatpush1.msra.mxu0 0.0
  %197 = vmatprep.subr.mxu0 0.0
  %198 = vmatpush1.msra.mxu0 0.0
  %199 = vmatprep.mubr.f32.mxu0 0.0
  %200 = vmatmul.mubr.f32.gmra.mrb[0].mxu0 %v121
  %v201 = vpop.f32.mrb[0].mxu0
  %v202 = vadd.f32 0.0, %v201
  %v203 = vpop.f32.mrb[0].mxu0
  %204 = vmatprep.mubr.f32.mxu0 0.0
  %205 = vmatmul.mubr.f32.gmra.mrb[0].mxu0 %v124
  %v206 = vpop.f32.mrb[0].mxu0
  %v207 = vadd.f32 0.0, %v206
  %v208 = vpop.f32.mrb[0].mxu0
  %209 = vmatprep.mubr.f32.mxu0 0.0
  %210 = vmatmul.mubr.f32.gmra.mrb[0].mxu0 %v127
  %v211 = vpop.f32.mrb[0].mxu0
  %v212 = vadd.f32 0.0, %v211
  %v213 = vpop.f32.mrb[0].mxu0
  %214 = vmatprep.mubr.f32.mxu0 0.0
  %215 = vmatmul.mubr.f32.gmra.mrb[0].mxu0 %v130
  %v216 = vpop.f32.mrb[0].mxu0
  %v217 = vadd.f32 0.0, %v216
  %v218 = vpop.f32.mrb[0].mxu0
  %219 = vmatprep.mubr.f32.mxu0 0.0
  %220 = vmatmul.mubr.f32.gmra.mrb[0].mxu0 %v133
  %v221 = vpop.f32.mrb[0].mxu0
  %v222 = vadd.f32 0.0, %v221
  %v223 = vpop.f32.mrb[0].mxu0
  %224 = vdwg.mxu0
  %225 = vst [vmem:[#allocation2] sm:$0xff] %v202
  %226 = vst [vmem:[#allocation2 + $0x8] sm:$0xff] %v207
  %227 = vst [vmem:[#allocation2 + $0x10] sm:$0xff] %v212
  %228 = vst [vmem:[#allocation2 + $0x18] sm:$0xff] %v217
  %229 = vst [vmem:[#allocation2 + $0x20] sm:$0x3] %v222
  %v230 = vld [vmem:[#allocation2] sm:$0xff]
  %v231 = vld [vmem:[#allocation2 + $0x8] sm:$0xff]
  %v232 = vld [vmem:[#allocation2 + $0x10] sm:$0xff]
  %v233 = vld [vmem:[#allocation2 + $0x18] sm:$0xff]
  %v234 = vld [vmem:[%s3] sm:$0xff]
  %v235 = vld [vmem:[%s3 + $0x8] sm:$0xff]
  %v236 = vld [vmem:[%s3 + $0x10] sm:$0xff]
  %v237 = vld [vmem:[%s3 + $0x18] sm:$0xff]
  %v238 = vld [vmem:[%s3 + $0x20] sm:$0xff]
  %v239 = vld [vmem:[%s3 + $0x28] sm:$0xff]
  %v240 = vld [vmem:[%s3 + $0x30] sm:$0xff]
  %v241 = vld [vmem:[%s3 + $0x38] sm:$0xff]
  %v242 = vld [vmem:[%s3 + $0x40] sm:$0xff]
  %v243 = vld [vmem:[%s3 + $0x48] sm:$0xff]
  %v244 = vld [vmem:[%s3 + $0x50] sm:$0xff]
  %v245 = vld [vmem:[%s3 + $0x58] sm:$0xff]
  %v246 = vld [vmem:[%s3 + $0x60] sm:$0xff]
  %v247 = vld [vmem:[%s3 + $0x68] sm:$0xff]
  %v248 = vld [vmem:[%s3 + $0x70] sm:$0xff]
  %v249 = vld [vmem:[%s3 + $0x78] sm:$0xff]
  %v250 = vld [vmem:[%s3 + $0x80] sm:$0xff]
  %v251 = vld [vmem:[%s3 + $0x88] sm:$0xff]
  %v252 = vld [vmem:[%s3 + $0x90] sm:$0xff]
  %v253 = vld [vmem:[%s3 + $0x98] sm:$0xff]
  %v254 = vld [vmem:[%s3 + $0xa0] sm:$0xff]
  %v255 = vld [vmem:[%s3 + $0xa8] sm:$0xff]
  %v256 = vld [vmem:[%s3 + $0xb0] sm:$0xff]
  %v257 = vld [vmem:[%s3 + $0xb8] sm:$0xff]
  %v258 = vld [vmem:[%s3 + $0xc0] sm:$0xff]
  %v259 = vld [vmem:[%s3 + $0xc8] sm:$0xff]
  %v260 = vld [vmem:[%s3 + $0xd0] sm:$0xff]
  %v261 = vld [vmem:[%s3 + $0xd8] sm:$0xff]
  %v262 = vld [vmem:[%s3 + $0xe0] sm:$0xff]
  %v263 = vld [vmem:[%s3 + $0xe8] sm:$0xff]
  %v264 = vld [vmem:[%s3 + $0xf0] sm:$0xff]
  %v265 = vld [vmem:[%s3 + $0xf8] sm:$0xff]
  %v266 = vld [vmem:[#allocation2 + $0x1] sm:$0xff]
  %v267 = vld [vmem:[#allocation2 + $0x9] sm:$0xff]
  %v268 = vld [vmem:[#allocation2 + $0x11] sm:$0xff]
  %v269 = vld [vmem:[#allocation2 + $0x19] sm:$0xff]
  %s270 = scalar_lea.vmem %s3, 256
  %v271 = vld [vmem:[%s270] sm:$0xff]
  %v272 = vld [vmem:[%s270 + $0x8] sm:$0xff]
  %v273 = vld [vmem:[%s270 + $0x10] sm:$0xff]
  %v274 = vld [vmem:[%s270 + $0x18] sm:$0xff]
  %v275 = vld [vmem:[%s270 + $0x20] sm:$0xff]
  %v276 = vld [vmem:[%s270 + $0x28] sm:$0xff]
  %v277 = vld [vmem:[%s270 + $0x30] sm:$0xff]
  %v278 = vld [vmem:[%s270 + $0x38] sm:$0xff]
  %v279 = vld [vmem:[%s270 + $0x40] sm:$0xff]
  %v280 = vld [vmem:[%s270 + $0x48] sm:$0xff]
  %v281 = vld [vmem:[%s270 + $0x50] sm:$0xff]
  %v282 = vld [vmem:[%s270 + $0x58] sm:$0xff]
  %v283 = vld [vmem:[%s270 + $0x60] sm:$0xff]
  %v284 = vld [vmem:[%s270 + $0x68] sm:$0xff]
  %v285 = vld [vmem:[%s270 + $0x70] sm:$0xff]
  %v286 = vld [vmem:[%s270 + $0x78] sm:$0xff]
  %v287 = vld [vmem:[%s270 + $0x80] sm:$0xff]
  %v288 = vld [vmem:[%s270 + $0x88] sm:$0xff]
  %v289 = vld [vmem:[%s270 + $0x90] sm:$0xff]
  %v290 = vld [vmem:[%s270 + $0x98] sm:$0xff]
  %v291 = vld [vmem:[%s270 + $0xa0] sm:$0xff]
  %v292 = vld [vmem:[%s270 + $0xa8] sm:$0xff]
  %v293 = vld [vmem:[%s270 + $0xb0] sm:$0xff]
  %v294 = vld [vmem:[%s270 + $0xb8] sm:$0xff]
  %v295 = vld [vmem:[%s270 + $0xc0] sm:$0xff]
  %v296 = vld [vmem:[%s270 + $0xc8] sm:$0xff]
  %v297 = vld [vmem:[%s270 + $0xd0] sm:$0xff]
  %v298 = vld [vmem:[%s270 + $0xd8] sm:$0xff]
  %v299 = vld [vmem:[%s270 + $0xe0] sm:$0xff]
  %v300 = vld [vmem:[%s270 + $0xe8] sm:$0xff]
  %v301 = vld [vmem:[%s270 + $0xf0] sm:$0xff]
  %v302 = vld [vmem:[%s270 + $0xf8] sm:$0xff]
  %303 = vmatprep.subr.mxu0 %v272
  %304 = vmatpush1.msra.mxu0 %v271
  %305 = vmatprep.subr.mxu0 %v274
  %306 = vmatpush1.msra.mxu0 %v273
  %307 = vmatprep.subr.mxu0 %v276
  %308 = vmatpush1.msra.mxu0 %v275
  %309 = vmatprep.subr.mxu0 %v278
  %310 = vmatpush1.msra.mxu0 %v277
  %311 = vmatprep.subr.mxu0 %v280
  %312 = vmatpush1.msra.mxu0 %v279
  %313 = vmatprep.subr.mxu0 %v282
  %314 = vmatpush1.msra.mxu0 %v281
  %315 = vmatprep.subr.mxu0 %v284
  %316 = vmatpush1.msra.mxu0 %v283
  %317 = vmatprep.subr.mxu0 %v286
  %318 = vmatpush1.msra.mxu0 %v285
  %319 = vmatprep.subr.mxu0 %v288
  %320 = vmatpush1.msra.mxu0 %v287
  %321 = vmatprep.subr.mxu0 %v290
  %322 = vmatpush1.msra.mxu0 %v289
  %323 = vmatprep.subr.mxu0 %v292
  %324 = vmatpush1.msra.mxu0 %v291
  %325 = vmatprep.subr.mxu0 %v294
  %326 = vmatpush1.msra.mxu0 %v293
  %327 = vmatprep.subr.mxu0 %v296
  %328 = vmatpush1.msra.mxu0 %v295
  %329 = vmatprep.subr.mxu0 %v298
  %330 = vmatpush1.msra.mxu0 %v297
  %331 = vmatprep.subr.mxu0 %v300
  %332 = vmatpush1.msra.mxu0 %v299
  %333 = vmatprep.subr.mxu0 %v302
  %334 = vmatpush1.msra.mxu0 %v301
  %335 = vmatprep.subr.mxu0 0.0
  %336 = vmatpush1.msra.mxu0 0.0
  %337 = vmatprep.subr.mxu0 0.0
  %338 = vmatpush1.msra.mxu0 0.0
  %339 = vmatprep.subr.mxu0 0.0
  %340 = vmatpush1.msra.mxu0 0.0
  %341 = vmatprep.subr.mxu0 0.0
  %342 = vmatpush1.msra.mxu0 0.0
  %343 = vmatprep.subr.mxu0 0.0
  %344 = vmatpush1.msra.mxu0 0.0
  %345 = vmatprep.subr.mxu0 0.0
  %346 = vmatpush1.msra.mxu0 0.0
  %347 = vmatprep.subr.mxu0 0.0
  %348 = vmatpush1.msra.mxu0 0.0
  %349 = vmatprep.subr.mxu0 0.0
  %350 = vmatpush1.msra.mxu0 0.0
  %351 = vmatprep.subr.mxu0 0.0
  %352 = vmatpush1.msra.mxu0 0.0
  %353 = vmatprep.subr.mxu0 0.0
  %354 = vmatpush1.msra.mxu0 0.0
  %355 = vmatprep.subr.mxu0 0.0
  %356 = vmatpush1.msra.mxu0 0.0
  %357 = vmatprep.subr.mxu0 0.0
  %358 = vmatpush1.msra.mxu0 0.0
  %359 = vmatprep.subr.mxu0 0.0
  %360 = vmatpush1.msra.mxu0 0.0
  %361 = vmatprep.subr.mxu0 0.0
  %362 = vmatpush1.msra.mxu0 0.0
  %363 = vmatprep.subr.mxu0 0.0
  %364 = vmatpush1.msra.mxu0 0.0
  %365 = vmatprep.subr.mxu0 0.0
  %366 = vmatpush1.msra.mxu0 0.0
  %367 = vmatprep.mubr.f32.mxu0 0.0
  %368 = vmatmul.mubr.f32.gmra.mrb[0].mxu0 %v266
  %v369 = vpop.f32.mrb[0].mxu0
  %v370 = vadd.f32 0.0, %v369
  %v371 = vpop.f32.mrb[0].mxu0
  %v372 = vadd.f32 0.0, %v371
  %373 = vmatprep.mubr.f32.mxu0 0.0
  %374 = vmatmul.mubr.f32.gmra.mrb[0].mxu0 %v267
  %v375 = vpop.f32.mrb[0].mxu0
  %v376 = vadd.f32 0.0, %v375
  %v377 = vpop.f32.mrb[0].mxu0
  %v378 = vadd.f32 0.0, %v377
  %379 = vmatprep.mubr.f32.mxu0 0.0
  %380 = vmatmul.mubr.f32.gmra.mrb[0].mxu0 %v268
  %v381 = vpop.f32.mrb[0].mxu0
  %v382 = vadd.f32 0.0, %v381
  %v383 = vpop.f32.mrb[0].mxu0
  %v384 = vadd.f32 0.0, %v383
  %385 = vmatprep.mubr.f32.mxu0 0.0
  %386 = vmatmul.mubr.f32.gmra.mrb[0].mxu0 %v269
  %v387 = vpop.f32.mrb[0].mxu0
  %v388 = vadd.f32 0.0, %v387
  %v389 = vpop.f32.mrb[0].mxu0
  %v390 = vadd.f32 0.0, %v389
  %391 = vdwg.mxu0
  %392 = vmatprep.subr.mxu0 %v235
  %393 = vmatpush1.msra.mxu0 %v234
  %394 = vmatprep.subr.mxu0 %v237
  %395 = vmatpush1.msra.mxu0 %v236
  %396 = vmatprep.subr.mxu0 %v239
  %397 = vmatpush1.msra.mxu0 %v238
  %398 = vmatprep.subr.mxu0 %v241
  %399 = vmatpush1.msra.mxu0 %v240
  %400 = vmatprep.subr.mxu0 %v243
  %401 = vmatpush1.msra.mxu0 %v242
  %402 = vmatprep.subr.mxu0 %v245
  %403 = vmatpush1.msra.mxu0 %v244
  %404 = vmatprep.subr.mxu0 %v247
  %405 = vmatpush1.msra.mxu0 %v246
  %406 = vmatprep.subr.mxu0 %v249
  %407 = vmatpush1.msra.mxu0 %v248
  %408 = vmatprep.subr.mxu0 %v251
  %409 = vmatpush1.msra.mxu0 %v250
  %410 = vmatprep.subr.mxu0 %v253
  %411 = vmatpush1.msra.mxu0 %v252
  %412 = vmatprep.subr.mxu0 %v255
  %413 = vmatpush1.msra.mxu0 %v254
  %414 = vmatprep.subr.mxu0 %v257
  %415 = vmatpush1.msra.mxu0 %v256
  %416 = vmatprep.subr.mxu0 %v259
  %417 = vmatpush1.msra.mxu0 %v258
  %418 = vmatprep.subr.mxu0 %v261
  %419 = vmatpush1.msra.mxu0 %v260
  %420 = vmatprep.subr.mxu0 %v263
  %421 = vmatpush1.msra.mxu0 %v262
  %422 = vmatprep.subr.mxu0 %v265
  %423 = vmatpush1.msra.mxu0 %v264
  %424 = vmatprep.subr.mxu0 0.0
  %425 = vmatpush1.msra.mxu0 0.0
  %426 = vmatprep.subr.mxu0 0.0
  %427 = vmatpush1.msra.mxu0 0.0
  %428 = vmatprep.subr.mxu0 0.0
  %429 = vmatpush1.msra.mxu0 0.0
  %430 = vmatprep.subr.mxu0 0.0
  %431 = vmatpush1.msra.mxu0 0.0
  %432 = vmatprep.subr.mxu0 0.0
  %433 = vmatpush1.msra.mxu0 0.0
  %434 = vmatprep.subr.mxu0 0.0
  %435 = vmatpush1.msra.mxu0 0.0
  %436 = vmatprep.subr.mxu0 0.0
  %437 = vmatpush1.msra.mxu0 0.0
  %438 = vmatprep.subr.mxu0 0.0
  %439 = vmatpush1.msra.mxu0 0.0
  %440 = vmatprep.subr.mxu0 0.0
  %441 = vmatpush1.msra.mxu0 0.0
  %442 = vmatprep.subr.mxu0 0.0
  %443 = vmatpush1.msra.mxu0 0.0
  %444 = vmatprep.subr.mxu0 0.0
  %445 = vmatpush1.msra.mxu0 0.0
  %446 = vmatprep.subr.mxu0 0.0
  %447 = vmatpush1.msra.mxu0 0.0
  %448 = vmatprep.subr.mxu0 0.0
  %449 = vmatpush1.msra.mxu0 0.0
  %450 = vmatprep.subr.mxu0 0.0
  %451 = vmatpush1.msra.mxu0 0.0
  %452 = vmatprep.subr.mxu0 0.0
  %453 = vmatpush1.msra.mxu0 0.0
  %454 = vmatprep.subr.mxu0 0.0
  %455 = vmatpush1.msra.mxu0 0.0
  %456 = vmatprep.mubr.f32.mxu0 0.0
  %457 = vmatmul.mubr.f32.gmra.mrb[0].mxu0 %v230
  %v458 = vpop.f32.mrb[0].mxu0
  %v459 = vadd.f32 %v370, %v458
  %v460 = vpop.f32.mrb[0].mxu0
  %v461 = vadd.f32 %v372, %v460
  %462 = vmatprep.mubr.f32.mxu0 0.0
  %463 = vmatmul.mubr.f32.gmra.mrb[0].mxu0 %v231
  %v464 = vpop.f32.mrb[0].mxu0
  %v465 = vadd.f32 %v376, %v464
  %v466 = vpop.f32.mrb[0].mxu0
  %v467 = vadd.f32 %v378, %v466
  %468 = vmatprep.mubr.f32.mxu0 0.0
  %469 = vmatmul.mubr.f32.gmra.mrb[0].mxu0 %v232
  %v470 = vpop.f32.mrb[0].mxu0
  %v471 = vadd.f32 %v382, %v470
  %v472 = vpop.f32.mrb[0].mxu0
  %v473 = vadd.f32 %v384, %v472
  %474 = vmatprep.mubr.f32.mxu0 0.0
  %475 = vmatmul.mubr.f32.gmra.mrb[0].mxu0 %v233
  %v476 = vpop.f32.mrb[0].mxu0
  %v477 = vadd.f32 %v388, %v476
  %v478 = vpop.f32.mrb[0].mxu0
  %v479 = vadd.f32 %v390, %v478
  %480 = vdwg.mxu0
  %v481 = vld [vmem:[#allocation2 + $0x2] sm:$0xff]
  %v482 = vld [vmem:[#allocation2 + $0xa] sm:$0xff]
  %v483 = vld [vmem:[#allocation2 + $0x12] sm:$0xff]
  %v484 = vld [vmem:[#allocation2 + $0x1a] sm:$0xff]
  %s485 = scalar_lea.vmem %s3, 512
  %v486 = vld [vmem:[%s485] sm:$0xff]
  %v487 = vld [vmem:[%s485 + $0x8] sm:$0xff]
  %v488 = vld [vmem:[%s485 + $0x10] sm:$0xff]
  %v489 = vld [vmem:[%s485 + $0x18] sm:$0xff]
  %v490 = vld [vmem:[%s485 + $0x20] sm:$0xff]
  %v491 = vld [vmem:[%s485 + $0x28] sm:$0xff]
  %v492 = vld [vmem:[%s485 + $0x30] sm:$0xff]
  %v493 = vld [vmem:[%s485 + $0x38] sm:$0xff]
  %v494 = vld [vmem:[%s485 + $0x40] sm:$0xff]
  %v495 = vld [vmem:[%s485 + $0x48] sm:$0xff]
  %v496 = vld [vmem:[%s485 + $0x50] sm:$0xff]
  %v497 = vld [vmem:[%s485 + $0x58] sm:$0xff]
  %v498 = vld [vmem:[%s485 + $0x60] sm:$0xff]
  %v499 = vld [vmem:[%s485 + $0x68] sm:$0xff]
  %v500 = vld [vmem:[%s485 + $0x70] sm:$0xff]
  %v501 = vld [vmem:[%s485 + $0x78] sm:$0xff]
  %v502 = vld [vmem:[%s485 + $0x80] sm:$0xff]
  %v503 = vld [vmem:[%s485 + $0x88] sm:$0xff]
  %v504 = vld [vmem:[%s485 + $0x90] sm:$0xff]
  %v505 = vld [vmem:[%s485 + $0x98] sm:$0xff]
  %v506 = vld [vmem:[%s485 + $0xa0] sm:$0xff]
  %v507 = vld [vmem:[%s485 + $0xa8] sm:$0xff]
  %v508 = vld [vmem:[%s485 + $0xb0] sm:$0xff]
  %v509 = vld [vmem:[%s485 + $0xb8] sm:$0xff]
  %v510 = vld [vmem:[%s485 + $0xc0] sm:$0xff]
  %v511 = vld [vmem:[%s485 + $0xc8] sm:$0xff]
  %v512 = vld [vmem:[%s485 + $0xd0] sm:$0xff]
  %v513 = vld [vmem:[%s485 + $0xd8] sm:$0xff]
  %v514 = vld [vmem:[%s485 + $0xe0] sm:$0xff]
  %v515 = vld [vmem:[%s485 + $0xe8] sm:$0xff]
  %v516 = vld [vmem:[%s485 + $0xf0] sm:$0xff]
  %v517 = vld [vmem:[%s485 + $0xf8] sm:$0xff]
  %518 = vmatprep.subr.mxu0 %v487
  %519 = vmatpush1.msra.mxu0 %v486
  %520 = vmatprep.subr.mxu0 %v489
  %521 = vmatpush1.msra.mxu0 %v488
  %522 = vmatprep.subr.mxu0 %v491
  %523 = vmatpush1.msra.mxu0 %v490
  %524 = vmatprep.subr.mxu0 %v493
  %525 = vmatpush1.msra.mxu0 %v492
  %526 = vmatprep.subr.mxu0 %v495
  %527 = vmatpush1.msra.mxu0 %v494
  %528 = vmatprep.subr.mxu0 %v497
  %529 = vmatpush1.msra.mxu0 %v496
  %530 = vmatprep.subr.mxu0 %v499
  %531 = vmatpush1.msra.mxu0 %v498
  %532 = vmatprep.subr.mxu0 %v501
  %533 = vmatpush1.msra.mxu0 %v500
  %534 = vmatprep.subr.mxu0 %v503
  %535 = vmatpush1.msra.mxu0 %v502
  %536 = vmatprep.subr.mxu0 %v505
  %537 = vmatpush1.msra.mxu0 %v504
  %538 = vmatprep.subr.mxu0 %v507
  %539 = vmatpush1.msra.mxu0 %v506
  %540 = vmatprep.subr.mxu0 %v509
  %541 = vmatpush1.msra.mxu0 %v508
  %542 = vmatprep.subr.mxu0 %v511
  %543 = vmatpush1.msra.mxu0 %v510
  %544 = vmatprep.subr.mxu0 %v513
  %545 = vmatpush1.msra.mxu0 %v512
  %546 = vmatprep.subr.mxu0 %v515
  %547 = vmatpush1.msra.mxu0 %v514
  %548 = vmatprep.subr.mxu0 %v517
  %549 = vmatpush1.msra.mxu0 %v516
  %550 = vmatprep.subr.mxu0 0.0
  %551 = vmatpush1.msra.mxu0 0.0
  %552 = vmatprep.subr.mxu0 0.0
  %553 = vmatpush1.msra.mxu0 0.0
  %554 = vmatprep.subr.mxu0 0.0
  %555 = vmatpush1.msra.mxu0 0.0
  %556 = vmatprep.subr.mxu0 0.0
  %557 = vmatpush1.msra.mxu0 0.0
  %558 = vmatprep.subr.mxu0 0.0
  %559 = vmatpush1.msra.mxu0 0.0
  %560 = vmatprep.subr.mxu0 0.0
  %561 = vmatpush1.msra.mxu0 0.0
  %562 = vmatprep.subr.mxu0 0.0
  %563 = vmatpush1.msra.mxu0 0.0
  %564 = vmatprep.subr.mxu0 0.0
  %565 = vmatpush1.msra.mxu0 0.0
  %566 = vmatprep.subr.mxu0 0.0
  %567 = vmatpush1.msra.mxu0 0.0
  %568 = vmatprep.subr.mxu0 0.0
  %569 = vmatpush1.msra.mxu0 0.0
  %570 = vmatprep.subr.mxu0 0.0
  %571 = vmatpush1.msra.mxu0 0.0
  %572 = vmatprep.subr.mxu0 0.0
  %573 = vmatpush1.msra.mxu0 0.0
  %574 = vmatprep.subr.mxu0 0.0
  %575 = vmatpush1.msra.mxu0 0.0
  %576 = vmatprep.subr.mxu0 0.0
  %577 = vmatpush1.msra.mxu0 0.0
  %578 = vmatprep.subr.mxu0 0.0
  %579 = vmatpush1.msra.mxu0 0.0
  %580 = vmatprep.subr.mxu0 0.0
  %581 = vmatpush1.msra.mxu0 0.0
  %582 = vmatprep.mubr.f32.mxu0 0.0
  %583 = vmatmul.mubr.f32.gmra.mrb[0].mxu0 %v481
  %v584 = vpop.f32.mrb[0].mxu0
  %v585 = vadd.f32 0.0, %v584
  %v586 = vpop.f32.mrb[0].mxu0
  %v587 = vadd.f32 0.0, %v586
  %588 = vmatprep.mubr.f32.mxu0 0.0
  %589 = vmatmul.mubr.f32.gmra.mrb[0].mxu0 %v482
  %v590 = vpop.f32.mrb[0].mxu0
  %v591 = vadd.f32 0.0, %v590
  %v592 = vpop.f32.mrb[0].mxu0
  %v593 = vadd.f32 0.0, %v592
  %594 = vmatprep.mubr.f32.mxu0 0.0
  %595 = vmatmul.mubr.f32.gmra.mrb[0].mxu0 %v483
  %v596 = vpop.f32.mrb[0].mxu0
  %v597 = vadd.f32 0.0, %v596
  %v598 = vpop.f32.mrb[0].mxu0
  %v599 = vadd.f32 0.0, %v598
  %600 = vmatprep.mubr.f32.mxu0 0.0
  %601 = vmatmul.mubr.f32.gmra.mrb[0].mxu0 %v484
  %v602 = vpop.f32.mrb[0].mxu0
  %v603 = vadd.f32 0.0, %v602
  %v604 = vpop.f32.mrb[0].mxu0
  %v605 = vadd.f32 0.0, %v604
  %606 = vdwg.mxu0
  %v607 = vadd.f32 %v459, %v585
  %v608 = vadd.f32 %v461, %v587
  %v609 = vadd.f32 %v465, %v591
  %v610 = vadd.f32 %v467, %v593
  %v611 = vadd.f32 %v471, %v597
  %v612 = vadd.f32 %v473, %v599
  %v613 = vadd.f32 %v477, %v603
  %v614 = vadd.f32 %v479, %v605
  %615 = vst [vmem:[%s5] sm:$0xff] %v607
  %616 = vst [vmem:[%s5 + $0x8] sm:$0xff] %v608
  %617 = vst [vmem:[%s5 + $0x10] sm:$0xff] %v609
  %618 = vst [vmem:[%s5 + $0x18] sm:$0xff] %v610
  %619 = vst [vmem:[%s5 + $0x20] sm:$0xff] %v611
  %620 = vst [vmem:[%s5 + $0x28] sm:$0xff] %v612
  %621 = vst [vmem:[%s5 + $0x30] sm:$0xff] %v613
  %622 = vst [vmem:[%s5 + $0x38] sm:$0xff] %v614
  %v623 = vmul.f32 %v607, %v607
  %v624 = vmul.f32 %v608, %v608
  %v625 = vmul.f32 %v609, %v609
  %v626 = vmul.f32 %v610, %v610
  %v627 = vmul.f32 %v611, %v611
  %v628 = vmul.f32 %v612, %v612
  %v629 = vmul.f32 %v613, %v613
  %v630 = vmul.f32 %v614, %v614
  %v631 = vld [vmem:[%s4] sm:$0xff]
  %v632 = vld [vmem:[%s4 + $0x8] sm:$0xff]
  %v633 = vld [vmem:[%s4 + $0x10] sm:$0xff]
  %v634 = vld [vmem:[%s4 + $0x18] sm:$0xff]
  %v635 = vld [vmem:[%s4 + $0x20] sm:$0xff]
  %v636 = vld [vmem:[%s4 + $0x28] sm:$0xff]
  %v637 = vld [vmem:[%s4 + $0x30] sm:$0xff]
  %v638 = vld [vmem:[%s4 + $0x38] sm:$0xff]
  %v639 = vld [vmem:[%s4 + $0x40] sm:$0xff]
  %v640 = vld [vmem:[%s4 + $0x48] sm:$0xff]
  %v641 = vld [vmem:[%s4 + $0x50] sm:$0xff]
  %v642 = vld [vmem:[%s4 + $0x58] sm:$0xff]
  %v643 = vld [vmem:[%s4 + $0x60] sm:$0xff]
  %v644 = vld [vmem:[%s4 + $0x68] sm:$0xff]
  %v645 = vld [vmem:[%s4 + $0x70] sm:$0xff]
  %v646 = vld [vmem:[%s4 + $0x78] sm:$0xff]
  %v647 = vld [vmem:[%s4 + $0x80] sm:$0xff]
  %v648 = vld [vmem:[%s4 + $0x88] sm:$0xff]
  %v649 = vld [vmem:[%s4 + $0x90] sm:$0xff]
  %v650 = vld [vmem:[%s4 + $0x98] sm:$0xff]
  %v651 = vld [vmem:[%s4 + $0xa0] sm:$0xff]
  %v652 = vld [vmem:[%s4 + $0xa8] sm:$0xff]
  %v653 = vld [vmem:[%s4 + $0xb0] sm:$0xff]
  %v654 = vld [vmem:[%s4 + $0xb8] sm:$0xff]
  %v655 = vld [vmem:[%s4 + $0xc0] sm:$0xff]
  %v656 = vld [vmem:[%s4 + $0xc8] sm:$0xff]
  %v657 = vld [vmem:[%s4 + $0xd0] sm:$0xff]
  %v658 = vld [vmem:[%s4 + $0xd8] sm:$0xff]
  %v659 = vld [vmem:[%s4 + $0xe0] sm:$0xff]
  %v660 = vld [vmem:[%s4 + $0xe8] sm:$0xff]
  %v661 = vld [vmem:[%s4 + $0xf0] sm:$0xff]
  %v662 = vld [vmem:[%s4 + $0xf8] sm:$0xff]
  %663 = vmatprep.subr.mxu0 0.0
  %664 = vmatpush1.msra.mxu0 %v631
  %665 = vmatprep.subr.mxu0 0.0
  %666 = vmatpush1.msra.mxu0 %v632
  %667 = vmatprep.subr.mxu0 0.0
  %668 = vmatpush1.msra.mxu0 %v633
  %669 = vmatprep.subr.mxu0 0.0
  %670 = vmatpush1.msra.mxu0 %v634
  %671 = vmatprep.subr.mxu0 0.0
  %672 = vmatpush1.msra.mxu0 %v635
  %673 = vmatprep.subr.mxu0 0.0
  %674 = vmatpush1.msra.mxu0 %v636
  %675 = vmatprep.subr.mxu0 0.0
  %676 = vmatpush1.msra.mxu0 %v637
  %677 = vmatprep.subr.mxu0 0.0
  %678 = vmatpush1.msra.mxu0 %v638
  %679 = vmatprep.subr.mxu0 0.0
  %680 = vmatpush1.msra.mxu0 %v639
  %681 = vmatprep.subr.mxu0 0.0
  %682 = vmatpush1.msra.mxu0 %v640
  %683 = vmatprep.subr.mxu0 0.0
  %684 = vmatpush1.msra.mxu0 %v641
  %685 = vmatprep.subr.mxu0 0.0
  %686 = vmatpush1.msra.mxu0 %v642
  %687 = vmatprep.subr.mxu0 0.0
  %688 = vmatpush1.msra.mxu0 %v643
  %689 = vmatprep.subr.mxu0 0.0
  %690 = vmatpush1.msra.mxu0 %v644
  %691 = vmatprep.subr.mxu0 0.0
  %692 = vmatpush1.msra.mxu0 %v645
  %693 = vmatprep.subr.mxu0 0.0
  %694 = vmatpush1.msra.mxu0 %v646
  %695 = vmatprep.subr.mxu0 0.0
  %696 = vmatpush1.msra.mxu0 %v647
  %697 = vmatprep.subr.mxu0 0.0
  %698 = vmatpush1.msra.mxu0 %v648
  %699 = vmatprep.subr.mxu0 0.0
  %700 = vmatpush1.msra.mxu0 %v649
  %701 = vmatprep.subr.mxu0 0.0
  %702 = vmatpush1.msra.mxu0 %v650
  %703 = vmatprep.subr.mxu0 0.0
  %704 = vmatpush1.msra.mxu0 %v651
  %705 = vmatprep.subr.mxu0 0.0
  %706 = vmatpush1.msra.mxu0 %v652
  %707 = vmatprep.subr.mxu0 0.0
  %708 = vmatpush1.msra.mxu0 %v653
  %709 = vmatprep.subr.mxu0 0.0
  %710 = vmatpush1.msra.mxu0 %v654
  %711 = vmatprep.subr.mxu0 0.0
  %712 = vmatpush1.msra.mxu0 %v655
  %713 = vmatprep.subr.mxu0 0.0
  %714 = vmatpush1.msra.mxu0 %v656
  %715 = vmatprep.subr.mxu0 0.0
  %716 = vmatpush1.msra.mxu0 %v657
  %717 = vmatprep.subr.mxu0 0.0
  %718 = vmatpush1.msra.mxu0 %v658
  %719 = vmatprep.subr.mxu0 0.0
  %720 = vmatpush1.msra.mxu0 %v659
  %721 = vmatprep.subr.mxu0 0.0
  %722 = vmatpush1.msra.mxu0 %v660
  %723 = vmatprep.subr.mxu0 0.0
  %724 = vmatpush1.msra.mxu0 %v661
  %725 = vmatprep.subr.mxu0 0.0
  %726 = vmatpush1.msra.mxu0 %v662
  %727 = vmatprep.mubr.f32.mxu0 %v608
  %728 = vmatmul.mubr.f32.gmra.mrb[0].mxu0 %v607
  %v729 = vpop.f32.mrb[0].mxu0
  %v730 = vadd.f32 0.0, %v729
  %v731 = vpop.f32.mrb[0].mxu0
  %732 = vmatprep.mubr.f32.mxu0 %v610
  %733 = vmatmul.mubr.f32.gmra.mrb[0].mxu0 %v609
  %v734 = vpop.f32.mrb[0].mxu0
  %v735 = vadd.f32 0.0, %v734
  %v736 = vpop.f32.mrb[0].mxu0
  %737 = vmatprep.mubr.f32.mxu0 %v612
  %738 = vmatmul.mubr.f32.gmra.mrb[0].mxu0 %v611
  %v739 = vpop.f32.mrb[0].mxu0
  %v740 = vadd.f32 0.0, %v739
  %v741 = vpop.f32.mrb[0].mxu0
  %742 = vmatprep.mubr.f32.mxu0 %v614
  %743 = vmatmul.mubr.f32.gmra.mrb[0].mxu0 %v613
  %v744 = vpop.f32.mrb[0].mxu0
  %v745 = vadd.f32 0.0, %v744
  %v746 = vpop.f32.mrb[0].mxu0
  %747 = vmatprep.mubr.f32.mxu0 %v624
  %748 = vmatmul.mubr.f32.gmra.mrb[0].mxu0 %v623
  %v749 = vpop.f32.mrb[0].mxu0
  %v750 = vadd.f32 0.0, %v749
  %v751 = vpop.f32.mrb[0].mxu0
  %752 = vmatprep.mubr.f32.mxu0 %v626
  %753 = vmatmul.mubr.f32.gmra.mrb[0].mxu0 %v625
  %v754 = vpop.f32.mrb[0].mxu0
  %v755 = vadd.f32 0.0, %v754
  %v756 = vpop.f32.mrb[0].mxu0
  %757 = vmatprep.mubr.f32.mxu0 %v628
  %758 = vmatmul.mubr.f32.gmra.mrb[0].mxu0 %v627
  %v759 = vpop.f32.mrb[0].mxu0
  %v760 = vadd.f32 0.0, %v759
  %v761 = vpop.f32.mrb[0].mxu0
  %762 = vmatprep.mubr.f32.mxu0 %v630
  %763 = vmatmul.mubr.f32.gmra.mrb[0].mxu0 %v629
  %v764 = vpop.f32.mrb[0].mxu0
  %v765 = vadd.f32 0.0, %v764
  %v766 = vpop.f32.mrb[0].mxu0
  %767 = vdwg.mxu0
  %vm768 = vcmask 64512
  %v769 = vsel %vm768, %v730, 0.0
  %v770 = vsel %vm768, %v735, 0.0
  %v771 = vadd.f32 %v769, %v770
  %v772 = vsel %vm768, %v740, 0.0
  %v773 = vadd.f32 %v771, %v772
  %v774 = vsel %vm768, %v745, 0.0
  %v775 = vadd.f32 %v773, %v774
  %v776 = vrot.slane %v775, 4
  %v777 = vadd.f32 %v775, %v776
  %v778 = vrot.slane %v777, 2
  %v779 = vadd.f32 %v777, %v778
  %v780 = vrot.slane %v779, 1
  %v781 = vadd.f32 %v779, %v780
  %v782 = vsel %vm768, %v750, 0.0
  %v783 = vsel %vm768, %v755, 0.0
  %v784 = vadd.f32 %v782, %v783
  %v785 = vsel %vm768, %v760, 0.0
  %v786 = vadd.f32 %v784, %v785
  %v787 = vsel %vm768, %v765, 0.0
  %v788 = vadd.f32 %v786, %v787
  %v789 = vrot.slane %v788, 4
  %v790 = vadd.f32 %v788, %v789
  %v791 = vrot.slane %v790, 2
  %v792 = vadd.f32 %v790, %v791
  %v793 = vrot.slane %v792, 1
  %v794 = vadd.f32 %v792, %v793
  %vm795 = vcmask 1040384
  %v796 = vsel %vm795, %v781, %v794
  %vm797 = vcmask 58368
  %798 = vst.msk [vmem:[%s6] sm:$0x3] %vm797, %v796
  %s799 = scalar_lea.vmem %s0, 16
  %v800 = vld [vmem:[%s799] sm:$0xff]
  %v801 = vld [vmem:[%s799 + $0x8] sm:$0xff]
  %v802 = vld [vmem:[%s2] sm:$0xff]
  %v803 = vld [vmem:[%s2 + $0x8] sm:$0xff]
  %v804 = vld [vmem:[%s2 + $0x10] sm:$0xff]
  %v805 = vld [vmem:[%s2 + $0x18] sm:$0xff]
  %v806 = vld [vmem:[%s2 + $0x20] sm:$0xff]
  %v807 = vld [vmem:[%s2 + $0x28] sm:$0xff]
  %v808 = vld [vmem:[%s2 + $0x30] sm:$0xff]
  %v809 = vld [vmem:[%s2 + $0x38] sm:$0xff]
  %v811 = vsel %vm32, %v800, 0
  %v814 = vsel %vm32, %v801, 0
  %816 = vmatprep.subr.mxu0 0.0
  %817 = vmatpush1.msra.mxu0 %v802
  %818 = vmatprep.subr.mxu0 0.0
  %819 = vmatpush1.msra.mxu0 %v803
  %820 = vmatprep.subr.mxu0 0.0
  %821 = vmatpush1.msra.mxu0 %v804
  %822 = vmatprep.subr.mxu0 0.0
  %823 = vmatpush1.msra.mxu0 %v805
  %824 = vmatprep.subr.mxu0 0.0
  %825 = vmatpush1.msra.mxu0 %v806
  %826 = vmatprep.subr.mxu0 0.0
  %827 = vmatpush1.msra.mxu0 %v807
  %828 = vmatprep.subr.mxu0 0.0
  %829 = vmatpush1.msra.mxu0 %v808
  %830 = vmatprep.subr.mxu0 0.0
  %831 = vmatpush1.msra.mxu0 %v809
  %832 = vmatprep.subr.mxu0 0.0
  %833 = vmatpush1.msra.mxu0 0.0
  %834 = vmatprep.subr.mxu0 0.0
  %835 = vmatpush1.msra.mxu0 0.0
  %836 = vmatprep.subr.mxu0 0.0
  %837 = vmatpush1.msra.mxu0 0.0
  %838 = vmatprep.subr.mxu0 0.0
  %839 = vmatpush1.msra.mxu0 0.0
  %840 = vmatprep.subr.mxu0 0.0
  %841 = vmatpush1.msra.mxu0 0.0
  %842 = vmatprep.subr.mxu0 0.0
  %843 = vmatpush1.msra.mxu0 0.0
  %844 = vmatprep.subr.mxu0 0.0
  %845 = vmatpush1.msra.mxu0 0.0
  %846 = vmatprep.subr.mxu0 0.0
  %847 = vmatpush1.msra.mxu0 0.0
  %848 = vmatprep.subr.mxu0 0.0
  %849 = vmatpush1.msra.mxu0 0.0
  %850 = vmatprep.subr.mxu0 0.0
  %851 = vmatpush1.msra.mxu0 0.0
  %852 = vmatprep.subr.mxu0 0.0
  %853 = vmatpush1.msra.mxu0 0.0
  %854 = vmatprep.subr.mxu0 0.0
  %855 = vmatpush1.msra.mxu0 0.0
  %856 = vmatprep.subr.mxu0 0.0
  %857 = vmatpush1.msra.mxu0 0.0
  %858 = vmatprep.subr.mxu0 0.0
  %859 = vmatpush1.msra.mxu0 0.0
  %860 = vmatprep.subr.mxu0 0.0
  %861 = vmatpush1.msra.mxu0 0.0
  %862 = vmatprep.subr.mxu0 0.0
  %863 = vmatpush1.msra.mxu0 0.0
  %864 = vmatprep.subr.mxu0 0.0
  %865 = vmatpush1.msra.mxu0 0.0
  %866 = vmatprep.subr.mxu0 0.0
  %867 = vmatpush1.msra.mxu0 0.0
  %868 = vmatprep.subr.mxu0 0.0
  %869 = vmatpush1.msra.mxu0 0.0
  %870 = vmatprep.subr.mxu0 0.0
  %871 = vmatpush1.msra.mxu0 0.0
  %872 = vmatprep.subr.mxu0 0.0
  %873 = vmatpush1.msra.mxu0 0.0
  %874 = vmatprep.subr.mxu0 0.0
  %875 = vmatpush1.msra.mxu0 0.0
  %876 = vmatprep.subr.mxu0 0.0
  %877 = vmatpush1.msra.mxu0 0.0
  %878 = vmatprep.subr.mxu0 0.0
  %879 = vmatpush1.msra.mxu0 0.0
  %880 = vmatprep.mubr.f32.mxu0 0.0
  %881 = vmatmul.mubr.f32.gmra.mrb[0].mxu0 %v811
  %v882 = vpop.f32.mrb[0].mxu0
  %v883 = vadd.f32 0.0, %v882
  %v884 = vpop.f32.mrb[0].mxu0
  %885 = vmatprep.mubr.f32.mxu0 0.0
  %886 = vmatmul.mubr.f32.gmra.mrb[0].mxu0 %v814
  %v887 = vpop.f32.mrb[0].mxu0
  %v888 = vadd.f32 0.0, %v887
  %v889 = vpop.f32.mrb[0].mxu0
  %890 = vdwg.mxu0
  %v891 = vld [vmem:[%s1] sm:$0xff]
  %v892 = vld [vmem:[%s1 + $0x8] sm:$0xff]
  %v893 = vld [vmem:[%s1 + $0x10] sm:$0xff]
  %v894 = vld [vmem:[%s1 + $0x18] sm:$0xff]
  %v895 = vld [vmem:[%s1 + $0x20] sm:$0x3]
  %v897 = vsel %vm119, %v891, 0
  %v900 = vsel %vm119, %v892, 0
  %v903 = vsel %vm119, %v893, 0
  %v906 = vsel %vm119, %v894, 0
  %v909 = vsel %vm119, %v895, 0
  %911 = vmatprep.subr.mxu0 0.0
  %912 = vmatpush1.msra.mxu0 %v883
  %913 = vmatprep.subr.mxu0 0.0
  %914 = vmatpush1.msra.mxu0 %v888
  %915 = vmatprep.subr.mxu0 0.0
  %916 = vmatpush1.msra.mxu0 0.0
  %917 = vmatprep.subr.mxu0 0.0
  %918 = vmatpush1.msra.mxu0 0.0
  %919 = vmatprep.subr.mxu0 0.0
  %920 = vmatpush1.msra.mxu0 0.0
  %921 = vmatprep.subr.mxu0 0.0
  %922 = vmatpush1.msra.mxu0 0.0
  %923 = vmatprep.subr.mxu0 0.0
  %924 = vmatpush1.msra.mxu0 0.0
  %925 = vmatprep.subr.mxu0 0.0
  %926 = vmatpush1.msra.mxu0 0.0
  %927 = vmatprep.subr.mxu0 0.0
  %928 = vmatpush1.msra.mxu0 0.0
  %929 = vmatprep.subr.mxu0 0.0
  %930 = vmatpush1.msra.mxu0 0.0
  %931 = vmatprep.subr.mxu0 0.0
  %932 = vmatpush1.msra.mxu0 0.0
  %933 = vmatprep.subr.mxu0 0.0
  %934 = vmatpush1.msra.mxu0 0.0
  %935 = vmatprep.subr.mxu0 0.0
  %936 = vmatpush1.msra.mxu0 0.0
  %937 = vmatprep.subr.mxu0 0.0
  %938 = vmatpush1.msra.mxu0 0.0
  %939 = vmatprep.subr.mxu0 0.0
  %940 = vmatpush1.msra.mxu0 0.0
  %941 = vmatprep.subr.mxu0 0.0
  %942 = vmatpush1.msra.mxu0 0.0
  %943 = vmatprep.subr.mxu0 0.0
  %944 = vmatpush1.msra.mxu0 0.0
  %945 = vmatprep.subr.mxu0 0.0
  %946 = vmatpush1.msra.mxu0 0.0
  %947 = vmatprep.subr.mxu0 0.0
  %948 = vmatpush1.msra.mxu0 0.0
  %949 = vmatprep.subr.mxu0 0.0
  %950 = vmatpush1.msra.mxu0 0.0
  %951 = vmatprep.subr.mxu0 0.0
  %952 = vmatpush1.msra.mxu0 0.0
  %953 = vmatprep.subr.mxu0 0.0
  %954 = vmatpush1.msra.mxu0 0.0
  %955 = vmatprep.subr.mxu0 0.0
  %956 = vmatpush1.msra.mxu0 0.0
  %957 = vmatprep.subr.mxu0 0.0
  %958 = vmatpush1.msra.mxu0 0.0
  %959 = vmatprep.subr.mxu0 0.0
  %960 = vmatpush1.msra.mxu0 0.0
  %961 = vmatprep.subr.mxu0 0.0
  %962 = vmatpush1.msra.mxu0 0.0
  %963 = vmatprep.subr.mxu0 0.0
  %964 = vmatpush1.msra.mxu0 0.0
  %965 = vmatprep.subr.mxu0 0.0
  %966 = vmatpush1.msra.mxu0 0.0
  %967 = vmatprep.subr.mxu0 0.0
  %968 = vmatpush1.msra.mxu0 0.0
  %969 = vmatprep.subr.mxu0 0.0
  %970 = vmatpush1.msra.mxu0 0.0
  %971 = vmatprep.subr.mxu0 0.0
  %972 = vmatpush1.msra.mxu0 0.0
  %973 = vmatprep.subr.mxu0 0.0
  %974 = vmatpush1.msra.mxu0 0.0
  %975 = vmatprep.mubr.f32.mxu0 0.0
  %976 = vmatmul.mubr.f32.gmra.mrb[0].mxu0 %v897
  %v977 = vpop.f32.mrb[0].mxu0
  %v978 = vadd.f32 0.0, %v977
  %v979 = vpop.f32.mrb[0].mxu0
  %980 = vmatprep.mubr.f32.mxu0 0.0
  %981 = vmatmul.mubr.f32.gmra.mrb[0].mxu0 %v900
  %v982 = vpop.f32.mrb[0].mxu0
  %v983 = vadd.f32 0.0, %v982
  %v984 = vpop.f32.mrb[0].mxu0
  %985 = vmatprep.mubr.f32.mxu0 0.0
  %986 = vmatmul.mubr.f32.gmra.mrb[0].mxu0 %v903
  %v987 = vpop.f32.mrb[0].mxu0
  %v988 = vadd.f32 0.0, %v987
  %v989 = vpop.f32.mrb[0].mxu0
  %990 = vmatprep.mubr.f32.mxu0 0.0
  %991 = vmatmul.mubr.f32.gmra.mrb[0].mxu0 %v906
  %v992 = vpop.f32.mrb[0].mxu0
  %v993 = vadd.f32 0.0, %v992
  %v994 = vpop.f32.mrb[0].mxu0
  %995 = vmatprep.mubr.f32.mxu0 0.0
  %996 = vmatmul.mubr.f32.gmra.mrb[0].mxu0 %v909
  %v997 = vpop.f32.mrb[0].mxu0
  %v998 = vadd.f32 0.0, %v997
  %v999 = vpop.f32.mrb[0].mxu0
  %1000 = vdwg.mxu0
  %1001 = vst [vmem:[#allocation2] sm:$0xff] %v978
  %1002 = vst [vmem:[#allocation2 + $0x8] sm:$0xff] %v983
  %1003 = vst [vmem:[#allocation2 + $0x10] sm:$0xff] %v988
  %1004 = vst [vmem:[#allocation2 + $0x18] sm:$0xff] %v993
  %1005 = vst [vmem:[#allocation2 + $0x20] sm:$0x3] %v998
  %v1006 = vld [vmem:[#allocation2] sm:$0xff]
  %v1007 = vld [vmem:[#allocation2 + $0x8] sm:$0xff]
  %v1008 = vld [vmem:[#allocation2 + $0x10] sm:$0xff]
  %v1009 = vld [vmem:[#allocation2 + $0x18] sm:$0xff]
  %v1010 = vld [vmem:[%s3] sm:$0xff]
  %v1011 = vld [vmem:[%s3 + $0x8] sm:$0xff]
  %v1012 = vld [vmem:[%s3 + $0x10] sm:$0xff]
  %v1013 = vld [vmem:[%s3 + $0x18] sm:$0xff]
  %v1014 = vld [vmem:[%s3 + $0x20] sm:$0xff]
  %v1015 = vld [vmem:[%s3 + $0x28] sm:$0xff]
  %v1016 = vld [vmem:[%s3 + $0x30] sm:$0xff]
  %v1017 = vld [vmem:[%s3 + $0x38] sm:$0xff]
  %v1018 = vld [vmem:[%s3 + $0x40] sm:$0xff]
  %v1019 = vld [vmem:[%s3 + $0x48] sm:$0xff]
  %v1020 = vld [vmem:[%s3 + $0x50] sm:$0xff]
  %v1021 = vld [vmem:[%s3 + $0x58] sm:$0xff]
  %v1022 = vld [vmem:[%s3 + $0x60] sm:$0xff]
  %v1023 = vld [vmem:[%s3 + $0x68] sm:$0xff]
  %v1024 = vld [vmem:[%s3 + $0x70] sm:$0xff]
  %v1025 = vld [vmem:[%s3 + $0x78] sm:$0xff]
  %v1026 = vld [vmem:[%s3 + $0x80] sm:$0xff]
  %v1027 = vld [vmem:[%s3 + $0x88] sm:$0xff]
  %v1028 = vld [vmem:[%s3 + $0x90] sm:$0xff]
  %v1029 = vld [vmem:[%s3 + $0x98] sm:$0xff]
  %v1030 = vld [vmem:[%s3 + $0xa0] sm:$0xff]
  %v1031 = vld [vmem:[%s3 + $0xa8] sm:$0xff]
  %v1032 = vld [vmem:[%s3 + $0xb0] sm:$0xff]
  %v1033 = vld [vmem:[%s3 + $0xb8] sm:$0xff]
  %v1034 = vld [vmem:[%s3 + $0xc0] sm:$0xff]
  %v1035 = vld [vmem:[%s3 + $0xc8] sm:$0xff]
  %v1036 = vld [vmem:[%s3 + $0xd0] sm:$0xff]
  %v1037 = vld [vmem:[%s3 + $0xd8] sm:$0xff]
  %v1038 = vld [vmem:[%s3 + $0xe0] sm:$0xff]
  %v1039 = vld [vmem:[%s3 + $0xe8] sm:$0xff]
  %v1040 = vld [vmem:[%s3 + $0xf0] sm:$0xff]
  %v1041 = vld [vmem:[%s3 + $0xf8] sm:$0xff]
  %v1042 = vld [vmem:[#allocation2 + $0x1] sm:$0xff]
  %v1043 = vld [vmem:[#allocation2 + $0x9] sm:$0xff]
  %v1044 = vld [vmem:[#allocation2 + $0x11] sm:$0xff]
  %v1045 = vld [vmem:[#allocation2 + $0x19] sm:$0xff]
  %v1046 = vld [vmem:[%s270] sm:$0xff]
  %v1047 = vld [vmem:[%s270 + $0x8] sm:$0xff]
  %v1048 = vld [vmem:[%s270 + $0x10] sm:$0xff]
  %v1049 = vld [vmem:[%s270 + $0x18] sm:$0xff]
  %v1050 = vld [vmem:[%s270 + $0x20] sm:$0xff]
  %v1051 = vld [vmem:[%s270 + $0x28] sm:$0xff]
  %v1052 = vld [vmem:[%s270 + $0x30] sm:$0xff]
  %v1053 = vld [vmem:[%s270 + $0x38] sm:$0xff]
  %v1054 = vld [vmem:[%s270 + $0x40] sm:$0xff]
  %v1055 = vld [vmem:[%s270 + $0x48] sm:$0xff]
  %v1056 = vld [vmem:[%s270 + $0x50] sm:$0xff]
  %v1057 = vld [vmem:[%s270 + $0x58] sm:$0xff]
  %v1058 = vld [vmem:[%s270 + $0x60] sm:$0xff]
  %v1059 = vld [vmem:[%s270 + $0x68] sm:$0xff]
  %v1060 = vld [vmem:[%s270 + $0x70] sm:$0xff]
  %v1061 = vld [vmem:[%s270 + $0x78] sm:$0xff]
  %v1062 = vld [vmem:[%s270 + $0x80] sm:$0xff]
  %v1063 = vld [vmem:[%s270 + $0x88] sm:$0xff]
  %v1064 = vld [vmem:[%s270 + $0x90] sm:$0xff]
  %v1065 = vld [vmem:[%s270 + $0x98] sm:$0xff]
  %v1066 = vld [vmem:[%s270 + $0xa0] sm:$0xff]
  %v1067 = vld [vmem:[%s270 + $0xa8] sm:$0xff]
  %v1068 = vld [vmem:[%s270 + $0xb0] sm:$0xff]
  %v1069 = vld [vmem:[%s270 + $0xb8] sm:$0xff]
  %v1070 = vld [vmem:[%s270 + $0xc0] sm:$0xff]
  %v1071 = vld [vmem:[%s270 + $0xc8] sm:$0xff]
  %v1072 = vld [vmem:[%s270 + $0xd0] sm:$0xff]
  %v1073 = vld [vmem:[%s270 + $0xd8] sm:$0xff]
  %v1074 = vld [vmem:[%s270 + $0xe0] sm:$0xff]
  %v1075 = vld [vmem:[%s270 + $0xe8] sm:$0xff]
  %v1076 = vld [vmem:[%s270 + $0xf0] sm:$0xff]
  %v1077 = vld [vmem:[%s270 + $0xf8] sm:$0xff]
  %1078 = vmatprep.subr.mxu0 %v1047
  %1079 = vmatpush1.msra.mxu0 %v1046
  %1080 = vmatprep.subr.mxu0 %v1049
  %1081 = vmatpush1.msra.mxu0 %v1048
  %1082 = vmatprep.subr.mxu0 %v1051
  %1083 = vmatpush1.msra.mxu0 %v1050
  %1084 = vmatprep.subr.mxu0 %v1053
  %1085 = vmatpush1.msra.mxu0 %v1052
  %1086 = vmatprep.subr.mxu0 %v1055
  %1087 = vmatpush1.msra.mxu0 %v1054
  %1088 = vmatprep.subr.mxu0 %v1057
  %1089 = vmatpush1.msra.mxu0 %v1056
  %1090 = vmatprep.subr.mxu0 %v1059
  %1091 = vmatpush1.msra.mxu0 %v1058
  %1092 = vmatprep.subr.mxu0 %v1061
  %1093 = vmatpush1.msra.mxu0 %v1060
  %1094 = vmatprep.subr.mxu0 %v1063
  %1095 = vmatpush1.msra.mxu0 %v1062
  %1096 = vmatprep.subr.mxu0 %v1065
  %1097 = vmatpush1.msra.mxu0 %v1064
  %1098 = vmatprep.subr.mxu0 %v1067
  %1099 = vmatpush1.msra.mxu0 %v1066
  %1100 = vmatprep.subr.mxu0 %v1069
  %1101 = vmatpush1.msra.mxu0 %v1068
  %1102 = vmatprep.subr.mxu0 %v1071
  %1103 = vmatpush1.msra.mxu0 %v1070
  %1104 = vmatprep.subr.mxu0 %v1073
  %1105 = vmatpush1.msra.mxu0 %v1072
  %1106 = vmatprep.subr.mxu0 %v1075
  %1107 = vmatpush1.msra.mxu0 %v1074
  %1108 = vmatprep.subr.mxu0 %v1077
  %1109 = vmatpush1.msra.mxu0 %v1076
  %1110 = vmatprep.subr.mxu0 0.0
  %1111 = vmatpush1.msra.mxu0 0.0
  %1112 = vmatprep.subr.mxu0 0.0
  %1113 = vmatpush1.msra.mxu0 0.0
  %1114 = vmatprep.subr.mxu0 0.0
  %1115 = vmatpush1.msra.mxu0 0.0
  %1116 = vmatprep.subr.mxu0 0.0
  %1117 = vmatpush1.msra.mxu0 0.0
  %1118 = vmatprep.subr.mxu0 0.0
  %1119 = vmatpush1.msra.mxu0 0.0
  %1120 = vmatprep.subr.mxu0 0.0
  %1121 = vmatpush1.msra.mxu0 0.0
  %1122 = vmatprep.subr.mxu0 0.0
  %1123 = vmatpush1.msra.mxu0 0.0
  %1124 = vmatprep.subr.mxu0 0.0
  %1125 = vmatpush1.msra.mxu0 0.0
  %1126 = vmatprep.subr.mxu0 0.0
  %1127 = vmatpush1.msra.mxu0 0.0
  %1128 = vmatprep.subr.mxu0 0.0
  %1129 = vmatpush1.msra.mxu0 0.0
  %1130 = vmatprep.subr.mxu0 0.0
  %1131 = vmatpush1.msra.mxu0 0.0
  %1132 = vmatprep.subr.mxu0 0.0
  %1133 = vmatpush1.msra.mxu0 0.0
  %1134 = vmatprep.subr.mxu0 0.0
  %1135 = vmatpush1.msra.mxu0 0.0
  %1136 = vmatprep.subr.mxu0 0.0
  %1137 = vmatpush1.msra.mxu0 0.0
  %1138 = vmatprep.subr.mxu0 0.0
  %1139 = vmatpush1.msra.mxu0 0.0
  %1140 = vmatprep.subr.mxu0 0.0
  %1141 = vmatpush1.msra.mxu0 0.0
  %1142 = vmatprep.mubr.f32.mxu0 0.0
  %1143 = vmatmul.mubr.f32.gmra.mrb[0].mxu0 %v1042
  %v1144 = vpop.f32.mrb[0].mxu0
  %v1145 = vadd.f32 0.0, %v1144
  %v1146 = vpop.f32.mrb[0].mxu0
  %v1147 = vadd.f32 0.0, %v1146
  %1148 = vmatprep.mubr.f32.mxu0 0.0
  %1149 = vmatmul.mubr.f32.gmra.mrb[0].mxu0 %v1043
  %v1150 = vpop.f32.mrb[0].mxu0
  %v1151 = vadd.f32 0.0, %v1150
  %v1152 = vpop.f32.mrb[0].mxu0
  %v1153 = vadd.f32 0.0, %v1152
  %1154 = vmatprep.mubr.f32.mxu0 0.0
  %1155 = vmatmul.mubr.f32.gmra.mrb[0].mxu0 %v1044
  %v1156 = vpop.f32.mrb[0].mxu0
  %v1157 = vadd.f32 0.0, %v1156
  %v1158 = vpop.f32.mrb[0].mxu0
  %v1159 = vadd.f32 0.0, %v1158
  %1160 = vmatprep.mubr.f32.mxu0 0.0
  %1161 = vmatmul.mubr.f32.gmra.mrb[0].mxu0 %v1045
  %v1162 = vpop.f32.mrb[0].mxu0
  %v1163 = vadd.f32 0.0, %v1162
  %v1164 = vpop.f32.mrb[0].mxu0
  %v1165 = vadd.f32 0.0, %v1164
  %1166 = vdwg.mxu0
  %1167 = vmatprep.subr.mxu0 %v1011
  %1168 = vmatpush1.msra.mxu0 %v1010
  %1169 = vmatprep.subr.mxu0 %v1013
  %1170 = vmatpush1.msra.mxu0 %v1012
  %1171 = vmatprep.subr.mxu0 %v1015
  %1172 = vmatpush1.msra.mxu0 %v1014
  %1173 = vmatprep.subr.mxu0 %v1017
  %1174 = vmatpush1.msra.mxu0 %v1016
  %1175 = vmatprep.subr.mxu0 %v1019
  %1176 = vmatpush1.msra.mxu0 %v1018
  %1177 = vmatprep.subr.mxu0 %v1021
  %1178 = vmatpush1.msra.mxu0 %v1020
  %1179 = vmatprep.subr.mxu0 %v1023
  %1180 = vmatpush1.msra.mxu0 %v1022
  %1181 = vmatprep.subr.mxu0 %v1025
  %1182 = vmatpush1.msra.mxu0 %v1024
  %1183 = vmatprep.subr.mxu0 %v1027
  %1184 = vmatpush1.msra.mxu0 %v1026
  %1185 = vmatprep.subr.mxu0 %v1029
  %1186 = vmatpush1.msra.mxu0 %v1028
  %1187 = vmatprep.subr.mxu0 %v1031
  %1188 = vmatpush1.msra.mxu0 %v1030
  %1189 = vmatprep.subr.mxu0 %v1033
  %1190 = vmatpush1.msra.mxu0 %v1032
  %1191 = vmatprep.subr.mxu0 %v1035
  %1192 = vmatpush1.msra.mxu0 %v1034
  %1193 = vmatprep.subr.mxu0 %v1037
  %1194 = vmatpush1.msra.mxu0 %v1036
  %1195 = vmatprep.subr.mxu0 %v1039
  %1196 = vmatpush1.msra.mxu0 %v1038
  %1197 = vmatprep.subr.mxu0 %v1041
  %1198 = vmatpush1.msra.mxu0 %v1040
  %1199 = vmatprep.subr.mxu0 0.0
  %1200 = vmatpush1.msra.mxu0 0.0
  %1201 = vmatprep.subr.mxu0 0.0
  %1202 = vmatpush1.msra.mxu0 0.0
  %1203 = vmatprep.subr.mxu0 0.0
  %1204 = vmatpush1.msra.mxu0 0.0
  %1205 = vmatprep.subr.mxu0 0.0
  %1206 = vmatpush1.msra.mxu0 0.0
  %1207 = vmatprep.subr.mxu0 0.0
  %1208 = vmatpush1.msra.mxu0 0.0
  %1209 = vmatprep.subr.mxu0 0.0
  %1210 = vmatpush1.msra.mxu0 0.0
  %1211 = vmatprep.subr.mxu0 0.0
  %1212 = vmatpush1.msra.mxu0 0.0
  %1213 = vmatprep.subr.mxu0 0.0
  %1214 = vmatpush1.msra.mxu0 0.0
  %1215 = vmatprep.subr.mxu0 0.0
  %1216 = vmatpush1.msra.mxu0 0.0
  %1217 = vmatprep.subr.mxu0 0.0
  %1218 = vmatpush1.msra.mxu0 0.0
  %1219 = vmatprep.subr.mxu0 0.0
  %1220 = vmatpush1.msra.mxu0 0.0
  %1221 = vmatprep.subr.mxu0 0.0
  %1222 = vmatpush1.msra.mxu0 0.0
  %1223 = vmatprep.subr.mxu0 0.0
  %1224 = vmatpush1.msra.mxu0 0.0
  %1225 = vmatprep.subr.mxu0 0.0
  %1226 = vmatpush1.msra.mxu0 0.0
  %1227 = vmatprep.subr.mxu0 0.0
  %1228 = vmatpush1.msra.mxu0 0.0
  %1229 = vmatprep.subr.mxu0 0.0
  %1230 = vmatpush1.msra.mxu0 0.0
  %1231 = vmatprep.mubr.f32.mxu0 0.0
  %1232 = vmatmul.mubr.f32.gmra.mrb[0].mxu0 %v1006
  %v1233 = vpop.f32.mrb[0].mxu0
  %v1234 = vadd.f32 %v1145, %v1233
  %v1235 = vpop.f32.mrb[0].mxu0
  %v1236 = vadd.f32 %v1147, %v1235
  %1237 = vmatprep.mubr.f32.mxu0 0.0
  %1238 = vmatmul.mubr.f32.gmra.mrb[0].mxu0 %v1007
  %v1239 = vpop.f32.mrb[0].mxu0
  %v1240 = vadd.f32 %v1151, %v1239
  %v1241 = vpop.f32.mrb[0].mxu0
  %v1242 = vadd.f32 %v1153, %v1241
  %1243 = vmatprep.mubr.f32.mxu0 0.0
  %1244 = vmatmul.mubr.f32.gmra.mrb[0].mxu0 %v1008
  %v1245 = vpop.f32.mrb[0].mxu0
  %v1246 = vadd.f32 %v1157, %v1245
  %v1247 = vpop.f32.mrb[0].mxu0
  %v1248 = vadd.f32 %v1159, %v1247
  %1249 = vmatprep.mubr.f32.mxu0 0.0
  %1250 = vmatmul.mubr.f32.gmra.mrb[0].mxu0 %v1009
  %v1251 = vpop.f32.mrb[0].mxu0
  %v1252 = vadd.f32 %v1163, %v1251
  %v1253 = vpop.f32.mrb[0].mxu0
  %v1254 = vadd.f32 %v1165, %v1253
  %1255 = vdwg.mxu0
  %v1256 = vld [vmem:[#allocation2 + $0x2] sm:$0xff]
  %v1257 = vld [vmem:[#allocation2 + $0xa] sm:$0xff]
  %v1258 = vld [vmem:[#allocation2 + $0x12] sm:$0xff]
  %v1259 = vld [vmem:[#allocation2 + $0x1a] sm:$0xff]
  %v1260 = vld [vmem:[%s485] sm:$0xff]
  %v1261 = vld [vmem:[%s485 + $0x8] sm:$0xff]
  %v1262 = vld [vmem:[%s485 + $0x10] sm:$0xff]
  %v1263 = vld [vmem:[%s485 + $0x18] sm:$0xff]
  %v1264 = vld [vmem:[%s485 + $0x20] sm:$0xff]
  %v1265 = vld [vmem:[%s485 + $0x28] sm:$0xff]
  %v1266 = vld [vmem:[%s485 + $0x30] sm:$0xff]
  %v1267 = vld [vmem:[%s485 + $0x38] sm:$0xff]
  %v1268 = vld [vmem:[%s485 + $0x40] sm:$0xff]
  %v1269 = vld [vmem:[%s485 + $0x48] sm:$0xff]
  %v1270 = vld [vmem:[%s485 + $0x50] sm:$0xff]
  %v1271 = vld [vmem:[%s485 + $0x58] sm:$0xff]
  %v1272 = vld [vmem:[%s485 + $0x60] sm:$0xff]
  %v1273 = vld [vmem:[%s485 + $0x68] sm:$0xff]
  %v1274 = vld [vmem:[%s485 + $0x70] sm:$0xff]
  %v1275 = vld [vmem:[%s485 + $0x78] sm:$0xff]
  %v1276 = vld [vmem:[%s485 + $0x80] sm:$0xff]
  %v1277 = vld [vmem:[%s485 + $0x88] sm:$0xff]
  %v1278 = vld [vmem:[%s485 + $0x90] sm:$0xff]
  %v1279 = vld [vmem:[%s485 + $0x98] sm:$0xff]
  %v1280 = vld [vmem:[%s485 + $0xa0] sm:$0xff]
  %v1281 = vld [vmem:[%s485 + $0xa8] sm:$0xff]
  %v1282 = vld [vmem:[%s485 + $0xb0] sm:$0xff]
  %v1283 = vld [vmem:[%s485 + $0xb8] sm:$0xff]
  %v1284 = vld [vmem:[%s485 + $0xc0] sm:$0xff]
  %v1285 = vld [vmem:[%s485 + $0xc8] sm:$0xff]
  %v1286 = vld [vmem:[%s485 + $0xd0] sm:$0xff]
  %v1287 = vld [vmem:[%s485 + $0xd8] sm:$0xff]
  %v1288 = vld [vmem:[%s485 + $0xe0] sm:$0xff]
  %v1289 = vld [vmem:[%s485 + $0xe8] sm:$0xff]
  %v1290 = vld [vmem:[%s485 + $0xf0] sm:$0xff]
  %v1291 = vld [vmem:[%s485 + $0xf8] sm:$0xff]
  %1292 = vmatprep.subr.mxu0 %v1261
  %1293 = vmatpush1.msra.mxu0 %v1260
  %1294 = vmatprep.subr.mxu0 %v1263
  %1295 = vmatpush1.msra.mxu0 %v1262
  %1296 = vmatprep.subr.mxu0 %v1265
  %1297 = vmatpush1.msra.mxu0 %v1264
  %1298 = vmatprep.subr.mxu0 %v1267
  %1299 = vmatpush1.msra.mxu0 %v1266
  %1300 = vmatprep.subr.mxu0 %v1269
  %1301 = vmatpush1.msra.mxu0 %v1268
  %1302 = vmatprep.subr.mxu0 %v1271
  %1303 = vmatpush1.msra.mxu0 %v1270
  %1304 = vmatprep.subr.mxu0 %v1273
  %1305 = vmatpush1.msra.mxu0 %v1272
  %1306 = vmatprep.subr.mxu0 %v1275
  %1307 = vmatpush1.msra.mxu0 %v1274
  %1308 = vmatprep.subr.mxu0 %v1277
  %1309 = vmatpush1.msra.mxu0 %v1276
  %1310 = vmatprep.subr.mxu0 %v1279
  %1311 = vmatpush1.msra.mxu0 %v1278
  %1312 = vmatprep.subr.mxu0 %v1281
  %1313 = vmatpush1.msra.mxu0 %v1280
  %1314 = vmatprep.subr.mxu0 %v1283
  %1315 = vmatpush1.msra.mxu0 %v1282
  %1316 = vmatprep.subr.mxu0 %v1285
  %1317 = vmatpush1.msra.mxu0 %v1284
  %1318 = vmatprep.subr.mxu0 %v1287
  %1319 = vmatpush1.msra.mxu0 %v1286
  %1320 = vmatprep.subr.mxu0 %v1289
  %1321 = vmatpush1.msra.mxu0 %v1288
  %1322 = vmatprep.subr.mxu0 %v1291
  %1323 = vmatpush1.msra.mxu0 %v1290
  %1324 = vmatprep.subr.mxu0 0.0
  %1325 = vmatpush1.msra.mxu0 0.0
  %1326 = vmatprep.subr.mxu0 0.0
  %1327 = vmatpush1.msra.mxu0 0.0
  %1328 = vmatprep.subr.mxu0 0.0
  %1329 = vmatpush1.msra.mxu0 0.0
  %1330 = vmatprep.subr.mxu0 0.0
  %1331 = vmatpush1.msra.mxu0 0.0
  %1332 = vmatprep.subr.mxu0 0.0
  %1333 = vmatpush1.msra.mxu0 0.0
  %1334 = vmatprep.subr.mxu0 0.0
  %1335 = vmatpush1.msra.mxu0 0.0
  %1336 = vmatprep.subr.mxu0 0.0
  %1337 = vmatpush1.msra.mxu0 0.0
  %1338 = vmatprep.subr.mxu0 0.0
  %1339 = vmatpush1.msra.mxu0 0.0
  %1340 = vmatprep.subr.mxu0 0.0
  %1341 = vmatpush1.msra.mxu0 0.0
  %1342 = vmatprep.subr.mxu0 0.0
  %1343 = vmatpush1.msra.mxu0 0.0
  %1344 = vmatprep.subr.mxu0 0.0
  %1345 = vmatpush1.msra.mxu0 0.0
  %1346 = vmatprep.subr.mxu0 0.0
  %1347 = vmatpush1.msra.mxu0 0.0
  %1348 = vmatprep.subr.mxu0 0.0
  %1349 = vmatpush1.msra.mxu0 0.0
  %1350 = vmatprep.subr.mxu0 0.0
  %1351 = vmatpush1.msra.mxu0 0.0
  %1352 = vmatprep.subr.mxu0 0.0
  %1353 = vmatpush1.msra.mxu0 0.0
  %1354 = vmatprep.subr.mxu0 0.0
  %1355 = vmatpush1.msra.mxu0 0.0
  %1356 = vmatprep.mubr.f32.mxu0 0.0
  %1357 = vmatmul.mubr.f32.gmra.mrb[0].mxu0 %v1256
  %v1358 = vpop.f32.mrb[0].mxu0
  %v1359 = vadd.f32 0.0, %v1358
  %v1360 = vpop.f32.mrb[0].mxu0
  %v1361 = vadd.f32 0.0, %v1360
  %1362 = vmatprep.mubr.f32.mxu0 0.0
  %1363 = vmatmul.mubr.f32.gmra.mrb[0].mxu0 %v1257
  %v1364 = vpop.f32.mrb[0].mxu0
  %v1365 = vadd.f32 0.0, %v1364
  %v1366 = vpop.f32.mrb[0].mxu0
  %v1367 = vadd.f32 0.0, %v1366
  %1368 = vmatprep.mubr.f32.mxu0 0.0
  %1369 = vmatmul.mubr.f32.gmra.mrb[0].mxu0 %v1258
  %v1370 = vpop.f32.mrb[0].mxu0
  %v1371 = vadd.f32 0.0, %v1370
  %v1372 = vpop.f32.mrb[0].mxu0
  %v1373 = vadd.f32 0.0, %v1372
  %1374 = vmatprep.mubr.f32.mxu0 0.0
  %1375 = vmatmul.mubr.f32.gmra.mrb[0].mxu0 %v1259
  %v1376 = vpop.f32.mrb[0].mxu0
  %v1377 = vadd.f32 0.0, %v1376
  %v1378 = vpop.f32.mrb[0].mxu0
  %v1379 = vadd.f32 0.0, %v1378
  %1380 = vdwg.mxu0
  %v1381 = vadd.f32 %v1234, %v1359
  %v1382 = vadd.f32 %v1236, %v1361
  %v1383 = vadd.f32 %v1240, %v1365
  %v1384 = vadd.f32 %v1242, %v1367
  %v1385 = vadd.f32 %v1246, %v1371
  %v1386 = vadd.f32 %v1248, %v1373
  %v1387 = vadd.f32 %v1252, %v1377
  %v1388 = vadd.f32 %v1254, %v1379
  %s1389 = scalar_lea.vmem %s5, 64
  %1390 = vst [vmem:[%s1389] sm:$0xff] %v1381
  %1391 = vst [vmem:[%s1389 + $0x8] sm:$0xff] %v1382
  %1392 = vst [vmem:[%s1389 + $0x10] sm:$0xff] %v1383
  %1393 = vst [vmem:[%s1389 + $0x18] sm:$0xff] %v1384
  %1394 = vst [vmem:[%s1389 + $0x20] sm:$0xff] %v1385
  %1395 = vst [vmem:[%s1389 + $0x28] sm:$0xff] %v1386
  %1396 = vst [vmem:[%s1389 + $0x30] sm:$0xff] %v1387
  %1397 = vst [vmem:[%s1389 + $0x38] sm:$0xff] %v1388
  %v1398 = vmul.f32 %v1381, %v1381
  %v1399 = vmul.f32 %v1382, %v1382
  %v1400 = vmul.f32 %v1383, %v1383
  %v1401 = vmul.f32 %v1384, %v1384
  %v1402 = vmul.f32 %v1385, %v1385
  %v1403 = vmul.f32 %v1386, %v1386
  %v1404 = vmul.f32 %v1387, %v1387
  %v1405 = vmul.f32 %v1388, %v1388
  %v1406 = vld [vmem:[%s4] sm:$0xff]
  %v1407 = vld [vmem:[%s4 + $0x8] sm:$0xff]
  %v1408 = vld [vmem:[%s4 + $0x10] sm:$0xff]
  %v1409 = vld [vmem:[%s4 + $0x18] sm:$0xff]
  %v1410 = vld [vmem:[%s4 + $0x20] sm:$0xff]
  %v1411 = vld [vmem:[%s4 + $0x28] sm:$0xff]
  %v1412 = vld [vmem:[%s4 + $0x30] sm:$0xff]
  %v1413 = vld [vmem:[%s4 + $0x38] sm:$0xff]
  %v1414 = vld [vmem:[%s4 + $0x40] sm:$0xff]
  %v1415 = vld [vmem:[%s4 + $0x48] sm:$0xff]
  %v1416 = vld [vmem:[%s4 + $0x50] sm:$0xff]
  %v1417 = vld [vmem:[%s4 + $0x58] sm:$0xff]
  %v1418 = vld [vmem:[%s4 + $0x60] sm:$0xff]
  %v1419 = vld [vmem:[%s4 + $0x68] sm:$0xff]
  %v1420 = vld [vmem:[%s4 + $0x70] sm:$0xff]
  %v1421 = vld [vmem:[%s4 + $0x78] sm:$0xff]
  %v1422 = vld [vmem:[%s4 + $0x80] sm:$0xff]
  %v1423 = vld [vmem:[%s4 + $0x88] sm:$0xff]
  %v1424 = vld [vmem:[%s4 + $0x90] sm:$0xff]
  %v1425 = vld [vmem:[%s4 + $0x98] sm:$0xff]
  %v1426 = vld [vmem:[%s4 + $0xa0] sm:$0xff]
  %v1427 = vld [vmem:[%s4 + $0xa8] sm:$0xff]
  %v1428 = vld [vmem:[%s4 + $0xb0] sm:$0xff]
  %v1429 = vld [vmem:[%s4 + $0xb8] sm:$0xff]
  %v1430 = vld [vmem:[%s4 + $0xc0] sm:$0xff]
  %v1431 = vld [vmem:[%s4 + $0xc8] sm:$0xff]
  %v1432 = vld [vmem:[%s4 + $0xd0] sm:$0xff]
  %v1433 = vld [vmem:[%s4 + $0xd8] sm:$0xff]
  %v1434 = vld [vmem:[%s4 + $0xe0] sm:$0xff]
  %v1435 = vld [vmem:[%s4 + $0xe8] sm:$0xff]
  %v1436 = vld [vmem:[%s4 + $0xf0] sm:$0xff]
  %v1437 = vld [vmem:[%s4 + $0xf8] sm:$0xff]
  %1438 = vmatprep.subr.mxu0 0.0
  %1439 = vmatpush1.msra.mxu0 %v1406
  %1440 = vmatprep.subr.mxu0 0.0
  %1441 = vmatpush1.msra.mxu0 %v1407
  %1442 = vmatprep.subr.mxu0 0.0
  %1443 = vmatpush1.msra.mxu0 %v1408
  %1444 = vmatprep.subr.mxu0 0.0
  %1445 = vmatpush1.msra.mxu0 %v1409
  %1446 = vmatprep.subr.mxu0 0.0
  %1447 = vmatpush1.msra.mxu0 %v1410
  %1448 = vmatprep.subr.mxu0 0.0
  %1449 = vmatpush1.msra.mxu0 %v1411
  %1450 = vmatprep.subr.mxu0 0.0
  %1451 = vmatpush1.msra.mxu0 %v1412
  %1452 = vmatprep.subr.mxu0 0.0
  %1453 = vmatpush1.msra.mxu0 %v1413
  %1454 = vmatprep.subr.mxu0 0.0
  %1455 = vmatpush1.msra.mxu0 %v1414
  %1456 = vmatprep.subr.mxu0 0.0
  %1457 = vmatpush1.msra.mxu0 %v1415
  %1458 = vmatprep.subr.mxu0 0.0
  %1459 = vmatpush1.msra.mxu0 %v1416
  %1460 = vmatprep.subr.mxu0 0.0
  %1461 = vmatpush1.msra.mxu0 %v1417
  %1462 = vmatprep.subr.mxu0 0.0
  %1463 = vmatpush1.msra.mxu0 %v1418
  %1464 = vmatprep.subr.mxu0 0.0
  %1465 = vmatpush1.msra.mxu0 %v1419
  %1466 = vmatprep.subr.mxu0 0.0
  %1467 = vmatpush1.msra.mxu0 %v1420
  %1468 = vmatprep.subr.mxu0 0.0
  %1469 = vmatpush1.msra.mxu0 %v1421
  %1470 = vmatprep.subr.mxu0 0.0
  %1471 = vmatpush1.msra.mxu0 %v1422
  %1472 = vmatprep.subr.mxu0 0.0
  %1473 = vmatpush1.msra.mxu0 %v1423
  %1474 = vmatprep.subr.mxu0 0.0
  %1475 = vmatpush1.msra.mxu0 %v1424
  %1476 = vmatprep.subr.mxu0 0.0
  %1477 = vmatpush1.msra.mxu0 %v1425
  %1478 = vmatprep.subr.mxu0 0.0
  %1479 = vmatpush1.msra.mxu0 %v1426
  %1480 = vmatprep.subr.mxu0 0.0
  %1481 = vmatpush1.msra.mxu0 %v1427
  %1482 = vmatprep.subr.mxu0 0.0
  %1483 = vmatpush1.msra.mxu0 %v1428
  %1484 = vmatprep.subr.mxu0 0.0
  %1485 = vmatpush1.msra.mxu0 %v1429
  %1486 = vmatprep.subr.mxu0 0.0
  %1487 = vmatpush1.msra.mxu0 %v1430
  %1488 = vmatprep.subr.mxu0 0.0
  %1489 = vmatpush1.msra.mxu0 %v1431
  %1490 = vmatprep.subr.mxu0 0.0
  %1491 = vmatpush1.msra.mxu0 %v1432
  %1492 = vmatprep.subr.mxu0 0.0
  %1493 = vmatpush1.msra.mxu0 %v1433
  %1494 = vmatprep.subr.mxu0 0.0
  %1495 = vmatpush1.msra.mxu0 %v1434
  %1496 = vmatprep.subr.mxu0 0.0
  %1497 = vmatpush1.msra.mxu0 %v1435
  %1498 = vmatprep.subr.mxu0 0.0
  %1499 = vmatpush1.msra.mxu0 %v1436
  %1500 = vmatprep.subr.mxu0 0.0
  %1501 = vmatpush1.msra.mxu0 %v1437
  %1502 = vmatprep.mubr.f32.mxu0 %v1382
  %1503 = vmatmul.mubr.f32.gmra.mrb[0].mxu0 %v1381
  %v1504 = vpop.f32.mrb[0].mxu0
  %v1505 = vadd.f32 0.0, %v1504
  %v1506 = vpop.f32.mrb[0].mxu0
  %1507 = vmatprep.mubr.f32.mxu0 %v1384
  %1508 = vmatmul.mubr.f32.gmra.mrb[0].mxu0 %v1383
  %v1509 = vpop.f32.mrb[0].mxu0
  %v1510 = vadd.f32 0.0, %v1509
  %v1511 = vpop.f32.mrb[0].mxu0
  %1512 = vmatprep.mubr.f32.mxu0 %v1386
  %1513 = vmatmul.mubr.f32.gmra.mrb[0].mxu0 %v1385
  %v1514 = vpop.f32.mrb[0].mxu0
  %v1515 = vadd.f32 0.0, %v1514
  %v1516 = vpop.f32.mrb[0].mxu0
  %1517 = vmatprep.mubr.f32.mxu0 %v1388
  %1518 = vmatmul.mubr.f32.gmra.mrb[0].mxu0 %v1387
  %v1519 = vpop.f32.mrb[0].mxu0
  %v1520 = vadd.f32 0.0, %v1519
  %v1521 = vpop.f32.mrb[0].mxu0
  %1522 = vmatprep.mubr.f32.mxu0 %v1399
  %1523 = vmatmul.mubr.f32.gmra.mrb[0].mxu0 %v1398
  %v1524 = vpop.f32.mrb[0].mxu0
  %v1525 = vadd.f32 0.0, %v1524
  %v1526 = vpop.f32.mrb[0].mxu0
  %1527 = vmatprep.mubr.f32.mxu0 %v1401
  %1528 = vmatmul.mubr.f32.gmra.mrb[0].mxu0 %v1400
  %v1529 = vpop.f32.mrb[0].mxu0
  %v1530 = vadd.f32 0.0, %v1529
  %v1531 = vpop.f32.mrb[0].mxu0
  %1532 = vmatprep.mubr.f32.mxu0 %v1403
  %1533 = vmatmul.mubr.f32.gmra.mrb[0].mxu0 %v1402
  %v1534 = vpop.f32.mrb[0].mxu0
  %v1535 = vadd.f32 0.0, %v1534
  %v1536 = vpop.f32.mrb[0].mxu0
  %1537 = vmatprep.mubr.f32.mxu0 %v1405
  %1538 = vmatmul.mubr.f32.gmra.mrb[0].mxu0 %v1404
  %v1539 = vpop.f32.mrb[0].mxu0
  %v1540 = vadd.f32 0.0, %v1539
  %v1541 = vpop.f32.mrb[0].mxu0
  %1542 = vdwg.mxu0
  %v1543 = vsel %vm768, %v1505, 0.0
  %v1544 = vsel %vm768, %v1510, 0.0
  %v1545 = vadd.f32 %v1543, %v1544
  %v1546 = vsel %vm768, %v1515, 0.0
  %v1547 = vadd.f32 %v1545, %v1546
  %v1548 = vsel %vm768, %v1520, 0.0
  %v1549 = vadd.f32 %v1547, %v1548
  %v1550 = vrot.slane %v1549, 4
  %v1551 = vadd.f32 %v1549, %v1550
  %v1552 = vrot.slane %v1551, 2
  %v1553 = vadd.f32 %v1551, %v1552
  %v1554 = vrot.slane %v1553, 1
  %v1555 = vadd.f32 %v1553, %v1554
  %v1556 = vsel %vm768, %v1525, 0.0
  %v1557 = vsel %vm768, %v1530, 0.0
  %v1558 = vadd.f32 %v1556, %v1557
  %v1559 = vsel %vm768, %v1535, 0.0
  %v1560 = vadd.f32 %v1558, %v1559
  %v1561 = vsel %vm768, %v1540, 0.0
  %v1562 = vadd.f32 %v1560, %v1561
  %v1563 = vrot.slane %v1562, 4
  %v1564 = vadd.f32 %v1562, %v1563
  %v1565 = vrot.slane %v1564, 2
  %v1566 = vadd.f32 %v1564, %v1565
  %v1567 = vrot.slane %v1566, 1
  %v1568 = vadd.f32 %v1566, %v1567
  %v1569 = vsel %vm795, %v1555, %v1568
  %s1570 = scalar_lea.vmem %s6, 2
  %1571 = vst.msk [vmem:[%s1570] sm:$0x3] %vm797, %v1569
  // Predicated region
  $region22: #{upsample_block_forward.2} parent=0 // pred_check
    _
  $region23: #{upsample_block_forward.2} parent=0 // pred_check_branch
    %1573 = sbr.rel (0) target = $region25
  $region24: #{upsample_block_forward.2} parent=0 // pred_region
    _
  $region25: #{upsample_block_forward.2} parent=0 // pred_fallthru
    _
  // Predicated region
  $region26: #{upsample_block_forward.2} parent=0 // pred_check
    _
  $region27: #{upsample_block_forward.2} parent=0 // pred_check_branch
    %1575 = sbr.rel (0) target = $region29
  $region28: #{upsample_block_forward.2} parent=0 // pred_region
    _
  $region29: #{upsample_block_forward.2} parent=0 // pred_fallthru
    _
  // Predicated region
  $region30: #{upsample_block_forward.2} parent=0 // pred_check
    _
  $region31: #{upsample_block_forward.2} parent=0 // pred_check_branch
    %1577 = sbr.rel (0) target = $region33
  $region32: #{upsample_block_forward.2} parent=0 // pred_region
    _
  $region33: #{upsample_block_forward.2} parent=0 // pred_fallthru
    _
  // Predicated region
  $region34: #{upsample_block_forward.2} parent=0 // pred_check
    _
  $region35: #{upsample_block_forward.2} parent=0 // pred_check_branch
    %1579 = sbr.rel (0) target = $region37
  $region36: #{upsample_block_forward.2} parent=0 // pred_region
    _
  $region37: #{upsample_block_forward.2} parent=0 // pred_fallthru
    _

</llo_original>
